<compile_context>
chip_gen: v7x
topology: tpu7x:2x2x1
jax: 0.10.0
libtpu: 0.0.40
codegen_flags: <defaults>
</compile_context>

<pallas_src>
import functools

import jax
import jax.numpy as jnp
from jax.experimental import pallas as pl
from jax.experimental.pallas import tpu as pltpu

INPUT_D = 4     # input_d from the module (4-dim phase space)
WIDTH = 200     # default hidden width w=200


def _silu(z):
    # SiLU(z) = z * sigmoid(z) = 0.5 * z * (1 + tanh(z / 2)).
    # One EUP op (tanh) instead of exp + reciprocal.
    half = jnp.asarray(0.5, z.dtype)
    one = jnp.asarray(1.0, z.dtype)
    return half * z * (one + jnp.tanh(half * z))


def fcnet_kernel(x_ref,
                 w1_ref, b1_ref,
                 w2_ref, b2_ref,
                 w23_ref, b23_ref,
                 w3_ref, b3_ref,
                 o_ref,
                 *, act_dtype):
    # ---- Layer 1: K=4, <1% of FLOPs. Do it as 4 VPU broadcast-FMAs instead
    # of an emulated f32 MXU matmul with a lane-sparse (tb, 4) operand.
    x = x_ref[...]                                   # (tb, 4) f32
    w1 = w1_ref[...]                                 # (4, W)  f32
    z1 = x[:, 0:1] * w1[0:1, :]
    for d in range(1, INPUT_D):
        z1 = z1 + x[:, d:d + 1] * w1[d:d + 1, :]
    z1 = z1 + b1_ref[...]                            # (tb, W) f32
    h1 = _silu(z1.astype(act_dtype))                 # (tb, W) act_dtype

    # ---- Layers 2 / 23: bf16 MXU inputs, f32 accumulation; bias add in f32,
    # then SiLU in act_dtype (bf16 on v6e/v7x, f32 on v5e).
    z2 = jnp.dot(h1.astype(jnp.bfloat16), w2_ref[...],
                 preferred_element_type=jnp.float32) + b2_ref[...]
    h2 = _silu(z2.astype(act_dtype))                 # (tb, W)

    z3 = jnp.dot(h2.astype(jnp.bfloat16), w23_ref[...],
                 preferred_element_type=jnp.float32) + b23_ref[...]
    h3 = _silu(z3.astype(act_dtype))                 # (tb, W)

    # ---- Final layer (W -> 1), computed transposed: contract the W axis of
    # the (1, W) weight row against the W axis of h3, producing a lane-dense
    # (1, tb) output row (no masked lane-width-1 stores). The wrapper
    # reshapes (1, B) -> (B, 1).
    # TODO(synk): if a bundle dump shows this dot_general materializing an
    # h3 transpose, switch the whole net to a (W, tb) transposed layout.
    y = jax.lax.dot_general(w3_ref[...], h3.astype(jnp.bfloat16),
                            (((1,), (1,)), ((), ())),
                            preferred_element_type=jnp.float32)          # (1, tb)
    o_ref[...] = (y + b3_ref[...]).astype(o_ref.dtype)


def _use_bf16_activations():
    """bf16 VPU/EUP exists on v6e ('trillium') and v7x, not on v5e/older."""
    try:
        kind = jax.devices()[0].device_kind.lower()
    except Exception:
        return False
    if any(tag in kind for tag in ("v2", "v3", "v4", "v5")):
        return False
    return any(tag in kind for tag in ("v6", "v7", "trillium"))


def _pick_tb(B):
    """Largest batch tile <= 2048 that still leaves >= 2 grid steps
    (so v7x megacore sharding has work for both TensorCores)."""
    if B <= 256:
        return 256
    for tb in (2048, 1024, 512, 256):
        if pl.cdiv(B, tb) >= 2:
            return tb
    return 256


def fcnet_forward(x, params, *, tb=None):
    """x: (B, INPUT_D) float32; params: dict of f32 weights/biases (width 200)."""
    B, D = x.shape
    assert D == INPUT_D

    if tb is None:
        tb = _pick_tb(B)
    # Zero-pad the batch to a tile multiple; padded rows are sliced off below.
    Bp = pl.cdiv(B, tb) * tb
    if Bp != B:
        x = jnp.pad(x, ((0, Bp - B), (0, 0)))

    w = params["w1"].shape[1]
    W = ((w + 127) // 128) * 128          # pad hidden width to full lanes: 200 -> 256

    act_dtype = jnp.bfloat16 if _use_bf16_activations() else jnp.float32

    def pad2(a, rows, cols):
        return jnp.pad(a, ((0, rows - a.shape[0]), (0, cols - a.shape[1])))

    # Zero-padded parameters. Padded rows/cols/biases are exact zeros, so the
    # padded lanes of every activation stay exactly zero and never leak.
    w1 = pad2(params["w1"], D, W)                          # (4, W)  f32
    b1 = pad2(params["b1"], 1, W)                          # (1, W)  f32
    w2 = pad2(params["w2"], W, W).astype(jnp.bfloat16)     # (W, W)  bf16
    b2 = pad2(params["b2"], 1, W)                          # (1, W)  f32
    w23 = pad2(params["w23"], W, W).astype(jnp.bfloat16)   # (W, W)  bf16
    b23 = pad2(params["b23"], 1, W)                        # (1, W)  f32
    w3 = pad2(params["w3"].T, 1, W).astype(jnp.bfloat16)   # (1, W)  bf16 row
    b3 = params["b3"]                                      # (1, 1)  f32

    full = lambda shape: pl.BlockSpec(shape, lambda i: (0, 0))

    weight_bytes = (int(w1.size) * 4 + int(b1.size) * 4
                    + int(w2.size) * 2 + int(b2.size) * 4
                    + int(w23.size) * 2 + int(b23.size) * 4
                    + int(w3.size) * 2 + int(b3.size) * 4)
    cost = pl.CostEstimate(
        flops=2 * Bp * (D * W + 2 * W * W + W),
        transcendentals=3 * Bp * W,                        # one tanh per hidden elem
        bytes_accessed=Bp * D * 4 + Bp * 4 + weight_bytes,
    )

    out_row = pl.pallas_call(
        functools.partial(fcnet_kernel, act_dtype=act_dtype),
        out_shape=jax.ShapeDtypeStruct((1, Bp), jnp.float32),
        grid_spec=pltpu.PrefetchScalarGridSpec(
            num_scalar_prefetch=0,
            grid=(Bp // tb,),
            in_specs=[
                pl.BlockSpec((tb, D), lambda i: (i, 0)),   # x batch tile
                full((D, W)), full((1, W)),                # l1
                full((W, W)), full((1, W)),                # l2
                full((W, W)), full((1, W)),                # l23
                full((1, W)), full((1, 1)),                # l3 row + bias
            ],
            out_specs=pl.BlockSpec((1, tb), lambda i: (0, i)),
        ),
        compiler_params=pltpu.CompilerParams(
            dimension_semantics=("parallel",)),
        cost_estimate=cost,
    )(x, w1, b1, w2, b2, w23, b23, w3, b3)

    return out_row.reshape(Bp, 1)[:B]


def init_params(key, input_d=INPUT_D, w=WIDTH):
    """Deterministic init mimicking nn.Linear's U(-1/sqrt(fan_in), 1/sqrt(fan_in))."""
    ks = jax.random.split(key, 8)

    def linear(kw, kb, fan_in, fan_out):
        bound = 1.0 / jnp.sqrt(jnp.float32(fan_in))
        Wm = jax.random.uniform(kw, (fan_in, fan_out), jnp.float32, -bound, bound)
        b = jax.random.uniform(kb, (1, fan_out), jnp.float32, -bound, bound)
        return Wm, b

    w1, b1 = linear(ks[0], ks[1], input_d, w)
    w2, b2 = linear(ks[2], ks[3], w, w)
    w23, b23 = linear(ks[4], ks[5], w, w)
    w3, b3 = linear(ks[6], ks[7], w, 1)
    return {"w1": w1, "b1": b1, "w2": w2, "b2": b2,
            "w23": w23, "b23": b23, "w3": w3, "b3": b3}


def fcnet_reference(x, p):
    """Plain-JAX f32 reference of the PyTorch forward pass."""
    silu = lambda z: z * jax.nn.sigmoid(z)
    h1 = silu(x @ p["w1"] + p["b1"])
    h2 = silu(h1 @ p["w2"] + p["b2"])
    h3 = silu(h2 @ p["w23"] + p["b23"])
    return h3 @ p["w3"] + p["b3"]


if __name__ == "__main__":
    key = jax.random.PRNGKey(0)
    k_param, k_x = jax.random.split(key)

    params = init_params(k_param)

    B = 1024                                  # auto tb=512 -> 2 grid steps (both v7x TCs)
    train_box = 2.0
    x = (jax.random.uniform(k_x, (B, INPUT_D), jnp.float32) - 0.5) * train_box

    out = fcnet_forward(x, params)
    out = jax.block_until_ready(out)

    ref = fcnet_reference(x, params)
    assert out.shape == (B, 1)

    # bf16 MXU inputs (and bf16 activations on v6e/v7x) => compare against the
    # f32 reference with a correspondingly loose (but meaningful) tolerance.
    err = float(jnp.max(jnp.abs(out - ref)))
    scale = float(jnp.max(jnp.abs(ref)))
    assert err <= 5e-2 * max(1.0, scale), f"mismatch vs reference: max abs err {err:.3e}"

    print("KERNEL_OK")
</pallas_src>

<mosaic_0001>
module attributes {stable_mosaic.version = 11 : i64} {
  func.func @fcnet_kernel(%arg0: i32, %arg1: memref<512x4xf32, #tpu.memory_space<vmem>>, %arg2: memref<4x256xf32, #tpu.memory_space<vmem>>, %arg3: memref<1x256xf32, #tpu.memory_space<vmem>>, %arg4: memref<256x256xbf16, #tpu.memory_space<vmem>>, %arg5: memref<1x256xf32, #tpu.memory_space<vmem>>, %arg6: memref<256x256xbf16, #tpu.memory_space<vmem>>, %arg7: memref<1x256xf32, #tpu.memory_space<vmem>>, %arg8: memref<1x256xbf16, #tpu.memory_space<vmem>>, %arg9: memref<1x1xf32, #tpu.memory_space<vmem>>, %arg10: memref<1x512xf32, #tpu.memory_space<vmem>>) attributes {dimension_semantics = [#tpu.dimension_semantics<parallel>], iteration_bounds = array<i64: 2>, scalar_prefetch = 0 : i64, scratch_operands = 0 : i64, tpu.core_type = #tpu.core_type<tc>, window_params = [{transform_indices = @transform_0, window_bounds = array<i64: 512, 4>}, {pipeline_mode = #tpu.pipeline_mode<synchronous>, transform_indices = @transform_1, window_bounds = array<i64: 4, 256>}, {pipeline_mode = #tpu.pipeline_mode<synchronous>, transform_indices = @transform_2, window_bounds = array<i64: 1, 256>}, {pipeline_mode = #tpu.pipeline_mode<synchronous>, transform_indices = @transform_3, window_bounds = array<i64: 256, 256>}, {pipeline_mode = #tpu.pipeline_mode<synchronous>, transform_indices = @transform_4, window_bounds = array<i64: 1, 256>}, {pipeline_mode = #tpu.pipeline_mode<synchronous>, transform_indices = @transform_5, window_bounds = array<i64: 256, 256>}, {pipeline_mode = #tpu.pipeline_mode<synchronous>, transform_indices = @transform_6, window_bounds = array<i64: 1, 256>}, {pipeline_mode = #tpu.pipeline_mode<synchronous>, transform_indices = @transform_7, window_bounds = array<i64: 1, 256>}, {pipeline_mode = #tpu.pipeline_mode<synchronous>, transform_indices = @transform_8, window_bounds = array<i64: 1, 1>}, {transform_indices = @transform_9, window_bounds = array<i64: 1, 512>}]} {
    %c0 = arith.constant 0 : index
    %c0_0 = arith.constant 0 : index
    %0 = vector.load %arg1[%c0, %c0_0] : memref<512x4xf32, #tpu.memory_space<vmem>>, vector<512x4xf32>
    %c0_1 = arith.constant 0 : index
    %c0_2 = arith.constant 0 : index
    %1 = vector.load %arg2[%c0_1, %c0_2] : memref<4x256xf32, #tpu.memory_space<vmem>>, vector<4x256xf32>
    %2 = vector.extract_strided_slice %0 {offsets = [0, 0], sizes = [512, 1], strides = [1, 1]} : vector<512x4xf32> to vector<512x1xf32>
    %3 = vector.extract_strided_slice %1 {offsets = [0, 0], sizes = [1, 256], strides = [1, 1]} : vector<4x256xf32> to vector<1x256xf32>
    %4 = vector.broadcast %2 : vector<512x1xf32> to vector<512x256xf32>
    %5 = vector.broadcast %3 : vector<1x256xf32> to vector<512x256xf32>
    %6 = arith.mulf %4, %5 : vector<512x256xf32>
    %7 = vector.extract_strided_slice %0 {offsets = [0, 1], sizes = [512, 1], strides = [1, 1]} : vector<512x4xf32> to vector<512x1xf32>
    %8 = vector.extract_strided_slice %1 {offsets = [1, 0], sizes = [1, 256], strides = [1, 1]} : vector<4x256xf32> to vector<1x256xf32>
    %9 = vector.broadcast %7 : vector<512x1xf32> to vector<512x256xf32>
    %10 = vector.broadcast %8 : vector<1x256xf32> to vector<512x256xf32>
    %11 = arith.mulf %9, %10 : vector<512x256xf32>
    %12 = arith.addf %6, %11 : vector<512x256xf32>
    %13 = vector.extract_strided_slice %0 {offsets = [0, 2], sizes = [512, 1], strides = [1, 1]} : vector<512x4xf32> to vector<512x1xf32>
    %14 = vector.extract_strided_slice %1 {offsets = [2, 0], sizes = [1, 256], strides = [1, 1]} : vector<4x256xf32> to vector<1x256xf32>
    %15 = vector.broadcast %13 : vector<512x1xf32> to vector<512x256xf32>
    %16 = vector.broadcast %14 : vector<1x256xf32> to vector<512x256xf32>
    %17 = arith.mulf %15, %16 : vector<512x256xf32>
    %18 = arith.addf %12, %17 : vector<512x256xf32>
    %19 = vector.extract_strided_slice %0 {offsets = [0, 3], sizes = [512, 1], strides = [1, 1]} : vector<512x4xf32> to vector<512x1xf32>
    %20 = vector.extract_strided_slice %1 {offsets = [3, 0], sizes = [1, 256], strides = [1, 1]} : vector<4x256xf32> to vector<1x256xf32>
    %21 = vector.broadcast %19 : vector<512x1xf32> to vector<512x256xf32>
    %22 = vector.broadcast %20 : vector<1x256xf32> to vector<512x256xf32>
    %23 = arith.mulf %21, %22 : vector<512x256xf32>
    %24 = arith.addf %18, %23 : vector<512x256xf32>
    %c0_3 = arith.constant 0 : index
    %c0_4 = arith.constant 0 : index
    %25 = vector.load %arg3[%c0_3, %c0_4] : memref<1x256xf32, #tpu.memory_space<vmem>>, vector<1x256xf32>
    %26 = vector.broadcast %25 : vector<1x256xf32> to vector<512x256xf32>
    %27 = arith.addf %24, %26 : vector<512x256xf32>
    %cst = arith.constant 5.000000e-01 : f32
    %28 = vector.broadcast %cst : f32 to vector<512x256xf32>
    %29 = arith.mulf %28, %27 : vector<512x256xf32>
    %cst_5 = arith.constant 5.000000e-01 : f32
    %30 = vector.broadcast %cst_5 : f32 to vector<512x256xf32>
    %31 = arith.mulf %30, %27 : vector<512x256xf32>
    %32 = math.tanh %31 : vector<512x256xf32>
    %cst_6 = arith.constant 1.000000e+00 : f32
    %33 = vector.broadcast %cst_6 : f32 to vector<512x256xf32>
    %34 = arith.addf %33, %32 : vector<512x256xf32>
    %35 = arith.mulf %29, %34 : vector<512x256xf32>
    %36 = arith.truncf %35 : vector<512x256xf32> to vector<512x256xbf16>
    %c0_7 = arith.constant 0 : index
    %c0_8 = arith.constant 0 : index
    %37 = vector.load %arg4[%c0_7, %c0_8] : memref<256x256xbf16, #tpu.memory_space<vmem>>, vector<256x256xbf16>
    %cst_9 = arith.constant dense<0.000000e+00> : vector<512x256xf32>
    %38 = tpu.matmul %36, %37, %cst_9 {dimension_numbers = #tpu.dot_dimension_numbers<[1], [0], [0], [1], [0, 0, 1, 1], [], []>} : vector<512x256xbf16>, vector<256x256xbf16>, vector<512x256xf32> -> vector<512x256xf32>
    %c0_10 = arith.constant 0 : index
    %c0_11 = arith.constant 0 : index
    %39 = vector.load %arg5[%c0_10, %c0_11] : memref<1x256xf32, #tpu.memory_space<vmem>>, vector<1x256xf32>
    %40 = vector.broadcast %39 : vector<1x256xf32> to vector<512x256xf32>
    %41 = arith.addf %38, %40 : vector<512x256xf32>
    %cst_12 = arith.constant 5.000000e-01 : f32
    %42 = vector.broadcast %cst_12 : f32 to vector<512x256xf32>
    %43 = arith.mulf %42, %41 : vector<512x256xf32>
    %cst_13 = arith.constant 5.000000e-01 : f32
    %44 = vector.broadcast %cst_13 : f32 to vector<512x256xf32>
    %45 = arith.mulf %44, %41 : vector<512x256xf32>
    %46 = math.tanh %45 : vector<512x256xf32>
    %cst_14 = arith.constant 1.000000e+00 : f32
    %47 = vector.broadcast %cst_14 : f32 to vector<512x256xf32>
    %48 = arith.addf %47, %46 : vector<512x256xf32>
    %49 = arith.mulf %43, %48 : vector<512x256xf32>
    %50 = arith.truncf %49 : vector<512x256xf32> to vector<512x256xbf16>
    %c0_15 = arith.constant 0 : index
    %c0_16 = arith.constant 0 : index
    %51 = vector.load %arg6[%c0_15, %c0_16] : memref<256x256xbf16, #tpu.memory_space<vmem>>, vector<256x256xbf16>
    %cst_17 = arith.constant dense<0.000000e+00> : vector<512x256xf32>
    %52 = tpu.matmul %50, %51, %cst_17 {dimension_numbers = #tpu.dot_dimension_numbers<[1], [0], [0], [1], [0, 0, 1, 1], [], []>} : vector<512x256xbf16>, vector<256x256xbf16>, vector<512x256xf32> -> vector<512x256xf32>
    %c0_18 = arith.constant 0 : index
    %c0_19 = arith.constant 0 : index
    %53 = vector.load %arg7[%c0_18, %c0_19] : memref<1x256xf32, #tpu.memory_space<vmem>>, vector<1x256xf32>
    %54 = vector.broadcast %53 : vector<1x256xf32> to vector<512x256xf32>
    %55 = arith.addf %52, %54 : vector<512x256xf32>
    %cst_20 = arith.constant 5.000000e-01 : f32
    %56 = vector.broadcast %cst_20 : f32 to vector<512x256xf32>
    %57 = arith.mulf %56, %55 : vector<512x256xf32>
    %cst_21 = arith.constant 5.000000e-01 : f32
    %58 = vector.broadcast %cst_21 : f32 to vector<512x256xf32>
    %59 = arith.mulf %58, %55 : vector<512x256xf32>
    %60 = math.tanh %59 : vector<512x256xf32>
    %cst_22 = arith.constant 1.000000e+00 : f32
    %61 = vector.broadcast %cst_22 : f32 to vector<512x256xf32>
    %62 = arith.addf %61, %60 : vector<512x256xf32>
    %63 = arith.mulf %57, %62 : vector<512x256xf32>
    %c0_23 = arith.constant 0 : index
    %c0_24 = arith.constant 0 : index
    %64 = vector.load %arg8[%c0_23, %c0_24] : memref<1x256xbf16, #tpu.memory_space<vmem>>, vector<1x256xbf16>
    %65 = arith.truncf %63 : vector<512x256xf32> to vector<512x256xbf16>
    %cst_25 = arith.constant dense<0.000000e+00> : vector<1x512xf32>
    %66 = tpu.matmul %64, %65, %cst_25 {dimension_numbers = #tpu.dot_dimension_numbers<[1], [1], [0], [0], [0, 0, 1, 0], [], []>} : vector<1x256xbf16>, vector<512x256xbf16>, vector<1x512xf32> -> vector<1x512xf32>
    %c0_26 = arith.constant 0 : index
    %c0_27 = arith.constant 0 : index
    %67 = vector.load %arg9[%c0_26, %c0_27] : memref<1x1xf32, #tpu.memory_space<vmem>>, vector<1x1xf32>
    %68 = vector.broadcast %67 : vector<1x1xf32> to vector<1x512xf32>
    %69 = arith.addf %66, %68 : vector<1x512xf32>
    %c0_28 = arith.constant 0 : index
    %c0_29 = arith.constant 0 : index
    %70 = vector.load %arg10[%c0_28, %c0_29] : memref<1x512xf32, #tpu.memory_space<vmem>>, vector<1x512xf32>
    tpu.vector_store %arg10[%c0_28, %c0_29], %69 {strides = array<i32>} : memref<1x512xf32, #tpu.memory_space<vmem>>, vector<1x512xf32>,
    return
  }
  func.func @transform_0(%arg0: i32) -> (i32, i32) {
    %c0_i32 = arith.constant 0 : i32
    %c0_i32_0 = arith.constant 0 : i32
    return %arg0, %c0_i32 : i32, i32
  }
  func.func @transform_1(%arg0: i32) -> (i32, i32) {
    %c0_i32 = arith.constant 0 : i32
    %c0_i32_0 = arith.constant 0 : i32
    %c0_i32_1 = arith.constant 0 : i32
    return %c0_i32, %c0_i32_0 : i32, i32
  }
  func.func @transform_2(%arg0: i32) -> (i32, i32) {
    %c0_i32 = arith.constant 0 : i32
    %c0_i32_0 = arith.constant 0 : i32
    %c0_i32_1 = arith.constant 0 : i32
    return %c0_i32, %c0_i32_0 : i32, i32
  }
  func.func @transform_3(%arg0: i32) -> (i32, i32) {
    %c0_i32 = arith.constant 0 : i32
    %c0_i32_0 = arith.constant 0 : i32
    %c0_i32_1 = arith.constant 0 : i32
    return %c0_i32, %c0_i32_0 : i32, i32
  }
  func.func @transform_4(%arg0: i32) -> (i32, i32) {
    %c0_i32 = arith.constant 0 : i32
    %c0_i32_0 = arith.constant 0 : i32
    %c0_i32_1 = arith.constant 0 : i32
    return %c0_i32, %c0_i32_0 : i32, i32
  }
  func.func @transform_5(%arg0: i32) -> (i32, i32) {
    %c0_i32 = arith.constant 0 : i32
    %c0_i32_0 = arith.constant 0 : i32
    %c0_i32_1 = arith.constant 0 : i32
    return %c0_i32, %c0_i32_0 : i32, i32
  }
  func.func @transform_6(%arg0: i32) -> (i32, i32) {
    %c0_i32 = arith.constant 0 : i32
    %c0_i32_0 = arith.constant 0 : i32
    %c0_i32_1 = arith.constant 0 : i32
    return %c0_i32, %c0_i32_0 : i32, i32
  }
  func.func @transform_7(%arg0: i32) -> (i32, i32) {
    %c0_i32 = arith.constant 0 : i32
    %c0_i32_0 = arith.constant 0 : i32
    %c0_i32_1 = arith.constant 0 : i32
    return %c0_i32, %c0_i32_0 : i32, i32
  }
  func.func @transform_8(%arg0: i32) -> (i32, i32) {
    %c0_i32 = arith.constant 0 : i32
    %c0_i32_0 = arith.constant 0 : i32
    %c0_i32_1 = arith.constant 0 : i32
    return %c0_i32, %c0_i32_0 : i32, i32
  }
  func.func @transform_9(%arg0: i32) -> (i32, i32) {
    %c0_i32 = arith.constant 0 : i32
    %c0_i32_0 = arith.constant 0 : i32
    return %c0_i32, %arg0 : i32, i32
  }
}

</mosaic_0001>

<llo_original>
// kernel: tpu_custom_call.1
$region0: #{tpu_custom_call.1}
  #allocation0 [shape = 'u32[]', space=smem, size = 0x4, offset = 0x4, fixed_abs, tag = 'smem constant byte address 0x4 - core index']
  #allocation1 [shape = 'u32[144,128]{1,0:T(1,128)}', space=vmem, size = 0x12000, scoped, tag = 'internal scratch']
  #allocation2 [shape = 'f32[1,1]{1,0:T(1,128)S(1)}', space=vmem, size = 0x200, scoped, tag = 'scoped memory for tpu_custom_call.1']
  %s0 = inlined_call_operand.vmem [shape: f32[1024,4], index: 0, kind: input, shape index: {}]
  %s1 = inlined_call_operand.vmem [shape: f32[4,256], index: 1, kind: input, shape index: {}]
  %s2 = inlined_call_operand.vmem [shape: f32[1,256], index: 2, kind: input, shape index: {}]
  %s3 = inlined_call_operand.vmem [shape: bf16[256,256], index: 3, kind: input, shape index: {}]
  %s4 = inlined_call_operand.vmem [shape: f32[1,256], index: 4, kind: input, shape index: {}]
  %s5 = inlined_call_operand.vmem [shape: bf16[256,256], index: 5, kind: input, shape index: {}]
  %s6 = inlined_call_operand.vmem [shape: f32[1,256], index: 6, kind: input, shape index: {}]
  %s7 = inlined_call_operand.vmem [shape: bf16[1,256], index: 7, kind: input, shape index: {}]
  %s8 = inlined_call_operand.<no memory space> [shape: f32[1,1], index: 8, kind: input, shape index: {}]
  %s9 = inlined_call_operand.hbm [shape: f32[1,1024], index: 9, kind: output, shape index: {}]
  %s10 = sld [smem:[#allocation0]]
  $region69: #{tpu_custom_call.1} parent=0
    _
  %s12 = ssub.s32 1, %s10
  %s13 = scalar_select 0, %s12, %s10
  %v14 = vstv %s8
  %15 = vst [vmem:[#allocation2] sm:$0x1] %v14
  $region1: #{tpu_custom_call.1} parent=0
    #allocation3 [shape = 'u8[4096]{0}', space=vmem, size = 0x1000, scoped, tag = 'output window, operand 0']
    #allocation4 [shape = 's32[2]{0}', space=sflag, size = 0x8, scoped, tag = 'scoped memory for tpu_custom_call.1']
    %16 = vsyncpa [#allocation4], 0
    %s17 = scalar_lea.sflag [#allocation4], 1
    %18 = vsyncpa %s17, 0
    loop: start=0, step=1, limit=4
    $region2: #{tpu_custom_call.1} parent=1 // loop_pre_header
      _
    $region3: #{tpu_custom_call.1} parent=1 // loop_header
      %s20 = sphi 0, %s24
      %p21 = scmp.ge.s32.totalorder %s20, 4
      %s30 = sphi 0, %s32
      %s33 = sphi 0, %s30
      %s34 = sphi 0, %s33
      %s50 = sphi 0, %s34
      %s54 = sphi 0, %s54
      %s56 = sphi 0, %s54
      %s57 = sphi 0, %s56
      %s71 = sphi 0, %s57
      %s75 = sphi 0, %s75
      %s77 = sphi 0, %s75
      %s78 = sphi 0, %s77
      %s92 = sphi 0, %s78
      %s96 = sphi 0, %s96
      %s98 = sphi 0, %s96
      %s99 = sphi 0, %s98
      %s113 = sphi 0, %s99
      %s117 = sphi 0, %s117
      %s119 = sphi 0, %s117
      %s120 = sphi 0, %s119
      %s134 = sphi 0, %s120
      %s138 = sphi 0, %s138
      %s140 = sphi 0, %s138
      %s141 = sphi 0, %s140
      %s155 = sphi 0, %s141
      %s159 = sphi 0, %s159
      %s161 = sphi 0, %s159
      %s162 = sphi 0, %s161
      %s176 = sphi 0, %s162
      %s180 = sphi 0, %s180
      %s182 = sphi 0, %s180
      %s183 = sphi 0, %s182
      %s197 = sphi 0, %s183
      %s201 = sphi 0, %s201
      %s203 = sphi 0, %s201
      %s204 = sphi 0, %s203
      %s218 = sphi 0, %s204
      %s224 = sphi 0, %s226
      %s227 = sphi 0, %s224
      %s228 = sphi 0, %s227
      %s244 = sphi 0, %s228
    $region4: #{tpu_custom_call.1} parent=1 // loop_header_branch
      %23 = sbr.rel (%p21) target = $region8
    $region5: #{tpu_custom_call.1} parent=1 // loop_body
      %s25 = ssub.s32 %s20, 1
      %s26 = ssub.s32 %s20, 2
      %s27 = sadd.s32 %s20, 1
      %s28 = ssub.s32 %s20, %s27
      %p29 = scmp.eq.s32.totalorder %s28, 0
      %s31 = sadd.s32 %s30, 1
      %s32 = scalar_select %p29, %s30, %s31
      %p35 = pneg %p29
      %p36 = scmp.eq.s32.totalorder %s20, 1
      %p37 = por %p35, %p36
      %p38 = scmp.ne.s32.totalorder %s30, %s33
      %p39 = scmp.eq.s32.totalorder %s20, 0
      %p40 = por %p38, %p39
      %p41 = scmp.ne.s32.totalorder %s30, %s33
      %p42 = scmp.eq.s32.totalorder %s25, 1
      %p43 = por %p41, %p42
      %p44 = scmp.ne.s32.totalorder %s33, %s34
      %p45 = scmp.eq.s32.totalorder %s25, 0
      %p46 = por %p44, %p45
      %p47 = scmp.ne.s32.totalorder %s33, %s34
      %p48 = scmp.eq.s32.totalorder %s26, 1
      %p49 = por %p47, %p48
      %p51 = scmp.ne.s32.totalorder %s34, %s50
      %p52 = scmp.eq.s32.totalorder %s26, 0
      %p53 = por %p51, %p52
      %s55 = sadd.s32 %s54, 1
      %p58 = scmp.eq.s32.totalorder %s20, 1
      %p59 = scmp.ne.s32.totalorder %s54, %s56
      %p60 = scmp.eq.s32.totalorder %s20, 0
      %p61 = por %p59, %p60
      %p62 = scmp.ne.s32.totalorder %s54, %s56
      %p63 = scmp.eq.s32.totalorder %s25, 1
      %p64 = por %p62, %p63
      %p65 = scmp.ne.s32.totalorder %s56, %s57
      %p66 = scmp.eq.s32.totalorder %s25, 0
      %p67 = por %p65, %p66
      %p68 = scmp.ne.s32.totalorder %s56, %s57
      %p69 = scmp.eq.s32.totalorder %s26, 1
      %p70 = por %p68, %p69
      %p72 = scmp.ne.s32.totalorder %s57, %s71
      %p73 = scmp.eq.s32.totalorder %s26, 0
      %p74 = por %p72, %p73
      %s76 = sadd.s32 %s75, 1
      %p79 = scmp.eq.s32.totalorder %s20, 1
      %p80 = scmp.ne.s32.totalorder %s75, %s77
      %p81 = scmp.eq.s32.totalorder %s20, 0
      %p82 = por %p80, %p81
      %p83 = scmp.ne.s32.totalorder %s75, %s77
      %p84 = scmp.eq.s32.totalorder %s25, 1
      %p85 = por %p83, %p84
      %p86 = scmp.ne.s32.totalorder %s77, %s78
      %p87 = scmp.eq.s32.totalorder %s25, 0
      %p88 = por %p86, %p87
      %p89 = scmp.ne.s32.totalorder %s77, %s78
      %p90 = scmp.eq.s32.totalorder %s26, 1
      %p91 = por %p89, %p90
      %p93 = scmp.ne.s32.totalorder %s78, %s92
      %p94 = scmp.eq.s32.totalorder %s26, 0
      %p95 = por %p93, %p94
      %s97 = sadd.s32 %s96, 1
      %p100 = scmp.eq.s32.totalorder %s20, 1
      %p101 = scmp.ne.s32.totalorder %s96, %s98
      %p102 = scmp.eq.s32.totalorder %s20, 0
      %p103 = por %p101, %p102
      %p104 = scmp.ne.s32.totalorder %s96, %s98
      %p105 = scmp.eq.s32.totalorder %s25, 1
      %p106 = por %p104, %p105
      %p107 = scmp.ne.s32.totalorder %s98, %s99
      %p108 = scmp.eq.s32.totalorder %s25, 0
      %p109 = por %p107, %p108
      %p110 = scmp.ne.s32.totalorder %s98, %s99
      %p111 = scmp.eq.s32.totalorder %s26, 1
      %p112 = por %p110, %p111
      %p114 = scmp.ne.s32.totalorder %s99, %s113
      %p115 = scmp.eq.s32.totalorder %s26, 0
      %p116 = por %p114, %p115
      %s118 = sadd.s32 %s117, 1
      %p121 = scmp.eq.s32.totalorder %s20, 1
      %p122 = scmp.ne.s32.totalorder %s117, %s119
      %p123 = scmp.eq.s32.totalorder %s20, 0
      %p124 = por %p122, %p123
      %p125 = scmp.ne.s32.totalorder %s117, %s119
      %p126 = scmp.eq.s32.totalorder %s25, 1
      %p127 = por %p125, %p126
      %p128 = scmp.ne.s32.totalorder %s119, %s120
      %p129 = scmp.eq.s32.totalorder %s25, 0
      %p130 = por %p128, %p129
      %p131 = scmp.ne.s32.totalorder %s119, %s120
      %p132 = scmp.eq.s32.totalorder %s26, 1
      %p133 = por %p131, %p132
      %p135 = scmp.ne.s32.totalorder %s120, %s134
      %p136 = scmp.eq.s32.totalorder %s26, 0
      %p137 = por %p135, %p136
      %s139 = sadd.s32 %s138, 1
      %p142 = scmp.eq.s32.totalorder %s20, 1
      %p143 = scmp.ne.s32.totalorder %s138, %s140
      %p144 = scmp.eq.s32.totalorder %s20, 0
      %p145 = por %p143, %p144
      %p146 = scmp.ne.s32.totalorder %s138, %s140
      %p147 = scmp.eq.s32.totalorder %s25, 1
      %p148 = por %p146, %p147
      %p149 = scmp.ne.s32.totalorder %s140, %s141
      %p150 = scmp.eq.s32.totalorder %s25, 0
      %p151 = por %p149, %p150
      %p152 = scmp.ne.s32.totalorder %s140, %s141
      %p153 = scmp.eq.s32.totalorder %s26, 1
      %p154 = por %p152, %p153
      %p156 = scmp.ne.s32.totalorder %s141, %s155
      %p157 = scmp.eq.s32.totalorder %s26, 0
      %p158 = por %p156, %p157
      %s160 = sadd.s32 %s159, 1
      %p163 = scmp.eq.s32.totalorder %s20, 1
      %p164 = scmp.ne.s32.totalorder %s159, %s161
      %p165 = scmp.eq.s32.totalorder %s20, 0
      %p166 = por %p164, %p165
      %p167 = scmp.ne.s32.totalorder %s159, %s161
      %p168 = scmp.eq.s32.totalorder %s25, 1
      %p169 = por %p167, %p168
      %p170 = scmp.ne.s32.totalorder %s161, %s162
      %p171 = scmp.eq.s32.totalorder %s25, 0
      %p172 = por %p170, %p171
      %p173 = scmp.ne.s32.totalorder %s161, %s162
      %p174 = scmp.eq.s32.totalorder %s26, 1
      %p175 = por %p173, %p174
      %p177 = scmp.ne.s32.totalorder %s162, %s176
      %p178 = scmp.eq.s32.totalorder %s26, 0
      %p179 = por %p177, %p178
      %s181 = sadd.s32 %s180, 1
      %p184 = scmp.eq.s32.totalorder %s20, 1
      %p185 = scmp.ne.s32.totalorder %s180, %s182
      %p186 = scmp.eq.s32.totalorder %s20, 0
      %p187 = por %p185, %p186
      %p188 = scmp.ne.s32.totalorder %s180, %s182
      %p189 = scmp.eq.s32.totalorder %s25, 1
      %p190 = por %p188, %p189
      %p191 = scmp.ne.s32.totalorder %s182, %s183
      %p192 = scmp.eq.s32.totalorder %s25, 0
      %p193 = por %p191, %p192
      %p194 = scmp.ne.s32.totalorder %s182, %s183
      %p195 = scmp.eq.s32.totalorder %s26, 1
      %p196 = por %p194, %p195
      %p198 = scmp.ne.s32.totalorder %s183, %s197
      %p199 = scmp.eq.s32.totalorder %s26, 0
      %p200 = por %p198, %p199
      %s202 = sadd.s32 %s201, 1
      %p205 = scmp.eq.s32.totalorder %s20, 1
      %p206 = scmp.ne.s32.totalorder %s201, %s203
      %p207 = scmp.eq.s32.totalorder %s20, 0
      %p208 = por %p206, %p207
      %p209 = scmp.ne.s32.totalorder %s201, %s203
      %p210 = scmp.eq.s32.totalorder %s25, 1
      %p211 = por %p209, %p210
      %p212 = scmp.ne.s32.totalorder %s203, %s204
      %p213 = scmp.eq.s32.totalorder %s25, 0
      %p214 = por %p212, %p213
      %p215 = scmp.ne.s32.totalorder %s203, %s204
      %p216 = scmp.eq.s32.totalorder %s26, 1
      %p217 = por %p215, %p216
      %p219 = scmp.ne.s32.totalorder %s204, %s218
      %p220 = scmp.eq.s32.totalorder %s26, 0
      %p221 = por %p219, %p220
      %s222 = ssub.s32 %s20, %s27
      %p223 = scmp.eq.s32.totalorder %s222, 0
      %s225 = sadd.s32 %s224, 1
      %s226 = scalar_select %p223, %s224, %s225
      %p229 = pneg %p223
      %p230 = scmp.eq.s32.totalorder %s20, 1
      %p231 = por %p229, %p230
      %p232 = scmp.ne.s32.totalorder %s224, %s227
      %p233 = scmp.eq.s32.totalorder %s20, 0
      %p234 = por %p232, %p233
      %p235 = scmp.ne.s32.totalorder %s224, %s227
      %p236 = scmp.eq.s32.totalorder %s25, 1
      %p237 = por %p235, %p236
      %p238 = scmp.ne.s32.totalorder %s227, %s228
      %p239 = scmp.eq.s32.totalorder %s25, 0
      %p240 = por %p238, %p239
      %p241 = scmp.ne.s32.totalorder %s227, %s228
      %p242 = scmp.eq.s32.totalorder %s26, 1
      %p243 = por %p241, %p242
      %p245 = scmp.ne.s32.totalorder %s228, %s244
      %p246 = scmp.eq.s32.totalorder %s26, 0
      %p247 = por %p245, %p246
      %p248 = scmp.le.s32.totalorder 1, %s20
      %p249 = scmp.lt.s32.totalorder %s20, 3
      %p250 = pnand %p248, %p249
      %p251 = pneg %p250
      // Predicated region
      $region9: #{tpu_custom_call.1} parent=5 // pred_check
        _
      $region10: #{tpu_custom_call.1} parent=5 // pred_check_branch
        %253 = sbr.rel (%p250) target = $region12
      $region11: #{tpu_custom_call.1} parent=5 // pred_region
        %s254 = ssub.s32 %s20, 1
        // Predicated region
        $region13: #{tpu_custom_call.1} parent=11 // pred_check
          %p255 = pneg %p67
        $region14: #{tpu_custom_call.1} parent=11 // pred_check_branch
          %257 = sbr.rel (%p255) target = $region16
        $region15: #{tpu_custom_call.1} parent=11 // pred_region
          _
        $region16: #{tpu_custom_call.1} parent=11 // pred_fallthru
          _
        // Predicated region
        $region17: #{tpu_custom_call.1} parent=11 // pred_check
          %p258 = pneg %p88
        $region18: #{tpu_custom_call.1} parent=11 // pred_check_branch
          %260 = sbr.rel (%p258) target = $region20
        $region19: #{tpu_custom_call.1} parent=11 // pred_region
          _
        $region20: #{tpu_custom_call.1} parent=11 // pred_fallthru
          _
        // Predicated region
        $region21: #{tpu_custom_call.1} parent=11 // pred_check
          %p261 = pneg %p109
        $region22: #{tpu_custom_call.1} parent=11 // pred_check_branch
          %263 = sbr.rel (%p261) target = $region24
        $region23: #{tpu_custom_call.1} parent=11 // pred_region
          _
        $region24: #{tpu_custom_call.1} parent=11 // pred_fallthru
          _
        // Predicated region
        $region25: #{tpu_custom_call.1} parent=11 // pred_check
          %p264 = pneg %p130
        $region26: #{tpu_custom_call.1} parent=11 // pred_check_branch
          %266 = sbr.rel (%p264) target = $region28
        $region27: #{tpu_custom_call.1} parent=11 // pred_region
          _
        $region28: #{tpu_custom_call.1} parent=11 // pred_fallthru
          _
        // Predicated region
        $region29: #{tpu_custom_call.1} parent=11 // pred_check
          %p267 = pneg %p151
        $region30: #{tpu_custom_call.1} parent=11 // pred_check_branch
          %269 = sbr.rel (%p267) target = $region32
        $region31: #{tpu_custom_call.1} parent=11 // pred_region
          _
        $region32: #{tpu_custom_call.1} parent=11 // pred_fallthru
          _
        // Predicated region
        $region33: #{tpu_custom_call.1} parent=11 // pred_check
          %p270 = pneg %p172
        $region34: #{tpu_custom_call.1} parent=11 // pred_check_branch
          %272 = sbr.rel (%p270) target = $region36
        $region35: #{tpu_custom_call.1} parent=11 // pred_region
          _
        $region36: #{tpu_custom_call.1} parent=11 // pred_fallthru
          _
        // Predicated region
        $region37: #{tpu_custom_call.1} parent=11 // pred_check
          %p273 = pneg %p193
        $region38: #{tpu_custom_call.1} parent=11 // pred_check_branch
          %275 = sbr.rel (%p273) target = $region40
        $region39: #{tpu_custom_call.1} parent=11 // pred_region
          _
        $region40: #{tpu_custom_call.1} parent=11 // pred_fallthru
          _
        // Predicated region
        $region41: #{tpu_custom_call.1} parent=11 // pred_check
          %p276 = pneg %p214
        $region42: #{tpu_custom_call.1} parent=11 // pred_check_branch
          %278 = sbr.rel (%p276) target = $region44
        $region43: #{tpu_custom_call.1} parent=11 // pred_region
          _
        $region44: #{tpu_custom_call.1} parent=11 // pred_fallthru
          _
      $region12: #{tpu_custom_call.1} parent=5 // pred_fallthru
        _
      %p279 = scmp.lt.s32.totalorder %s20, 2
      // Predicated region
      $region45: #{tpu_custom_call.1} parent=5 // pred_check
        %p280 = pneg %p279
      $region46: #{tpu_custom_call.1} parent=5 // pred_check_branch
        %282 = sbr.rel (%p280) target = $region48
      $region47: #{tpu_custom_call.1} parent=5 // pred_region
        // Predicated region
        $region49: #{tpu_custom_call.1} parent=47 // pred_check
          %p283 = pneg %p40
        $region50: #{tpu_custom_call.1} parent=47 // pred_check_branch
          %285 = sbr.rel (%p283) target = $region52
        $region51: #{tpu_custom_call.1} parent=47 // pred_region
          %s286 = smul.u32 64, %s20
          %p287 = scmp.lt.s32.totalorder %s286, 127
          %s288 = scalar_select %p287, %s286, 127
          %s289 = smul.addr %s288, 8
          %s290 = scalar_lea.vmem %s0, %s289
          %s291 = smul.u32 64, %s20
        $region52: #{tpu_custom_call.1} parent=47 // pred_fallthru
          _
      $region48: #{tpu_custom_call.1} parent=5 // pred_fallthru
        _
      %p292 = scmp.le.s32.totalorder 1, %s20
      %p293 = scmp.lt.s32.totalorder %s20, 3
      %p294 = pnand %p292, %p293
      %p295 = pneg %p294
      // Predicated region
      $region53: #{tpu_custom_call.1} parent=5 // pred_check
        _
      $region54: #{tpu_custom_call.1} parent=5 // pred_check_branch
        %297 = sbr.rel (%p294) target = $region56
      $region55: #{tpu_custom_call.1} parent=5 // pred_region
        %s298 = ssub.s32 %s20, 1
        %s299 = smul.u32 64, %s25
        %p300 = scmp.lt.s32.totalorder %s299, 127
        %s301 = scalar_select %p300, %s299, 127
        %s302 = smul.addr %s301, 8
        %s303 = scalar_lea.vmem %s0, %s302
        %p304 = pneg %p46
        %p305 = pneg %p43
        %p306 = pneg %p67
        %p307 = pneg %p64
        %p308 = pneg %p88
        %p309 = pneg %p85
        %p310 = pneg %p109
        %p311 = pneg %p106
        %p312 = pneg %p130
        %p313 = pneg %p127
        %p314 = pneg %p151
        %p315 = pneg %p148
        %p316 = pneg %p172
        %p317 = pneg %p169
        %p318 = pneg %p193
        %p319 = pneg %p190
        %p320 = pneg %p214
        %p321 = pneg %p211
        %p322 = pneg %p240
        %p323 = pneg %p237
        %s324 = sand.u32 %s227, 1
        %s325 = scalar_lea.sflag [#allocation4], %s324
        %s326 = sand.u32 %s227, 1
        %s327 = smul.addr %s326, 4
        %s328 = scalar_lea.vmem [#allocation3], %s327
        %s329 = smul.u32 64, %s25
        %p330 = scmp.lt.s32.totalorder %s329, 127
        %s331 = scalar_select %p330, %s329, 127
        %s332 = smul.addr %s331, 8
        %s333 = scalar_lea.vmem %s0, %s332
        %s334 = smul.u32 64, %s25
        %s335 = smul.u32 4, %s25
        %v336 = vld [vmem:[%s333] sm:$0xff]
        %v337 = vld [vmem:[%s333 + $0x8] sm:$0xff]
        %v338 = vld [vmem:[%s333 + $0x10] sm:$0xff]
        %v339 = vld [vmem:[%s333 + $0x18] sm:$0xff]
        %v340 = vld [vmem:[%s333 + $0x20] sm:$0xff]
        %v341 = vld [vmem:[%s333 + $0x28] sm:$0xff]
        %v342 = vld [vmem:[%s333 + $0x30] sm:$0xff]
        %v343 = vld [vmem:[%s333 + $0x38] sm:$0xff]
        %v344 = vld [vmem:[%s333 + $0x40] sm:$0xff]
        %v345 = vld [vmem:[%s333 + $0x48] sm:$0xff]
        %v346 = vld [vmem:[%s333 + $0x50] sm:$0xff]
        %v347 = vld [vmem:[%s333 + $0x58] sm:$0xff]
        %v348 = vld [vmem:[%s333 + $0x60] sm:$0xff]
        %v349 = vld [vmem:[%s333 + $0x68] sm:$0xff]
        %v350 = vld [vmem:[%s333 + $0x70] sm:$0xff]
        %v351 = vld [vmem:[%s333 + $0x78] sm:$0xff]
        %v352 = vld [vmem:[%s333 + $0x80] sm:$0xff]
        %v353 = vld [vmem:[%s333 + $0x88] sm:$0xff]
        %v354 = vld [vmem:[%s333 + $0x90] sm:$0xff]
        %v355 = vld [vmem:[%s333 + $0x98] sm:$0xff]
        %v356 = vld [vmem:[%s333 + $0xa0] sm:$0xff]
        %v357 = vld [vmem:[%s333 + $0xa8] sm:$0xff]
        %v358 = vld [vmem:[%s333 + $0xb0] sm:$0xff]
        %v359 = vld [vmem:[%s333 + $0xb8] sm:$0xff]
        %v360 = vld [vmem:[%s333 + $0xc0] sm:$0xff]
        %v361 = vld [vmem:[%s333 + $0xc8] sm:$0xff]
        %v362 = vld [vmem:[%s333 + $0xd0] sm:$0xff]
        %v363 = vld [vmem:[%s333 + $0xd8] sm:$0xff]
        %v364 = vld [vmem:[%s333 + $0xe0] sm:$0xff]
        %v365 = vld [vmem:[%s333 + $0xe8] sm:$0xff]
        %v366 = vld [vmem:[%s333 + $0xf0] sm:$0xff]
        %v367 = vld [vmem:[%s333 + $0xf8] sm:$0xff]
        %v368 = vld [vmem:[%s333 + $0x100] sm:$0xff]
        %v369 = vld [vmem:[%s333 + $0x108] sm:$0xff]
        %v370 = vld [vmem:[%s333 + $0x110] sm:$0xff]
        %v371 = vld [vmem:[%s333 + $0x118] sm:$0xff]
        %v372 = vld [vmem:[%s333 + $0x120] sm:$0xff]
        %v373 = vld [vmem:[%s333 + $0x128] sm:$0xff]
        %v374 = vld [vmem:[%s333 + $0x130] sm:$0xff]
        %v375 = vld [vmem:[%s333 + $0x138] sm:$0xff]
        %v376 = vld [vmem:[%s333 + $0x140] sm:$0xff]
        %v377 = vld [vmem:[%s333 + $0x148] sm:$0xff]
        %v378 = vld [vmem:[%s333 + $0x150] sm:$0xff]
        %v379 = vld [vmem:[%s333 + $0x158] sm:$0xff]
        %v380 = vld [vmem:[%s333 + $0x160] sm:$0xff]
        %v381 = vld [vmem:[%s333 + $0x168] sm:$0xff]
        %v382 = vld [vmem:[%s333 + $0x170] sm:$0xff]
        %v383 = vld [vmem:[%s333 + $0x178] sm:$0xff]
        %v384 = vld [vmem:[%s333 + $0x180] sm:$0xff]
        %v385 = vld [vmem:[%s333 + $0x188] sm:$0xff]
        %v386 = vld [vmem:[%s333 + $0x190] sm:$0xff]
        %v387 = vld [vmem:[%s333 + $0x198] sm:$0xff]
        %v388 = vld [vmem:[%s333 + $0x1a0] sm:$0xff]
        %v389 = vld [vmem:[%s333 + $0x1a8] sm:$0xff]
        %v390 = vld [vmem:[%s333 + $0x1b0] sm:$0xff]
        %v391 = vld [vmem:[%s333 + $0x1b8] sm:$0xff]
        %v392 = vld [vmem:[%s333 + $0x1c0] sm:$0xff]
        %v393 = vld [vmem:[%s333 + $0x1c8] sm:$0xff]
        %v394 = vld [vmem:[%s333 + $0x1d0] sm:$0xff]
        %v395 = vld [vmem:[%s333 + $0x1d8] sm:$0xff]
        %v396 = vld [vmem:[%s333 + $0x1e0] sm:$0xff]
        %v397 = vld [vmem:[%s333 + $0x1e8] sm:$0xff]
        %v398 = vld [vmem:[%s333 + $0x1f0] sm:$0xff]
        %v399 = vld [vmem:[%s333 + $0x1f8] sm:$0xff]
        %v400 = vld [vmem:[%s1] sm:$0xff]
        %402 = vset.pattern.permute.xlu0 0
        %403 = vperm.xlu0 %402, %v336
        %v404 = vpop.permute.xlu0 %403
        %407 = vset.pattern.permute.xlu0 0
        %408 = vperm.xlu0 %407, %v337
        %v409 = vpop.permute.xlu0 %408
        %412 = vset.pattern.permute.xlu0 0
        %413 = vperm.xlu0 %412, %v338
        %v414 = vpop.permute.xlu0 %413
        %417 = vset.pattern.permute.xlu0 0
        %418 = vperm.xlu0 %417, %v339
        %v419 = vpop.permute.xlu0 %418
        %422 = vset.pattern.permute.xlu0 0
        %423 = vperm.xlu0 %422, %v340
        %v424 = vpop.permute.xlu0 %423
        %427 = vset.pattern.permute.xlu0 0
        %428 = vperm.xlu0 %427, %v341
        %v429 = vpop.permute.xlu0 %428
        %432 = vset.pattern.permute.xlu0 0
        %433 = vperm.xlu0 %432, %v342
        %v434 = vpop.permute.xlu0 %433
        %437 = vset.pattern.permute.xlu0 0
        %438 = vperm.xlu0 %437, %v343
        %v439 = vpop.permute.xlu0 %438
        %442 = vset.pattern.permute.xlu0 0
        %443 = vperm.xlu0 %442, %v344
        %v444 = vpop.permute.xlu0 %443
        %447 = vset.pattern.permute.xlu0 0
        %448 = vperm.xlu0 %447, %v345
        %v449 = vpop.permute.xlu0 %448
        %452 = vset.pattern.permute.xlu0 0
        %453 = vperm.xlu0 %452, %v346
        %v454 = vpop.permute.xlu0 %453
        %457 = vset.pattern.permute.xlu0 0
        %458 = vperm.xlu0 %457, %v347
        %v459 = vpop.permute.xlu0 %458
        %462 = vset.pattern.permute.xlu0 0
        %463 = vperm.xlu0 %462, %v348
        %v464 = vpop.permute.xlu0 %463
        %467 = vset.pattern.permute.xlu0 0
        %468 = vperm.xlu0 %467, %v349
        %v469 = vpop.permute.xlu0 %468
        %472 = vset.pattern.permute.xlu0 0
        %473 = vperm.xlu0 %472, %v350
        %v474 = vpop.permute.xlu0 %473
        %477 = vset.pattern.permute.xlu0 0
        %478 = vperm.xlu0 %477, %v351
        %v479 = vpop.permute.xlu0 %478
        %482 = vset.pattern.permute.xlu0 0
        %483 = vperm.xlu0 %482, %v352
        %v484 = vpop.permute.xlu0 %483
        %487 = vset.pattern.permute.xlu0 0
        %488 = vperm.xlu0 %487, %v353
        %v489 = vpop.permute.xlu0 %488
        %492 = vset.pattern.permute.xlu0 0
        %493 = vperm.xlu0 %492, %v354
        %v494 = vpop.permute.xlu0 %493
        %497 = vset.pattern.permute.xlu0 0
        %498 = vperm.xlu0 %497, %v355
        %v499 = vpop.permute.xlu0 %498
        %502 = vset.pattern.permute.xlu0 0
        %503 = vperm.xlu0 %502, %v356
        %v504 = vpop.permute.xlu0 %503
        %507 = vset.pattern.permute.xlu0 0
        %508 = vperm.xlu0 %507, %v357
        %v509 = vpop.permute.xlu0 %508
        %512 = vset.pattern.permute.xlu0 0
        %513 = vperm.xlu0 %512, %v358
        %v514 = vpop.permute.xlu0 %513
        %517 = vset.pattern.permute.xlu0 0
        %518 = vperm.xlu0 %517, %v359
        %v519 = vpop.permute.xlu0 %518
        %522 = vset.pattern.permute.xlu0 0
        %523 = vperm.xlu0 %522, %v360
        %v524 = vpop.permute.xlu0 %523
        %527 = vset.pattern.permute.xlu0 0
        %528 = vperm.xlu0 %527, %v361
        %v529 = vpop.permute.xlu0 %528
        %532 = vset.pattern.permute.xlu0 0
        %533 = vperm.xlu0 %532, %v362
        %v534 = vpop.permute.xlu0 %533
        %537 = vset.pattern.permute.xlu0 0
        %538 = vperm.xlu0 %537, %v363
        %v539 = vpop.permute.xlu0 %538
        %542 = vset.pattern.permute.xlu0 0
        %543 = vperm.xlu0 %542, %v364
        %v544 = vpop.permute.xlu0 %543
        %547 = vset.pattern.permute.xlu0 0
        %548 = vperm.xlu0 %547, %v365
        %v549 = vpop.permute.xlu0 %548
        %552 = vset.pattern.permute.xlu0 0
        %553 = vperm.xlu0 %552, %v366
        %v554 = vpop.permute.xlu0 %553
        %557 = vset.pattern.permute.xlu0 0
        %558 = vperm.xlu0 %557, %v367
        %v559 = vpop.permute.xlu0 %558
        %562 = vset.pattern.permute.xlu0 0
        %563 = vperm.xlu0 %562, %v368
        %v564 = vpop.permute.xlu0 %563
        %567 = vset.pattern.permute.xlu0 0
        %568 = vperm.xlu0 %567, %v369
        %v569 = vpop.permute.xlu0 %568
        %572 = vset.pattern.permute.xlu0 0
        %573 = vperm.xlu0 %572, %v370
        %v574 = vpop.permute.xlu0 %573
        %577 = vset.pattern.permute.xlu0 0
        %578 = vperm.xlu0 %577, %v371
        %v579 = vpop.permute.xlu0 %578
        %582 = vset.pattern.permute.xlu0 0
        %583 = vperm.xlu0 %582, %v372
        %v584 = vpop.permute.xlu0 %583
        %587 = vset.pattern.permute.xlu0 0
        %588 = vperm.xlu0 %587, %v373
        %v589 = vpop.permute.xlu0 %588
        %592 = vset.pattern.permute.xlu0 0
        %593 = vperm.xlu0 %592, %v374
        %v594 = vpop.permute.xlu0 %593
        %597 = vset.pattern.permute.xlu0 0
        %598 = vperm.xlu0 %597, %v375
        %v599 = vpop.permute.xlu0 %598
        %602 = vset.pattern.permute.xlu0 0
        %603 = vperm.xlu0 %602, %v376
        %v604 = vpop.permute.xlu0 %603
        %607 = vset.pattern.permute.xlu0 0
        %608 = vperm.xlu0 %607, %v377
        %v609 = vpop.permute.xlu0 %608
        %612 = vset.pattern.permute.xlu0 0
        %613 = vperm.xlu0 %612, %v378
        %v614 = vpop.permute.xlu0 %613
        %617 = vset.pattern.permute.xlu0 0
        %618 = vperm.xlu0 %617, %v379
        %v619 = vpop.permute.xlu0 %618
        %622 = vset.pattern.permute.xlu0 0
        %623 = vperm.xlu0 %622, %v380
        %v624 = vpop.permute.xlu0 %623
        %627 = vset.pattern.permute.xlu0 0
        %628 = vperm.xlu0 %627, %v381
        %v629 = vpop.permute.xlu0 %628
        %632 = vset.pattern.permute.xlu0 0
        %633 = vperm.xlu0 %632, %v382
        %v634 = vpop.permute.xlu0 %633
        %637 = vset.pattern.permute.xlu0 0
        %638 = vperm.xlu0 %637, %v383
        %v639 = vpop.permute.xlu0 %638
        %642 = vset.pattern.permute.xlu0 0
        %643 = vperm.xlu0 %642, %v384
        %v644 = vpop.permute.xlu0 %643
        %647 = vset.pattern.permute.xlu0 0
        %648 = vperm.xlu0 %647, %v385
        %v649 = vpop.permute.xlu0 %648
        %652 = vset.pattern.permute.xlu0 0
        %653 = vperm.xlu0 %652, %v386
        %v654 = vpop.permute.xlu0 %653
        %657 = vset.pattern.permute.xlu0 0
        %658 = vperm.xlu0 %657, %v387
        %v659 = vpop.permute.xlu0 %658
        %662 = vset.pattern.permute.xlu0 0
        %663 = vperm.xlu0 %662, %v388
        %v664 = vpop.permute.xlu0 %663
        %667 = vset.pattern.permute.xlu0 0
        %668 = vperm.xlu0 %667, %v389
        %v669 = vpop.permute.xlu0 %668
        %672 = vset.pattern.permute.xlu0 0
        %673 = vperm.xlu0 %672, %v390
        %v674 = vpop.permute.xlu0 %673
        %677 = vset.pattern.permute.xlu0 0
        %678 = vperm.xlu0 %677, %v391
        %v679 = vpop.permute.xlu0 %678
        %682 = vset.pattern.permute.xlu0 0
        %683 = vperm.xlu0 %682, %v392
        %v684 = vpop.permute.xlu0 %683
        %687 = vset.pattern.permute.xlu0 0
        %688 = vperm.xlu0 %687, %v393
        %v689 = vpop.permute.xlu0 %688
        %692 = vset.pattern.permute.xlu0 0
        %693 = vperm.xlu0 %692, %v394
        %v694 = vpop.permute.xlu0 %693
        %697 = vset.pattern.permute.xlu0 0
        %698 = vperm.xlu0 %697, %v395
        %v699 = vpop.permute.xlu0 %698
        %702 = vset.pattern.permute.xlu0 0
        %703 = vperm.xlu0 %702, %v396
        %v704 = vpop.permute.xlu0 %703
        %707 = vset.pattern.permute.xlu0 0
        %708 = vperm.xlu0 %707, %v397
        %v709 = vpop.permute.xlu0 %708
        %712 = vset.pattern.permute.xlu0 0
        %713 = vperm.xlu0 %712, %v398
        %v714 = vpop.permute.xlu0 %713
        %717 = vset.pattern.permute.xlu0 0
        %718 = vperm.xlu0 %717, %v399
        %v719 = vpop.permute.xlu0 %718
        %v722 = vlaneseq
        %v723 = vshrl.u32 %v722, 7
        %v724 = vsub.s32 0, %v723
        %v725 = vrot.slane %v400, %v724
        %v726 = vlaneseq
        %v727 = vshrl.u32 %v726, 7
        %v728 = vsub.s32 4, %v727
        %v729 = vrot.slane %v400, %v728
        %v732 = vlaneseq
        %v733 = vshrl.u32 %v732, 7
        %v734 = vsub.s32 0, %v733
        %v735 = vrot.slane %v725, %v734
        %v736 = vlaneseq
        %v737 = vshrl.u32 %v736, 7
        %v738 = vsub.s32 0, %v737
        %v739 = vrot.slane %v729, %v738
        %v740 = vmul.f32 %v404, %v735
        %v741 = vmul.f32 %v404, %v739
        %v742 = vmul.f32 %v409, %v735
        %v743 = vmul.f32 %v409, %v739
        %v744 = vmul.f32 %v414, %v735
        %v745 = vmul.f32 %v414, %v739
        %v746 = vmul.f32 %v419, %v735
        %v747 = vmul.f32 %v419, %v739
        %v748 = vmul.f32 %v424, %v735
        %v749 = vmul.f32 %v424, %v739
        %v750 = vmul.f32 %v429, %v735
        %v751 = vmul.f32 %v429, %v739
        %v752 = vmul.f32 %v434, %v735
        %v753 = vmul.f32 %v434, %v739
        %v754 = vmul.f32 %v439, %v735
        %v755 = vmul.f32 %v439, %v739
        %v756 = vmul.f32 %v444, %v735
        %v757 = vmul.f32 %v444, %v739
        %v758 = vmul.f32 %v449, %v735
        %v759 = vmul.f32 %v449, %v739
        %v760 = vmul.f32 %v454, %v735
        %v761 = vmul.f32 %v454, %v739
        %v762 = vmul.f32 %v459, %v735
        %v763 = vmul.f32 %v459, %v739
        %v764 = vmul.f32 %v464, %v735
        %v765 = vmul.f32 %v464, %v739
        %v766 = vmul.f32 %v469, %v735
        %v767 = vmul.f32 %v469, %v739
        %v768 = vmul.f32 %v474, %v735
        %v769 = vmul.f32 %v474, %v739
        %v770 = vmul.f32 %v479, %v735
        %v771 = vmul.f32 %v479, %v739
        %v772 = vmul.f32 %v484, %v735
        %v773 = vmul.f32 %v484, %v739
        %v774 = vmul.f32 %v489, %v735
        %v775 = vmul.f32 %v489, %v739
        %v776 = vmul.f32 %v494, %v735
        %v777 = vmul.f32 %v494, %v739
        %v778 = vmul.f32 %v499, %v735
        %v779 = vmul.f32 %v499, %v739
        %v780 = vmul.f32 %v504, %v735
        %v781 = vmul.f32 %v504, %v739
        %v782 = vmul.f32 %v509, %v735
        %v783 = vmul.f32 %v509, %v739
        %v784 = vmul.f32 %v514, %v735
        %v785 = vmul.f32 %v514, %v739
        %v786 = vmul.f32 %v519, %v735
        %v787 = vmul.f32 %v519, %v739
        %v788 = vmul.f32 %v524, %v735
        %v789 = vmul.f32 %v524, %v739
        %v790 = vmul.f32 %v529, %v735
        %v791 = vmul.f32 %v529, %v739
        %v792 = vmul.f32 %v534, %v735
        %v793 = vmul.f32 %v534, %v739
        %v794 = vmul.f32 %v539, %v735
        %v795 = vmul.f32 %v539, %v739
        %v796 = vmul.f32 %v544, %v735
        %v797 = vmul.f32 %v544, %v739
        %v798 = vmul.f32 %v549, %v735
        %v799 = vmul.f32 %v549, %v739
        %v800 = vmul.f32 %v554, %v735
        %v801 = vmul.f32 %v554, %v739
        %v802 = vmul.f32 %v559, %v735
        %v803 = vmul.f32 %v559, %v739
        %v804 = vmul.f32 %v564, %v735
        %v805 = vmul.f32 %v564, %v739
        %v806 = vmul.f32 %v569, %v735
        %v807 = vmul.f32 %v569, %v739
        %v808 = vmul.f32 %v574, %v735
        %v809 = vmul.f32 %v574, %v739
        %v810 = vmul.f32 %v579, %v735
        %v811 = vmul.f32 %v579, %v739
        %v812 = vmul.f32 %v584, %v735
        %v813 = vmul.f32 %v584, %v739
        %v814 = vmul.f32 %v589, %v735
        %v815 = vmul.f32 %v589, %v739
        %v816 = vmul.f32 %v594, %v735
        %v817 = vmul.f32 %v594, %v739
        %v818 = vmul.f32 %v599, %v735
        %v819 = vmul.f32 %v599, %v739
        %v820 = vmul.f32 %v604, %v735
        %v821 = vmul.f32 %v604, %v739
        %v822 = vmul.f32 %v609, %v735
        %v823 = vmul.f32 %v609, %v739
        %v824 = vmul.f32 %v614, %v735
        %v825 = vmul.f32 %v614, %v739
        %v826 = vmul.f32 %v619, %v735
        %v827 = vmul.f32 %v619, %v739
        %v828 = vmul.f32 %v624, %v735
        %v829 = vmul.f32 %v624, %v739
        %v830 = vmul.f32 %v629, %v735
        %v831 = vmul.f32 %v629, %v739
        %v832 = vmul.f32 %v634, %v735
        %v833 = vmul.f32 %v634, %v739
        %v834 = vmul.f32 %v639, %v735
        %v835 = vmul.f32 %v639, %v739
        %v836 = vmul.f32 %v644, %v735
        %v837 = vmul.f32 %v644, %v739
        %v838 = vmul.f32 %v649, %v735
        %v839 = vmul.f32 %v649, %v739
        %v840 = vmul.f32 %v654, %v735
        %v841 = vmul.f32 %v654, %v739
        %v842 = vmul.f32 %v659, %v735
        %v843 = vmul.f32 %v659, %v739
        %v844 = vmul.f32 %v664, %v735
        %v845 = vmul.f32 %v664, %v739
        %v846 = vmul.f32 %v669, %v735
        %v847 = vmul.f32 %v669, %v739
        %v848 = vmul.f32 %v674, %v735
        %v849 = vmul.f32 %v674, %v739
        %v850 = vmul.f32 %v679, %v735
        %v851 = vmul.f32 %v679, %v739
        %v852 = vmul.f32 %v684, %v735
        %v853 = vmul.f32 %v684, %v739
        %v854 = vmul.f32 %v689, %v735
        %v855 = vmul.f32 %v689, %v739
        %v856 = vmul.f32 %v694, %v735
        %v857 = vmul.f32 %v694, %v739
        %v858 = vmul.f32 %v699, %v735
        %v859 = vmul.f32 %v699, %v739
        %v860 = vmul.f32 %v704, %v735
        %v861 = vmul.f32 %v704, %v739
        %v862 = vmul.f32 %v709, %v735
        %v863 = vmul.f32 %v709, %v739
        %v864 = vmul.f32 %v714, %v735
        %v865 = vmul.f32 %v714, %v739
        %v866 = vmul.f32 %v719, %v735
        %v867 = vmul.f32 %v719, %v739
        %868 = vset.pattern.permute.xlu0 1
        %869 = vperm.xlu0 %868, %v336
        %v870 = vpop.permute.xlu0 %869
        %872 = vset.pattern.permute.xlu0 1
        %873 = vperm.xlu0 %872, %v337
        %v874 = vpop.permute.xlu0 %873
        %876 = vset.pattern.permute.xlu0 1
        %877 = vperm.xlu0 %876, %v338
        %v878 = vpop.permute.xlu0 %877
        %880 = vset.pattern.permute.xlu0 1
        %881 = vperm.xlu0 %880, %v339
        %v882 = vpop.permute.xlu0 %881
        %884 = vset.pattern.permute.xlu0 1
        %885 = vperm.xlu0 %884, %v340
        %v886 = vpop.permute.xlu0 %885
        %888 = vset.pattern.permute.xlu0 1
        %889 = vperm.xlu0 %888, %v341
        %v890 = vpop.permute.xlu0 %889
        %892 = vset.pattern.permute.xlu0 1
        %893 = vperm.xlu0 %892, %v342
        %v894 = vpop.permute.xlu0 %893
        %896 = vset.pattern.permute.xlu0 1
        %897 = vperm.xlu0 %896, %v343
        %v898 = vpop.permute.xlu0 %897
        %900 = vset.pattern.permute.xlu0 1
        %901 = vperm.xlu0 %900, %v344
        %v902 = vpop.permute.xlu0 %901
        %904 = vset.pattern.permute.xlu0 1
        %905 = vperm.xlu0 %904, %v345
        %v906 = vpop.permute.xlu0 %905
        %908 = vset.pattern.permute.xlu0 1
        %909 = vperm.xlu0 %908, %v346
        %v910 = vpop.permute.xlu0 %909
        %912 = vset.pattern.permute.xlu0 1
        %913 = vperm.xlu0 %912, %v347
        %v914 = vpop.permute.xlu0 %913
        %916 = vset.pattern.permute.xlu0 1
        %917 = vperm.xlu0 %916, %v348
        %v918 = vpop.permute.xlu0 %917
        %920 = vset.pattern.permute.xlu0 1
        %921 = vperm.xlu0 %920, %v349
        %v922 = vpop.permute.xlu0 %921
        %924 = vset.pattern.permute.xlu0 1
        %925 = vperm.xlu0 %924, %v350
        %v926 = vpop.permute.xlu0 %925
        %928 = vset.pattern.permute.xlu0 1
        %929 = vperm.xlu0 %928, %v351
        %v930 = vpop.permute.xlu0 %929
        %932 = vset.pattern.permute.xlu0 1
        %933 = vperm.xlu0 %932, %v352
        %v934 = vpop.permute.xlu0 %933
        %936 = vset.pattern.permute.xlu0 1
        %937 = vperm.xlu0 %936, %v353
        %v938 = vpop.permute.xlu0 %937
        %940 = vset.pattern.permute.xlu0 1
        %941 = vperm.xlu0 %940, %v354
        %v942 = vpop.permute.xlu0 %941
        %944 = vset.pattern.permute.xlu0 1
        %945 = vperm.xlu0 %944, %v355
        %v946 = vpop.permute.xlu0 %945
        %948 = vset.pattern.permute.xlu0 1
        %949 = vperm.xlu0 %948, %v356
        %v950 = vpop.permute.xlu0 %949
        %952 = vset.pattern.permute.xlu0 1
        %953 = vperm.xlu0 %952, %v357
        %v954 = vpop.permute.xlu0 %953
        %956 = vset.pattern.permute.xlu0 1
        %957 = vperm.xlu0 %956, %v358
        %v958 = vpop.permute.xlu0 %957
        %960 = vset.pattern.permute.xlu0 1
        %961 = vperm.xlu0 %960, %v359
        %v962 = vpop.permute.xlu0 %961
        %964 = vset.pattern.permute.xlu0 1
        %965 = vperm.xlu0 %964, %v360
        %v966 = vpop.permute.xlu0 %965
        %968 = vset.pattern.permute.xlu0 1
        %969 = vperm.xlu0 %968, %v361
        %v970 = vpop.permute.xlu0 %969
        %972 = vset.pattern.permute.xlu0 1
        %973 = vperm.xlu0 %972, %v362
        %v974 = vpop.permute.xlu0 %973
        %976 = vset.pattern.permute.xlu0 1
        %977 = vperm.xlu0 %976, %v363
        %v978 = vpop.permute.xlu0 %977
        %980 = vset.pattern.permute.xlu0 1
        %981 = vperm.xlu0 %980, %v364
        %v982 = vpop.permute.xlu0 %981
        %984 = vset.pattern.permute.xlu0 1
        %985 = vperm.xlu0 %984, %v365
        %v986 = vpop.permute.xlu0 %985
        %988 = vset.pattern.permute.xlu0 1
        %989 = vperm.xlu0 %988, %v366
        %v990 = vpop.permute.xlu0 %989
        %992 = vset.pattern.permute.xlu0 1
        %993 = vperm.xlu0 %992, %v367
        %v994 = vpop.permute.xlu0 %993
        %996 = vset.pattern.permute.xlu0 1
        %997 = vperm.xlu0 %996, %v368
        %v998 = vpop.permute.xlu0 %997
        %1000 = vset.pattern.permute.xlu0 1
        %1001 = vperm.xlu0 %1000, %v369
        %v1002 = vpop.permute.xlu0 %1001
        %1004 = vset.pattern.permute.xlu0 1
        %1005 = vperm.xlu0 %1004, %v370
        %v1006 = vpop.permute.xlu0 %1005
        %1008 = vset.pattern.permute.xlu0 1
        %1009 = vperm.xlu0 %1008, %v371
        %v1010 = vpop.permute.xlu0 %1009
        %1012 = vset.pattern.permute.xlu0 1
        %1013 = vperm.xlu0 %1012, %v372
        %v1014 = vpop.permute.xlu0 %1013
        %1016 = vset.pattern.permute.xlu0 1
        %1017 = vperm.xlu0 %1016, %v373
        %v1018 = vpop.permute.xlu0 %1017
        %1020 = vset.pattern.permute.xlu0 1
        %1021 = vperm.xlu0 %1020, %v374
        %v1022 = vpop.permute.xlu0 %1021
        %1024 = vset.pattern.permute.xlu0 1
        %1025 = vperm.xlu0 %1024, %v375
        %v1026 = vpop.permute.xlu0 %1025
        %1028 = vset.pattern.permute.xlu0 1
        %1029 = vperm.xlu0 %1028, %v376
        %v1030 = vpop.permute.xlu0 %1029
        %1032 = vset.pattern.permute.xlu0 1
        %1033 = vperm.xlu0 %1032, %v377
        %v1034 = vpop.permute.xlu0 %1033
        %1036 = vset.pattern.permute.xlu0 1
        %1037 = vperm.xlu0 %1036, %v378
        %v1038 = vpop.permute.xlu0 %1037
        %1040 = vset.pattern.permute.xlu0 1
        %1041 = vperm.xlu0 %1040, %v379
        %v1042 = vpop.permute.xlu0 %1041
        %1044 = vset.pattern.permute.xlu0 1
        %1045 = vperm.xlu0 %1044, %v380
        %v1046 = vpop.permute.xlu0 %1045
        %1048 = vset.pattern.permute.xlu0 1
        %1049 = vperm.xlu0 %1048, %v381
        %v1050 = vpop.permute.xlu0 %1049
        %1052 = vset.pattern.permute.xlu0 1
        %1053 = vperm.xlu0 %1052, %v382
        %v1054 = vpop.permute.xlu0 %1053
        %1056 = vset.pattern.permute.xlu0 1
        %1057 = vperm.xlu0 %1056, %v383
        %v1058 = vpop.permute.xlu0 %1057
        %1060 = vset.pattern.permute.xlu0 1
        %1061 = vperm.xlu0 %1060, %v384
        %v1062 = vpop.permute.xlu0 %1061
        %1064 = vset.pattern.permute.xlu0 1
        %1065 = vperm.xlu0 %1064, %v385
        %v1066 = vpop.permute.xlu0 %1065
        %1068 = vset.pattern.permute.xlu0 1
        %1069 = vperm.xlu0 %1068, %v386
        %v1070 = vpop.permute.xlu0 %1069
        %1072 = vset.pattern.permute.xlu0 1
        %1073 = vperm.xlu0 %1072, %v387
        %v1074 = vpop.permute.xlu0 %1073
        %1076 = vset.pattern.permute.xlu0 1
        %1077 = vperm.xlu0 %1076, %v388
        %v1078 = vpop.permute.xlu0 %1077
        %1080 = vset.pattern.permute.xlu0 1
        %1081 = vperm.xlu0 %1080, %v389
        %v1082 = vpop.permute.xlu0 %1081
        %1084 = vset.pattern.permute.xlu0 1
        %1085 = vperm.xlu0 %1084, %v390
        %v1086 = vpop.permute.xlu0 %1085
        %1088 = vset.pattern.permute.xlu0 1
        %1089 = vperm.xlu0 %1088, %v391
        %v1090 = vpop.permute.xlu0 %1089
        %1092 = vset.pattern.permute.xlu0 1
        %1093 = vperm.xlu0 %1092, %v392
        %v1094 = vpop.permute.xlu0 %1093
        %1096 = vset.pattern.permute.xlu0 1
        %1097 = vperm.xlu0 %1096, %v393
        %v1098 = vpop.permute.xlu0 %1097
        %1100 = vset.pattern.permute.xlu0 1
        %1101 = vperm.xlu0 %1100, %v394
        %v1102 = vpop.permute.xlu0 %1101
        %1104 = vset.pattern.permute.xlu0 1
        %1105 = vperm.xlu0 %1104, %v395
        %v1106 = vpop.permute.xlu0 %1105
        %1108 = vset.pattern.permute.xlu0 1
        %1109 = vperm.xlu0 %1108, %v396
        %v1110 = vpop.permute.xlu0 %1109
        %1112 = vset.pattern.permute.xlu0 1
        %1113 = vperm.xlu0 %1112, %v397
        %v1114 = vpop.permute.xlu0 %1113
        %1116 = vset.pattern.permute.xlu0 1
        %1117 = vperm.xlu0 %1116, %v398
        %v1118 = vpop.permute.xlu0 %1117
        %1120 = vset.pattern.permute.xlu0 1
        %1121 = vperm.xlu0 %1120, %v399
        %v1122 = vpop.permute.xlu0 %1121
        %v1124 = vlaneseq
        %v1125 = vshrl.u32 %v1124, 7
        %v1126 = vsub.s32 1, %v1125
        %v1127 = vrot.slane %v400, %v1126
        %v1128 = vlaneseq
        %v1129 = vshrl.u32 %v1128, 7
        %v1130 = vsub.s32 5, %v1129
        %v1131 = vrot.slane %v400, %v1130
        %v1134 = vlaneseq
        %v1135 = vshrl.u32 %v1134, 7
        %v1136 = vsub.s32 1, %v1135
        %v1137 = vrot.slane %v1127, %v1136
        %v1138 = vlaneseq
        %v1139 = vshrl.u32 %v1138, 7
        %v1140 = vsub.s32 1, %v1139
        %v1141 = vrot.slane %v1131, %v1140
        %v1142 = vmul.f32 %v870, %v1137
        %v1143 = vmul.f32 %v870, %v1141
        %v1144 = vmul.f32 %v874, %v1137
        %v1145 = vmul.f32 %v874, %v1141
        %v1146 = vmul.f32 %v878, %v1137
        %v1147 = vmul.f32 %v878, %v1141
        %v1148 = vmul.f32 %v882, %v1137
        %v1149 = vmul.f32 %v882, %v1141
        %v1150 = vmul.f32 %v886, %v1137
        %v1151 = vmul.f32 %v886, %v1141
        %v1152 = vmul.f32 %v890, %v1137
        %v1153 = vmul.f32 %v890, %v1141
        %v1154 = vmul.f32 %v894, %v1137
        %v1155 = vmul.f32 %v894, %v1141
        %v1156 = vmul.f32 %v898, %v1137
        %v1157 = vmul.f32 %v898, %v1141
        %v1158 = vmul.f32 %v902, %v1137
        %v1159 = vmul.f32 %v902, %v1141
        %v1160 = vmul.f32 %v906, %v1137
        %v1161 = vmul.f32 %v906, %v1141
        %v1162 = vmul.f32 %v910, %v1137
        %v1163 = vmul.f32 %v910, %v1141
        %v1164 = vmul.f32 %v914, %v1137
        %v1165 = vmul.f32 %v914, %v1141
        %v1166 = vmul.f32 %v918, %v1137
        %v1167 = vmul.f32 %v918, %v1141
        %v1168 = vmul.f32 %v922, %v1137
        %v1169 = vmul.f32 %v922, %v1141
        %v1170 = vmul.f32 %v926, %v1137
        %v1171 = vmul.f32 %v926, %v1141
        %v1172 = vmul.f32 %v930, %v1137
        %v1173 = vmul.f32 %v930, %v1141
        %v1174 = vmul.f32 %v934, %v1137
        %v1175 = vmul.f32 %v934, %v1141
        %v1176 = vmul.f32 %v938, %v1137
        %v1177 = vmul.f32 %v938, %v1141
        %v1178 = vmul.f32 %v942, %v1137
        %v1179 = vmul.f32 %v942, %v1141
        %v1180 = vmul.f32 %v946, %v1137
        %v1181 = vmul.f32 %v946, %v1141
        %v1182 = vmul.f32 %v950, %v1137
        %v1183 = vmul.f32 %v950, %v1141
        %v1184 = vmul.f32 %v954, %v1137
        %v1185 = vmul.f32 %v954, %v1141
        %v1186 = vmul.f32 %v958, %v1137
        %v1187 = vmul.f32 %v958, %v1141
        %v1188 = vmul.f32 %v962, %v1137
        %v1189 = vmul.f32 %v962, %v1141
        %v1190 = vmul.f32 %v966, %v1137
        %v1191 = vmul.f32 %v966, %v1141
        %v1192 = vmul.f32 %v970, %v1137
        %v1193 = vmul.f32 %v970, %v1141
        %v1194 = vmul.f32 %v974, %v1137
        %v1195 = vmul.f32 %v974, %v1141
        %v1196 = vmul.f32 %v978, %v1137
        %v1197 = vmul.f32 %v978, %v1141
        %v1198 = vmul.f32 %v982, %v1137
        %v1199 = vmul.f32 %v982, %v1141
        %v1200 = vmul.f32 %v986, %v1137
        %v1201 = vmul.f32 %v986, %v1141
        %v1202 = vmul.f32 %v990, %v1137
        %v1203 = vmul.f32 %v990, %v1141
        %v1204 = vmul.f32 %v994, %v1137
        %v1205 = vmul.f32 %v994, %v1141
        %v1206 = vmul.f32 %v998, %v1137
        %v1207 = vmul.f32 %v998, %v1141
        %v1208 = vmul.f32 %v1002, %v1137
        %v1209 = vmul.f32 %v1002, %v1141
        %v1210 = vmul.f32 %v1006, %v1137
        %v1211 = vmul.f32 %v1006, %v1141
        %v1212 = vmul.f32 %v1010, %v1137
        %v1213 = vmul.f32 %v1010, %v1141
        %v1214 = vmul.f32 %v1014, %v1137
        %v1215 = vmul.f32 %v1014, %v1141
        %v1216 = vmul.f32 %v1018, %v1137
        %v1217 = vmul.f32 %v1018, %v1141
        %v1218 = vmul.f32 %v1022, %v1137
        %v1219 = vmul.f32 %v1022, %v1141
        %v1220 = vmul.f32 %v1026, %v1137
        %v1221 = vmul.f32 %v1026, %v1141
        %v1222 = vmul.f32 %v1030, %v1137
        %v1223 = vmul.f32 %v1030, %v1141
        %v1224 = vmul.f32 %v1034, %v1137
        %v1225 = vmul.f32 %v1034, %v1141
        %v1226 = vmul.f32 %v1038, %v1137
        %v1227 = vmul.f32 %v1038, %v1141
        %v1228 = vmul.f32 %v1042, %v1137
        %v1229 = vmul.f32 %v1042, %v1141
        %v1230 = vmul.f32 %v1046, %v1137
        %v1231 = vmul.f32 %v1046, %v1141
        %v1232 = vmul.f32 %v1050, %v1137
        %v1233 = vmul.f32 %v1050, %v1141
        %v1234 = vmul.f32 %v1054, %v1137
        %v1235 = vmul.f32 %v1054, %v1141
        %v1236 = vmul.f32 %v1058, %v1137
        %v1237 = vmul.f32 %v1058, %v1141
        %v1238 = vmul.f32 %v1062, %v1137
        %v1239 = vmul.f32 %v1062, %v1141
        %v1240 = vmul.f32 %v1066, %v1137
        %v1241 = vmul.f32 %v1066, %v1141
        %v1242 = vmul.f32 %v1070, %v1137
        %v1243 = vmul.f32 %v1070, %v1141
        %v1244 = vmul.f32 %v1074, %v1137
        %v1245 = vmul.f32 %v1074, %v1141
        %v1246 = vmul.f32 %v1078, %v1137
        %v1247 = vmul.f32 %v1078, %v1141
        %v1248 = vmul.f32 %v1082, %v1137
        %v1249 = vmul.f32 %v1082, %v1141
        %v1250 = vmul.f32 %v1086, %v1137
        %v1251 = vmul.f32 %v1086, %v1141
        %v1252 = vmul.f32 %v1090, %v1137
        %v1253 = vmul.f32 %v1090, %v1141
        %v1254 = vmul.f32 %v1094, %v1137
        %v1255 = vmul.f32 %v1094, %v1141
        %v1256 = vmul.f32 %v1098, %v1137
        %v1257 = vmul.f32 %v1098, %v1141
        %v1258 = vmul.f32 %v1102, %v1137
        %v1259 = vmul.f32 %v1102, %v1141
        %v1260 = vmul.f32 %v1106, %v1137
        %v1261 = vmul.f32 %v1106, %v1141
        %v1262 = vmul.f32 %v1110, %v1137
        %v1263 = vmul.f32 %v1110, %v1141
        %v1264 = vmul.f32 %v1114, %v1137
        %v1265 = vmul.f32 %v1114, %v1141
        %v1266 = vmul.f32 %v1118, %v1137
        %v1267 = vmul.f32 %v1118, %v1141
        %v1268 = vmul.f32 %v1122, %v1137
        %v1269 = vmul.f32 %v1122, %v1141
        %v1270 = vadd.f32 %v740, %v1142
        %v1271 = vadd.f32 %v741, %v1143
        %v1272 = vadd.f32 %v742, %v1144
        %v1273 = vadd.f32 %v743, %v1145
        %v1274 = vadd.f32 %v744, %v1146
        %v1275 = vadd.f32 %v745, %v1147
        %v1276 = vadd.f32 %v746, %v1148
        %v1277 = vadd.f32 %v747, %v1149
        %v1278 = vadd.f32 %v748, %v1150
        %v1279 = vadd.f32 %v749, %v1151
        %v1280 = vadd.f32 %v750, %v1152
        %v1281 = vadd.f32 %v751, %v1153
        %v1282 = vadd.f32 %v752, %v1154
        %v1283 = vadd.f32 %v753, %v1155
        %v1284 = vadd.f32 %v754, %v1156
        %v1285 = vadd.f32 %v755, %v1157
        %v1286 = vadd.f32 %v756, %v1158
        %v1287 = vadd.f32 %v757, %v1159
        %v1288 = vadd.f32 %v758, %v1160
        %v1289 = vadd.f32 %v759, %v1161
        %v1290 = vadd.f32 %v760, %v1162
        %v1291 = vadd.f32 %v761, %v1163
        %v1292 = vadd.f32 %v762, %v1164
        %v1293 = vadd.f32 %v763, %v1165
        %v1294 = vadd.f32 %v764, %v1166
        %v1295 = vadd.f32 %v765, %v1167
        %v1296 = vadd.f32 %v766, %v1168
        %v1297 = vadd.f32 %v767, %v1169
        %v1298 = vadd.f32 %v768, %v1170
        %v1299 = vadd.f32 %v769, %v1171
        %v1300 = vadd.f32 %v770, %v1172
        %v1301 = vadd.f32 %v771, %v1173
        %v1302 = vadd.f32 %v772, %v1174
        %v1303 = vadd.f32 %v773, %v1175
        %v1304 = vadd.f32 %v774, %v1176
        %v1305 = vadd.f32 %v775, %v1177
        %v1306 = vadd.f32 %v776, %v1178
        %v1307 = vadd.f32 %v777, %v1179
        %v1308 = vadd.f32 %v778, %v1180
        %v1309 = vadd.f32 %v779, %v1181
        %v1310 = vadd.f32 %v780, %v1182
        %v1311 = vadd.f32 %v781, %v1183
        %v1312 = vadd.f32 %v782, %v1184
        %v1313 = vadd.f32 %v783, %v1185
        %v1314 = vadd.f32 %v784, %v1186
        %v1315 = vadd.f32 %v785, %v1187
        %v1316 = vadd.f32 %v786, %v1188
        %v1317 = vadd.f32 %v787, %v1189
        %v1318 = vadd.f32 %v788, %v1190
        %v1319 = vadd.f32 %v789, %v1191
        %v1320 = vadd.f32 %v790, %v1192
        %v1321 = vadd.f32 %v791, %v1193
        %v1322 = vadd.f32 %v792, %v1194
        %v1323 = vadd.f32 %v793, %v1195
        %v1324 = vadd.f32 %v794, %v1196
        %v1325 = vadd.f32 %v795, %v1197
        %v1326 = vadd.f32 %v796, %v1198
        %v1327 = vadd.f32 %v797, %v1199
        %v1328 = vadd.f32 %v798, %v1200
        %v1329 = vadd.f32 %v799, %v1201
        %v1330 = vadd.f32 %v800, %v1202
        %v1331 = vadd.f32 %v801, %v1203
        %v1332 = vadd.f32 %v802, %v1204
        %v1333 = vadd.f32 %v803, %v1205
        %v1334 = vadd.f32 %v804, %v1206
        %v1335 = vadd.f32 %v805, %v1207
        %v1336 = vadd.f32 %v806, %v1208
        %v1337 = vadd.f32 %v807, %v1209
        %v1338 = vadd.f32 %v808, %v1210
        %v1339 = vadd.f32 %v809, %v1211
        %v1340 = vadd.f32 %v810, %v1212
        %v1341 = vadd.f32 %v811, %v1213
        %v1342 = vadd.f32 %v812, %v1214
        %v1343 = vadd.f32 %v813, %v1215
        %v1344 = vadd.f32 %v814, %v1216
        %v1345 = vadd.f32 %v815, %v1217
        %v1346 = vadd.f32 %v816, %v1218
        %v1347 = vadd.f32 %v817, %v1219
        %v1348 = vadd.f32 %v818, %v1220
        %v1349 = vadd.f32 %v819, %v1221
        %v1350 = vadd.f32 %v820, %v1222
        %v1351 = vadd.f32 %v821, %v1223
        %v1352 = vadd.f32 %v822, %v1224
        %v1353 = vadd.f32 %v823, %v1225
        %v1354 = vadd.f32 %v824, %v1226
        %v1355 = vadd.f32 %v825, %v1227
        %v1356 = vadd.f32 %v826, %v1228
        %v1357 = vadd.f32 %v827, %v1229
        %v1358 = vadd.f32 %v828, %v1230
        %v1359 = vadd.f32 %v829, %v1231
        %v1360 = vadd.f32 %v830, %v1232
        %v1361 = vadd.f32 %v831, %v1233
        %v1362 = vadd.f32 %v832, %v1234
        %v1363 = vadd.f32 %v833, %v1235
        %v1364 = vadd.f32 %v834, %v1236
        %v1365 = vadd.f32 %v835, %v1237
        %v1366 = vadd.f32 %v836, %v1238
        %v1367 = vadd.f32 %v837, %v1239
        %v1368 = vadd.f32 %v838, %v1240
        %v1369 = vadd.f32 %v839, %v1241
        %v1370 = vadd.f32 %v840, %v1242
        %v1371 = vadd.f32 %v841, %v1243
        %v1372 = vadd.f32 %v842, %v1244
        %v1373 = vadd.f32 %v843, %v1245
        %v1374 = vadd.f32 %v844, %v1246
        %v1375 = vadd.f32 %v845, %v1247
        %v1376 = vadd.f32 %v846, %v1248
        %v1377 = vadd.f32 %v847, %v1249
        %v1378 = vadd.f32 %v848, %v1250
        %v1379 = vadd.f32 %v849, %v1251
        %v1380 = vadd.f32 %v850, %v1252
        %v1381 = vadd.f32 %v851, %v1253
        %v1382 = vadd.f32 %v852, %v1254
        %v1383 = vadd.f32 %v853, %v1255
        %v1384 = vadd.f32 %v854, %v1256
        %v1385 = vadd.f32 %v855, %v1257
        %v1386 = vadd.f32 %v856, %v1258
        %v1387 = vadd.f32 %v857, %v1259
        %v1388 = vadd.f32 %v858, %v1260
        %v1389 = vadd.f32 %v859, %v1261
        %v1390 = vadd.f32 %v860, %v1262
        %v1391 = vadd.f32 %v861, %v1263
        %v1392 = vadd.f32 %v862, %v1264
        %v1393 = vadd.f32 %v863, %v1265
        %v1394 = vadd.f32 %v864, %v1266
        %v1395 = vadd.f32 %v865, %v1267
        %v1396 = vadd.f32 %v866, %v1268
        %v1397 = vadd.f32 %v867, %v1269
        %1398 = vset.pattern.permute.xlu0 2
        %1399 = vperm.xlu0 %1398, %v336
        %v1400 = vpop.permute.xlu0 %1399
        %1402 = vset.pattern.permute.xlu0 2
        %1403 = vperm.xlu0 %1402, %v337
        %v1404 = vpop.permute.xlu0 %1403
        %1406 = vset.pattern.permute.xlu0 2
        %1407 = vperm.xlu0 %1406, %v338
        %v1408 = vpop.permute.xlu0 %1407
        %1410 = vset.pattern.permute.xlu0 2
        %1411 = vperm.xlu0 %1410, %v339
        %v1412 = vpop.permute.xlu0 %1411
        %1414 = vset.pattern.permute.xlu0 2
        %1415 = vperm.xlu0 %1414, %v340
        %v1416 = vpop.permute.xlu0 %1415
        %1418 = vset.pattern.permute.xlu0 2
        %1419 = vperm.xlu0 %1418, %v341
        %v1420 = vpop.permute.xlu0 %1419
        %1422 = vset.pattern.permute.xlu0 2
        %1423 = vperm.xlu0 %1422, %v342
        %v1424 = vpop.permute.xlu0 %1423
        %1426 = vset.pattern.permute.xlu0 2
        %1427 = vperm.xlu0 %1426, %v343
        %v1428 = vpop.permute.xlu0 %1427
        %1430 = vset.pattern.permute.xlu0 2
        %1431 = vperm.xlu0 %1430, %v344
        %v1432 = vpop.permute.xlu0 %1431
        %1434 = vset.pattern.permute.xlu0 2
        %1435 = vperm.xlu0 %1434, %v345
        %v1436 = vpop.permute.xlu0 %1435
        %1438 = vset.pattern.permute.xlu0 2
        %1439 = vperm.xlu0 %1438, %v346
        %v1440 = vpop.permute.xlu0 %1439
        %1442 = vset.pattern.permute.xlu0 2
        %1443 = vperm.xlu0 %1442, %v347
        %v1444 = vpop.permute.xlu0 %1443
        %1446 = vset.pattern.permute.xlu0 2
        %1447 = vperm.xlu0 %1446, %v348
        %v1448 = vpop.permute.xlu0 %1447
        %1450 = vset.pattern.permute.xlu0 2
        %1451 = vperm.xlu0 %1450, %v349
        %v1452 = vpop.permute.xlu0 %1451
        %1454 = vset.pattern.permute.xlu0 2
        %1455 = vperm.xlu0 %1454, %v350
        %v1456 = vpop.permute.xlu0 %1455
        %1458 = vset.pattern.permute.xlu0 2
        %1459 = vperm.xlu0 %1458, %v351
        %v1460 = vpop.permute.xlu0 %1459
        %1462 = vset.pattern.permute.xlu0 2
        %1463 = vperm.xlu0 %1462, %v352
        %v1464 = vpop.permute.xlu0 %1463
        %1466 = vset.pattern.permute.xlu0 2
        %1467 = vperm.xlu0 %1466, %v353
        %v1468 = vpop.permute.xlu0 %1467
        %1470 = vset.pattern.permute.xlu0 2
        %1471 = vperm.xlu0 %1470, %v354
        %v1472 = vpop.permute.xlu0 %1471
        %1474 = vset.pattern.permute.xlu0 2
        %1475 = vperm.xlu0 %1474, %v355
        %v1476 = vpop.permute.xlu0 %1475
        %1478 = vset.pattern.permute.xlu0 2
        %1479 = vperm.xlu0 %1478, %v356
        %v1480 = vpop.permute.xlu0 %1479
        %1482 = vset.pattern.permute.xlu0 2
        %1483 = vperm.xlu0 %1482, %v357
        %v1484 = vpop.permute.xlu0 %1483
        %1486 = vset.pattern.permute.xlu0 2
        %1487 = vperm.xlu0 %1486, %v358
        %v1488 = vpop.permute.xlu0 %1487
        %1490 = vset.pattern.permute.xlu0 2
        %1491 = vperm.xlu0 %1490, %v359
        %v1492 = vpop.permute.xlu0 %1491
        %1494 = vset.pattern.permute.xlu0 2
        %1495 = vperm.xlu0 %1494, %v360
        %v1496 = vpop.permute.xlu0 %1495
        %1498 = vset.pattern.permute.xlu0 2
        %1499 = vperm.xlu0 %1498, %v361
        %v1500 = vpop.permute.xlu0 %1499
        %1502 = vset.pattern.permute.xlu0 2
        %1503 = vperm.xlu0 %1502, %v362
        %v1504 = vpop.permute.xlu0 %1503
        %1506 = vset.pattern.permute.xlu0 2
        %1507 = vperm.xlu0 %1506, %v363
        %v1508 = vpop.permute.xlu0 %1507
        %1510 = vset.pattern.permute.xlu0 2
        %1511 = vperm.xlu0 %1510, %v364
        %v1512 = vpop.permute.xlu0 %1511
        %1514 = vset.pattern.permute.xlu0 2
        %1515 = vperm.xlu0 %1514, %v365
        %v1516 = vpop.permute.xlu0 %1515
        %1518 = vset.pattern.permute.xlu0 2
        %1519 = vperm.xlu0 %1518, %v366
        %v1520 = vpop.permute.xlu0 %1519
        %1522 = vset.pattern.permute.xlu0 2
        %1523 = vperm.xlu0 %1522, %v367
        %v1524 = vpop.permute.xlu0 %1523
        %1526 = vset.pattern.permute.xlu0 2
        %1527 = vperm.xlu0 %1526, %v368
        %v1528 = vpop.permute.xlu0 %1527
        %1530 = vset.pattern.permute.xlu0 2
        %1531 = vperm.xlu0 %1530, %v369
        %v1532 = vpop.permute.xlu0 %1531
        %1534 = vset.pattern.permute.xlu0 2
        %1535 = vperm.xlu0 %1534, %v370
        %v1536 = vpop.permute.xlu0 %1535
        %1538 = vset.pattern.permute.xlu0 2
        %1539 = vperm.xlu0 %1538, %v371
        %v1540 = vpop.permute.xlu0 %1539
        %1542 = vset.pattern.permute.xlu0 2
        %1543 = vperm.xlu0 %1542, %v372
        %v1544 = vpop.permute.xlu0 %1543
        %1546 = vset.pattern.permute.xlu0 2
        %1547 = vperm.xlu0 %1546, %v373
        %v1548 = vpop.permute.xlu0 %1547
        %1550 = vset.pattern.permute.xlu0 2
        %1551 = vperm.xlu0 %1550, %v374
        %v1552 = vpop.permute.xlu0 %1551
        %1554 = vset.pattern.permute.xlu0 2
        %1555 = vperm.xlu0 %1554, %v375
        %v1556 = vpop.permute.xlu0 %1555
        %1558 = vset.pattern.permute.xlu0 2
        %1559 = vperm.xlu0 %1558, %v376
        %v1560 = vpop.permute.xlu0 %1559
        %1562 = vset.pattern.permute.xlu0 2
        %1563 = vperm.xlu0 %1562, %v377
        %v1564 = vpop.permute.xlu0 %1563
        %1566 = vset.pattern.permute.xlu0 2
        %1567 = vperm.xlu0 %1566, %v378
        %v1568 = vpop.permute.xlu0 %1567
        %1570 = vset.pattern.permute.xlu0 2
        %1571 = vperm.xlu0 %1570, %v379
        %v1572 = vpop.permute.xlu0 %1571
        %1574 = vset.pattern.permute.xlu0 2
        %1575 = vperm.xlu0 %1574, %v380
        %v1576 = vpop.permute.xlu0 %1575
        %1578 = vset.pattern.permute.xlu0 2
        %1579 = vperm.xlu0 %1578, %v381
        %v1580 = vpop.permute.xlu0 %1579
        %1582 = vset.pattern.permute.xlu0 2
        %1583 = vperm.xlu0 %1582, %v382
        %v1584 = vpop.permute.xlu0 %1583
        %1586 = vset.pattern.permute.xlu0 2
        %1587 = vperm.xlu0 %1586, %v383
        %v1588 = vpop.permute.xlu0 %1587
        %1590 = vset.pattern.permute.xlu0 2
        %1591 = vperm.xlu0 %1590, %v384
        %v1592 = vpop.permute.xlu0 %1591
        %1594 = vset.pattern.permute.xlu0 2
        %1595 = vperm.xlu0 %1594, %v385
        %v1596 = vpop.permute.xlu0 %1595
        %1598 = vset.pattern.permute.xlu0 2
        %1599 = vperm.xlu0 %1598, %v386
        %v1600 = vpop.permute.xlu0 %1599
        %1602 = vset.pattern.permute.xlu0 2
        %1603 = vperm.xlu0 %1602, %v387
        %v1604 = vpop.permute.xlu0 %1603
        %1606 = vset.pattern.permute.xlu0 2
        %1607 = vperm.xlu0 %1606, %v388
        %v1608 = vpop.permute.xlu0 %1607
        %1610 = vset.pattern.permute.xlu0 2
        %1611 = vperm.xlu0 %1610, %v389
        %v1612 = vpop.permute.xlu0 %1611
        %1614 = vset.pattern.permute.xlu0 2
        %1615 = vperm.xlu0 %1614, %v390
        %v1616 = vpop.permute.xlu0 %1615
        %1618 = vset.pattern.permute.xlu0 2
        %1619 = vperm.xlu0 %1618, %v391
        %v1620 = vpop.permute.xlu0 %1619
        %1622 = vset.pattern.permute.xlu0 2
        %1623 = vperm.xlu0 %1622, %v392
        %v1624 = vpop.permute.xlu0 %1623
        %1626 = vset.pattern.permute.xlu0 2
        %1627 = vperm.xlu0 %1626, %v393
        %v1628 = vpop.permute.xlu0 %1627
        %1630 = vset.pattern.permute.xlu0 2
        %1631 = vperm.xlu0 %1630, %v394
        %v1632 = vpop.permute.xlu0 %1631
        %1634 = vset.pattern.permute.xlu0 2
        %1635 = vperm.xlu0 %1634, %v395
        %v1636 = vpop.permute.xlu0 %1635
        %1638 = vset.pattern.permute.xlu0 2
        %1639 = vperm.xlu0 %1638, %v396
        %v1640 = vpop.permute.xlu0 %1639
        %1642 = vset.pattern.permute.xlu0 2
        %1643 = vperm.xlu0 %1642, %v397
        %v1644 = vpop.permute.xlu0 %1643
        %1646 = vset.pattern.permute.xlu0 2
        %1647 = vperm.xlu0 %1646, %v398
        %v1648 = vpop.permute.xlu0 %1647
        %1650 = vset.pattern.permute.xlu0 2
        %1651 = vperm.xlu0 %1650, %v399
        %v1652 = vpop.permute.xlu0 %1651
        %v1654 = vlaneseq
        %v1655 = vshrl.u32 %v1654, 7
        %v1656 = vsub.s32 2, %v1655
        %v1657 = vrot.slane %v400, %v1656
        %v1658 = vlaneseq
        %v1659 = vshrl.u32 %v1658, 7
        %v1660 = vsub.s32 6, %v1659
        %v1661 = vrot.slane %v400, %v1660
        %v1664 = vlaneseq
        %v1665 = vshrl.u32 %v1664, 7
        %v1666 = vsub.s32 2, %v1665
        %v1667 = vrot.slane %v1657, %v1666
        %v1668 = vlaneseq
        %v1669 = vshrl.u32 %v1668, 7
        %v1670 = vsub.s32 2, %v1669
        %v1671 = vrot.slane %v1661, %v1670
        %v1672 = vmul.f32 %v1400, %v1667
        %v1673 = vmul.f32 %v1400, %v1671
        %v1674 = vmul.f32 %v1404, %v1667
        %v1675 = vmul.f32 %v1404, %v1671
        %v1676 = vmul.f32 %v1408, %v1667
        %v1677 = vmul.f32 %v1408, %v1671
        %v1678 = vmul.f32 %v1412, %v1667
        %v1679 = vmul.f32 %v1412, %v1671
        %v1680 = vmul.f32 %v1416, %v1667
        %v1681 = vmul.f32 %v1416, %v1671
        %v1682 = vmul.f32 %v1420, %v1667
        %v1683 = vmul.f32 %v1420, %v1671
        %v1684 = vmul.f32 %v1424, %v1667
        %v1685 = vmul.f32 %v1424, %v1671
        %v1686 = vmul.f32 %v1428, %v1667
        %v1687 = vmul.f32 %v1428, %v1671
        %v1688 = vmul.f32 %v1432, %v1667
        %v1689 = vmul.f32 %v1432, %v1671
        %v1690 = vmul.f32 %v1436, %v1667
        %v1691 = vmul.f32 %v1436, %v1671
        %v1692 = vmul.f32 %v1440, %v1667
        %v1693 = vmul.f32 %v1440, %v1671
        %v1694 = vmul.f32 %v1444, %v1667
        %v1695 = vmul.f32 %v1444, %v1671
        %v1696 = vmul.f32 %v1448, %v1667
        %v1697 = vmul.f32 %v1448, %v1671
        %v1698 = vmul.f32 %v1452, %v1667
        %v1699 = vmul.f32 %v1452, %v1671
        %v1700 = vmul.f32 %v1456, %v1667
        %v1701 = vmul.f32 %v1456, %v1671
        %v1702 = vmul.f32 %v1460, %v1667
        %v1703 = vmul.f32 %v1460, %v1671
        %v1704 = vmul.f32 %v1464, %v1667
        %v1705 = vmul.f32 %v1464, %v1671
        %v1706 = vmul.f32 %v1468, %v1667
        %v1707 = vmul.f32 %v1468, %v1671
        %v1708 = vmul.f32 %v1472, %v1667
        %v1709 = vmul.f32 %v1472, %v1671
        %v1710 = vmul.f32 %v1476, %v1667
        %v1711 = vmul.f32 %v1476, %v1671
        %v1712 = vmul.f32 %v1480, %v1667
        %v1713 = vmul.f32 %v1480, %v1671
        %v1714 = vmul.f32 %v1484, %v1667
        %v1715 = vmul.f32 %v1484, %v1671
        %v1716 = vmul.f32 %v1488, %v1667
        %v1717 = vmul.f32 %v1488, %v1671
        %v1718 = vmul.f32 %v1492, %v1667
        %v1719 = vmul.f32 %v1492, %v1671
        %v1720 = vmul.f32 %v1496, %v1667
        %v1721 = vmul.f32 %v1496, %v1671
        %v1722 = vmul.f32 %v1500, %v1667
        %v1723 = vmul.f32 %v1500, %v1671
        %v1724 = vmul.f32 %v1504, %v1667
        %v1725 = vmul.f32 %v1504, %v1671
        %v1726 = vmul.f32 %v1508, %v1667
        %v1727 = vmul.f32 %v1508, %v1671
        %v1728 = vmul.f32 %v1512, %v1667
        %v1729 = vmul.f32 %v1512, %v1671
        %v1730 = vmul.f32 %v1516, %v1667
        %v1731 = vmul.f32 %v1516, %v1671
        %v1732 = vmul.f32 %v1520, %v1667
        %v1733 = vmul.f32 %v1520, %v1671
        %v1734 = vmul.f32 %v1524, %v1667
        %v1735 = vmul.f32 %v1524, %v1671
        %v1736 = vmul.f32 %v1528, %v1667
        %v1737 = vmul.f32 %v1528, %v1671
        %v1738 = vmul.f32 %v1532, %v1667
        %v1739 = vmul.f32 %v1532, %v1671
        %v1740 = vmul.f32 %v1536, %v1667
        %v1741 = vmul.f32 %v1536, %v1671
        %v1742 = vmul.f32 %v1540, %v1667
        %v1743 = vmul.f32 %v1540, %v1671
        %v1744 = vmul.f32 %v1544, %v1667
        %v1745 = vmul.f32 %v1544, %v1671
        %v1746 = vmul.f32 %v1548, %v1667
        %v1747 = vmul.f32 %v1548, %v1671
        %v1748 = vmul.f32 %v1552, %v1667
        %v1749 = vmul.f32 %v1552, %v1671
        %v1750 = vmul.f32 %v1556, %v1667
        %v1751 = vmul.f32 %v1556, %v1671
        %v1752 = vmul.f32 %v1560, %v1667
        %v1753 = vmul.f32 %v1560, %v1671
        %v1754 = vmul.f32 %v1564, %v1667
        %v1755 = vmul.f32 %v1564, %v1671
        %v1756 = vmul.f32 %v1568, %v1667
        %v1757 = vmul.f32 %v1568, %v1671
        %v1758 = vmul.f32 %v1572, %v1667
        %v1759 = vmul.f32 %v1572, %v1671
        %v1760 = vmul.f32 %v1576, %v1667
        %v1761 = vmul.f32 %v1576, %v1671
        %v1762 = vmul.f32 %v1580, %v1667
        %v1763 = vmul.f32 %v1580, %v1671
        %v1764 = vmul.f32 %v1584, %v1667
        %v1765 = vmul.f32 %v1584, %v1671
        %v1766 = vmul.f32 %v1588, %v1667
        %v1767 = vmul.f32 %v1588, %v1671
        %v1768 = vmul.f32 %v1592, %v1667
        %v1769 = vmul.f32 %v1592, %v1671
        %v1770 = vmul.f32 %v1596, %v1667
        %v1771 = vmul.f32 %v1596, %v1671
        %v1772 = vmul.f32 %v1600, %v1667
        %v1773 = vmul.f32 %v1600, %v1671
        %v1774 = vmul.f32 %v1604, %v1667
        %v1775 = vmul.f32 %v1604, %v1671
        %v1776 = vmul.f32 %v1608, %v1667
        %v1777 = vmul.f32 %v1608, %v1671
        %v1778 = vmul.f32 %v1612, %v1667
        %v1779 = vmul.f32 %v1612, %v1671
        %v1780 = vmul.f32 %v1616, %v1667
        %v1781 = vmul.f32 %v1616, %v1671
        %v1782 = vmul.f32 %v1620, %v1667
        %v1783 = vmul.f32 %v1620, %v1671
        %v1784 = vmul.f32 %v1624, %v1667
        %v1785 = vmul.f32 %v1624, %v1671
        %v1786 = vmul.f32 %v1628, %v1667
        %v1787 = vmul.f32 %v1628, %v1671
        %v1788 = vmul.f32 %v1632, %v1667
        %v1789 = vmul.f32 %v1632, %v1671
        %v1790 = vmul.f32 %v1636, %v1667
        %v1791 = vmul.f32 %v1636, %v1671
        %v1792 = vmul.f32 %v1640, %v1667
        %v1793 = vmul.f32 %v1640, %v1671
        %v1794 = vmul.f32 %v1644, %v1667
        %v1795 = vmul.f32 %v1644, %v1671
        %v1796 = vmul.f32 %v1648, %v1667
        %v1797 = vmul.f32 %v1648, %v1671
        %v1798 = vmul.f32 %v1652, %v1667
        %v1799 = vmul.f32 %v1652, %v1671
        %v1800 = vadd.f32 %v1270, %v1672
        %v1801 = vadd.f32 %v1271, %v1673
        %v1802 = vadd.f32 %v1272, %v1674
        %v1803 = vadd.f32 %v1273, %v1675
        %v1804 = vadd.f32 %v1274, %v1676
        %v1805 = vadd.f32 %v1275, %v1677
        %v1806 = vadd.f32 %v1276, %v1678
        %v1807 = vadd.f32 %v1277, %v1679
        %v1808 = vadd.f32 %v1278, %v1680
        %v1809 = vadd.f32 %v1279, %v1681
        %v1810 = vadd.f32 %v1280, %v1682
        %v1811 = vadd.f32 %v1281, %v1683
        %v1812 = vadd.f32 %v1282, %v1684
        %v1813 = vadd.f32 %v1283, %v1685
        %v1814 = vadd.f32 %v1284, %v1686
        %v1815 = vadd.f32 %v1285, %v1687
        %v1816 = vadd.f32 %v1286, %v1688
        %v1817 = vadd.f32 %v1287, %v1689
        %v1818 = vadd.f32 %v1288, %v1690
        %v1819 = vadd.f32 %v1289, %v1691
        %v1820 = vadd.f32 %v1290, %v1692
        %v1821 = vadd.f32 %v1291, %v1693
        %v1822 = vadd.f32 %v1292, %v1694
        %v1823 = vadd.f32 %v1293, %v1695
        %v1824 = vadd.f32 %v1294, %v1696
        %v1825 = vadd.f32 %v1295, %v1697
        %v1826 = vadd.f32 %v1296, %v1698
        %v1827 = vadd.f32 %v1297, %v1699
        %v1828 = vadd.f32 %v1298, %v1700
        %v1829 = vadd.f32 %v1299, %v1701
        %v1830 = vadd.f32 %v1300, %v1702
        %v1831 = vadd.f32 %v1301, %v1703
        %v1832 = vadd.f32 %v1302, %v1704
        %v1833 = vadd.f32 %v1303, %v1705
        %v1834 = vadd.f32 %v1304, %v1706
        %v1835 = vadd.f32 %v1305, %v1707
        %v1836 = vadd.f32 %v1306, %v1708
        %v1837 = vadd.f32 %v1307, %v1709
        %v1838 = vadd.f32 %v1308, %v1710
        %v1839 = vadd.f32 %v1309, %v1711
        %v1840 = vadd.f32 %v1310, %v1712
        %v1841 = vadd.f32 %v1311, %v1713
        %v1842 = vadd.f32 %v1312, %v1714
        %v1843 = vadd.f32 %v1313, %v1715
        %v1844 = vadd.f32 %v1314, %v1716
        %v1845 = vadd.f32 %v1315, %v1717
        %v1846 = vadd.f32 %v1316, %v1718
        %v1847 = vadd.f32 %v1317, %v1719
        %v1848 = vadd.f32 %v1318, %v1720
        %v1849 = vadd.f32 %v1319, %v1721
        %v1850 = vadd.f32 %v1320, %v1722
        %v1851 = vadd.f32 %v1321, %v1723
        %v1852 = vadd.f32 %v1322, %v1724
        %v1853 = vadd.f32 %v1323, %v1725
        %v1854 = vadd.f32 %v1324, %v1726
        %v1855 = vadd.f32 %v1325, %v1727
        %v1856 = vadd.f32 %v1326, %v1728
        %v1857 = vadd.f32 %v1327, %v1729
        %v1858 = vadd.f32 %v1328, %v1730
        %v1859 = vadd.f32 %v1329, %v1731
        %v1860 = vadd.f32 %v1330, %v1732
        %v1861 = vadd.f32 %v1331, %v1733
        %v1862 = vadd.f32 %v1332, %v1734
        %v1863 = vadd.f32 %v1333, %v1735
        %v1864 = vadd.f32 %v1334, %v1736
        %v1865 = vadd.f32 %v1335, %v1737
        %v1866 = vadd.f32 %v1336, %v1738
        %v1867 = vadd.f32 %v1337, %v1739
        %v1868 = vadd.f32 %v1338, %v1740
        %v1869 = vadd.f32 %v1339, %v1741
        %v1870 = vadd.f32 %v1340, %v1742
        %v1871 = vadd.f32 %v1341, %v1743
        %v1872 = vadd.f32 %v1342, %v1744
        %v1873 = vadd.f32 %v1343, %v1745
        %v1874 = vadd.f32 %v1344, %v1746
        %v1875 = vadd.f32 %v1345, %v1747
        %v1876 = vadd.f32 %v1346, %v1748
        %v1877 = vadd.f32 %v1347, %v1749
        %v1878 = vadd.f32 %v1348, %v1750
        %v1879 = vadd.f32 %v1349, %v1751
        %v1880 = vadd.f32 %v1350, %v1752
        %v1881 = vadd.f32 %v1351, %v1753
        %v1882 = vadd.f32 %v1352, %v1754
        %v1883 = vadd.f32 %v1353, %v1755
        %v1884 = vadd.f32 %v1354, %v1756
        %v1885 = vadd.f32 %v1355, %v1757
        %v1886 = vadd.f32 %v1356, %v1758
        %v1887 = vadd.f32 %v1357, %v1759
        %v1888 = vadd.f32 %v1358, %v1760
        %v1889 = vadd.f32 %v1359, %v1761
        %v1890 = vadd.f32 %v1360, %v1762
        %v1891 = vadd.f32 %v1361, %v1763
        %v1892 = vadd.f32 %v1362, %v1764
        %v1893 = vadd.f32 %v1363, %v1765
        %v1894 = vadd.f32 %v1364, %v1766
        %v1895 = vadd.f32 %v1365, %v1767
        %v1896 = vadd.f32 %v1366, %v1768
        %v1897 = vadd.f32 %v1367, %v1769
        %v1898 = vadd.f32 %v1368, %v1770
        %v1899 = vadd.f32 %v1369, %v1771
        %v1900 = vadd.f32 %v1370, %v1772
        %v1901 = vadd.f32 %v1371, %v1773
        %v1902 = vadd.f32 %v1372, %v1774
        %v1903 = vadd.f32 %v1373, %v1775
        %v1904 = vadd.f32 %v1374, %v1776
        %v1905 = vadd.f32 %v1375, %v1777
        %v1906 = vadd.f32 %v1376, %v1778
        %v1907 = vadd.f32 %v1377, %v1779
        %v1908 = vadd.f32 %v1378, %v1780
        %v1909 = vadd.f32 %v1379, %v1781
        %v1910 = vadd.f32 %v1380, %v1782
        %v1911 = vadd.f32 %v1381, %v1783
        %v1912 = vadd.f32 %v1382, %v1784
        %v1913 = vadd.f32 %v1383, %v1785
        %v1914 = vadd.f32 %v1384, %v1786
        %v1915 = vadd.f32 %v1385, %v1787
        %v1916 = vadd.f32 %v1386, %v1788
        %v1917 = vadd.f32 %v1387, %v1789
        %v1918 = vadd.f32 %v1388, %v1790
        %v1919 = vadd.f32 %v1389, %v1791
        %v1920 = vadd.f32 %v1390, %v1792
        %v1921 = vadd.f32 %v1391, %v1793
        %v1922 = vadd.f32 %v1392, %v1794
        %v1923 = vadd.f32 %v1393, %v1795
        %v1924 = vadd.f32 %v1394, %v1796
        %v1925 = vadd.f32 %v1395, %v1797
        %v1926 = vadd.f32 %v1396, %v1798
        %v1927 = vadd.f32 %v1397, %v1799
        %1928 = vset.pattern.permute.xlu0 3
        %1929 = vperm.xlu0 %1928, %v336
        %v1930 = vpop.permute.xlu0 %1929
        %1932 = vset.pattern.permute.xlu0 3
        %1933 = vperm.xlu0 %1932, %v337
        %v1934 = vpop.permute.xlu0 %1933
        %1936 = vset.pattern.permute.xlu0 3
        %1937 = vperm.xlu0 %1936, %v338
        %v1938 = vpop.permute.xlu0 %1937
        %1940 = vset.pattern.permute.xlu0 3
        %1941 = vperm.xlu0 %1940, %v339
        %v1942 = vpop.permute.xlu0 %1941
        %1944 = vset.pattern.permute.xlu0 3
        %1945 = vperm.xlu0 %1944, %v340
        %v1946 = vpop.permute.xlu0 %1945
        %1948 = vset.pattern.permute.xlu0 3
        %1949 = vperm.xlu0 %1948, %v341
        %v1950 = vpop.permute.xlu0 %1949
        %1952 = vset.pattern.permute.xlu0 3
        %1953 = vperm.xlu0 %1952, %v342
        %v1954 = vpop.permute.xlu0 %1953
        %1956 = vset.pattern.permute.xlu0 3
        %1957 = vperm.xlu0 %1956, %v343
        %v1958 = vpop.permute.xlu0 %1957
        %1960 = vset.pattern.permute.xlu0 3
        %1961 = vperm.xlu0 %1960, %v344
        %v1962 = vpop.permute.xlu0 %1961
        %1964 = vset.pattern.permute.xlu0 3
        %1965 = vperm.xlu0 %1964, %v345
        %v1966 = vpop.permute.xlu0 %1965
        %1968 = vset.pattern.permute.xlu0 3
        %1969 = vperm.xlu0 %1968, %v346
        %v1970 = vpop.permute.xlu0 %1969
        %1972 = vset.pattern.permute.xlu0 3
        %1973 = vperm.xlu0 %1972, %v347
        %v1974 = vpop.permute.xlu0 %1973
        %1976 = vset.pattern.permute.xlu0 3
        %1977 = vperm.xlu0 %1976, %v348
        %v1978 = vpop.permute.xlu0 %1977
        %1980 = vset.pattern.permute.xlu0 3
        %1981 = vperm.xlu0 %1980, %v349
        %v1982 = vpop.permute.xlu0 %1981
        %1984 = vset.pattern.permute.xlu0 3
        %1985 = vperm.xlu0 %1984, %v350
        %v1986 = vpop.permute.xlu0 %1985
        %1988 = vset.pattern.permute.xlu0 3
        %1989 = vperm.xlu0 %1988, %v351
        %v1990 = vpop.permute.xlu0 %1989
        %1992 = vset.pattern.permute.xlu0 3
        %1993 = vperm.xlu0 %1992, %v352
        %v1994 = vpop.permute.xlu0 %1993
        %1996 = vset.pattern.permute.xlu0 3
        %1997 = vperm.xlu0 %1996, %v353
        %v1998 = vpop.permute.xlu0 %1997
        %2000 = vset.pattern.permute.xlu0 3
        %2001 = vperm.xlu0 %2000, %v354
        %v2002 = vpop.permute.xlu0 %2001
        %2004 = vset.pattern.permute.xlu0 3
        %2005 = vperm.xlu0 %2004, %v355
        %v2006 = vpop.permute.xlu0 %2005
        %2008 = vset.pattern.permute.xlu0 3
        %2009 = vperm.xlu0 %2008, %v356
        %v2010 = vpop.permute.xlu0 %2009
        %2012 = vset.pattern.permute.xlu0 3
        %2013 = vperm.xlu0 %2012, %v357
        %v2014 = vpop.permute.xlu0 %2013
        %2016 = vset.pattern.permute.xlu0 3
        %2017 = vperm.xlu0 %2016, %v358
        %v2018 = vpop.permute.xlu0 %2017
        %2020 = vset.pattern.permute.xlu0 3
        %2021 = vperm.xlu0 %2020, %v359
        %v2022 = vpop.permute.xlu0 %2021
        %2024 = vset.pattern.permute.xlu0 3
        %2025 = vperm.xlu0 %2024, %v360
        %v2026 = vpop.permute.xlu0 %2025
        %2028 = vset.pattern.permute.xlu0 3
        %2029 = vperm.xlu0 %2028, %v361
        %v2030 = vpop.permute.xlu0 %2029
        %2032 = vset.pattern.permute.xlu0 3
        %2033 = vperm.xlu0 %2032, %v362
        %v2034 = vpop.permute.xlu0 %2033
        %2036 = vset.pattern.permute.xlu0 3
        %2037 = vperm.xlu0 %2036, %v363
        %v2038 = vpop.permute.xlu0 %2037
        %2040 = vset.pattern.permute.xlu0 3
        %2041 = vperm.xlu0 %2040, %v364
        %v2042 = vpop.permute.xlu0 %2041
        %2044 = vset.pattern.permute.xlu0 3
        %2045 = vperm.xlu0 %2044, %v365
        %v2046 = vpop.permute.xlu0 %2045
        %2048 = vset.pattern.permute.xlu0 3
        %2049 = vperm.xlu0 %2048, %v366
        %v2050 = vpop.permute.xlu0 %2049
        %2052 = vset.pattern.permute.xlu0 3
        %2053 = vperm.xlu0 %2052, %v367
        %v2054 = vpop.permute.xlu0 %2053
        %2056 = vset.pattern.permute.xlu0 3
        %2057 = vperm.xlu0 %2056, %v368
        %v2058 = vpop.permute.xlu0 %2057
        %2060 = vset.pattern.permute.xlu0 3
        %2061 = vperm.xlu0 %2060, %v369
        %v2062 = vpop.permute.xlu0 %2061
        %2064 = vset.pattern.permute.xlu0 3
        %2065 = vperm.xlu0 %2064, %v370
        %v2066 = vpop.permute.xlu0 %2065
        %2068 = vset.pattern.permute.xlu0 3
        %2069 = vperm.xlu0 %2068, %v371
        %v2070 = vpop.permute.xlu0 %2069
        %2072 = vset.pattern.permute.xlu0 3
        %2073 = vperm.xlu0 %2072, %v372
        %v2074 = vpop.permute.xlu0 %2073
        %2076 = vset.pattern.permute.xlu0 3
        %2077 = vperm.xlu0 %2076, %v373
        %v2078 = vpop.permute.xlu0 %2077
        %2080 = vset.pattern.permute.xlu0 3
        %2081 = vperm.xlu0 %2080, %v374
        %v2082 = vpop.permute.xlu0 %2081
        %2084 = vset.pattern.permute.xlu0 3
        %2085 = vperm.xlu0 %2084, %v375
        %v2086 = vpop.permute.xlu0 %2085
        %2088 = vset.pattern.permute.xlu0 3
        %2089 = vperm.xlu0 %2088, %v376
        %v2090 = vpop.permute.xlu0 %2089
        %2092 = vset.pattern.permute.xlu0 3
        %2093 = vperm.xlu0 %2092, %v377
        %v2094 = vpop.permute.xlu0 %2093
        %2096 = vset.pattern.permute.xlu0 3
        %2097 = vperm.xlu0 %2096, %v378
        %v2098 = vpop.permute.xlu0 %2097
        %2100 = vset.pattern.permute.xlu0 3
        %2101 = vperm.xlu0 %2100, %v379
        %v2102 = vpop.permute.xlu0 %2101
        %2104 = vset.pattern.permute.xlu0 3
        %2105 = vperm.xlu0 %2104, %v380
        %v2106 = vpop.permute.xlu0 %2105
        %2108 = vset.pattern.permute.xlu0 3
        %2109 = vperm.xlu0 %2108, %v381
        %v2110 = vpop.permute.xlu0 %2109
        %2112 = vset.pattern.permute.xlu0 3
        %2113 = vperm.xlu0 %2112, %v382
        %v2114 = vpop.permute.xlu0 %2113
        %2116 = vset.pattern.permute.xlu0 3
        %2117 = vperm.xlu0 %2116, %v383
        %v2118 = vpop.permute.xlu0 %2117
        %2120 = vset.pattern.permute.xlu0 3
        %2121 = vperm.xlu0 %2120, %v384
        %v2122 = vpop.permute.xlu0 %2121
        %2124 = vset.pattern.permute.xlu0 3
        %2125 = vperm.xlu0 %2124, %v385
        %v2126 = vpop.permute.xlu0 %2125
        %2128 = vset.pattern.permute.xlu0 3
        %2129 = vperm.xlu0 %2128, %v386
        %v2130 = vpop.permute.xlu0 %2129
        %2132 = vset.pattern.permute.xlu0 3
        %2133 = vperm.xlu0 %2132, %v387
        %v2134 = vpop.permute.xlu0 %2133
        %2136 = vset.pattern.permute.xlu0 3
        %2137 = vperm.xlu0 %2136, %v388
        %v2138 = vpop.permute.xlu0 %2137
        %2140 = vset.pattern.permute.xlu0 3
        %2141 = vperm.xlu0 %2140, %v389
        %v2142 = vpop.permute.xlu0 %2141
        %2144 = vset.pattern.permute.xlu0 3
        %2145 = vperm.xlu0 %2144, %v390
        %v2146 = vpop.permute.xlu0 %2145
        %2148 = vset.pattern.permute.xlu0 3
        %2149 = vperm.xlu0 %2148, %v391
        %v2150 = vpop.permute.xlu0 %2149
        %2152 = vset.pattern.permute.xlu0 3
        %2153 = vperm.xlu0 %2152, %v392
        %v2154 = vpop.permute.xlu0 %2153
        %2156 = vset.pattern.permute.xlu0 3
        %2157 = vperm.xlu0 %2156, %v393
        %v2158 = vpop.permute.xlu0 %2157
        %2160 = vset.pattern.permute.xlu0 3
        %2161 = vperm.xlu0 %2160, %v394
        %v2162 = vpop.permute.xlu0 %2161
        %2164 = vset.pattern.permute.xlu0 3
        %2165 = vperm.xlu0 %2164, %v395
        %v2166 = vpop.permute.xlu0 %2165
        %2168 = vset.pattern.permute.xlu0 3
        %2169 = vperm.xlu0 %2168, %v396
        %v2170 = vpop.permute.xlu0 %2169
        %2172 = vset.pattern.permute.xlu0 3
        %2173 = vperm.xlu0 %2172, %v397
        %v2174 = vpop.permute.xlu0 %2173
        %2176 = vset.pattern.permute.xlu0 3
        %2177 = vperm.xlu0 %2176, %v398
        %v2178 = vpop.permute.xlu0 %2177
        %2180 = vset.pattern.permute.xlu0 3
        %2181 = vperm.xlu0 %2180, %v399
        %v2182 = vpop.permute.xlu0 %2181
        %v2184 = vlaneseq
        %v2185 = vshrl.u32 %v2184, 7
        %v2186 = vsub.s32 3, %v2185
        %v2187 = vrot.slane %v400, %v2186
        %v2188 = vlaneseq
        %v2189 = vshrl.u32 %v2188, 7
        %v2190 = vsub.s32 7, %v2189
        %v2191 = vrot.slane %v400, %v2190
        %v2194 = vlaneseq
        %v2195 = vshrl.u32 %v2194, 7
        %v2196 = vsub.s32 3, %v2195
        %v2197 = vrot.slane %v2187, %v2196
        %v2198 = vlaneseq
        %v2199 = vshrl.u32 %v2198, 7
        %v2200 = vsub.s32 3, %v2199
        %v2201 = vrot.slane %v2191, %v2200
        %v2202 = vmul.f32 %v1930, %v2197
        %v2203 = vmul.f32 %v1930, %v2201
        %v2204 = vmul.f32 %v1934, %v2197
        %v2205 = vmul.f32 %v1934, %v2201
        %v2206 = vmul.f32 %v1938, %v2197
        %v2207 = vmul.f32 %v1938, %v2201
        %v2208 = vmul.f32 %v1942, %v2197
        %v2209 = vmul.f32 %v1942, %v2201
        %v2210 = vmul.f32 %v1946, %v2197
        %v2211 = vmul.f32 %v1946, %v2201
        %v2212 = vmul.f32 %v1950, %v2197
        %v2213 = vmul.f32 %v1950, %v2201
        %v2214 = vmul.f32 %v1954, %v2197
        %v2215 = vmul.f32 %v1954, %v2201
        %v2216 = vmul.f32 %v1958, %v2197
        %v2217 = vmul.f32 %v1958, %v2201
        %v2218 = vmul.f32 %v1962, %v2197
        %v2219 = vmul.f32 %v1962, %v2201
        %v2220 = vmul.f32 %v1966, %v2197
        %v2221 = vmul.f32 %v1966, %v2201
        %v2222 = vmul.f32 %v1970, %v2197
        %v2223 = vmul.f32 %v1970, %v2201
        %v2224 = vmul.f32 %v1974, %v2197
        %v2225 = vmul.f32 %v1974, %v2201
        %v2226 = vmul.f32 %v1978, %v2197
        %v2227 = vmul.f32 %v1978, %v2201
        %v2228 = vmul.f32 %v1982, %v2197
        %v2229 = vmul.f32 %v1982, %v2201
        %v2230 = vmul.f32 %v1986, %v2197
        %v2231 = vmul.f32 %v1986, %v2201
        %v2232 = vmul.f32 %v1990, %v2197
        %v2233 = vmul.f32 %v1990, %v2201
        %v2234 = vmul.f32 %v1994, %v2197
        %v2235 = vmul.f32 %v1994, %v2201
        %v2236 = vmul.f32 %v1998, %v2197
        %v2237 = vmul.f32 %v1998, %v2201
        %v2238 = vmul.f32 %v2002, %v2197
        %v2239 = vmul.f32 %v2002, %v2201
        %v2240 = vmul.f32 %v2006, %v2197
        %v2241 = vmul.f32 %v2006, %v2201
        %v2242 = vmul.f32 %v2010, %v2197
        %v2243 = vmul.f32 %v2010, %v2201
        %v2244 = vmul.f32 %v2014, %v2197
        %v2245 = vmul.f32 %v2014, %v2201
        %v2246 = vmul.f32 %v2018, %v2197
        %v2247 = vmul.f32 %v2018, %v2201
        %v2248 = vmul.f32 %v2022, %v2197
        %v2249 = vmul.f32 %v2022, %v2201
        %v2250 = vmul.f32 %v2026, %v2197
        %v2251 = vmul.f32 %v2026, %v2201
        %v2252 = vmul.f32 %v2030, %v2197
        %v2253 = vmul.f32 %v2030, %v2201
        %v2254 = vmul.f32 %v2034, %v2197
        %v2255 = vmul.f32 %v2034, %v2201
        %v2256 = vmul.f32 %v2038, %v2197
        %v2257 = vmul.f32 %v2038, %v2201
        %v2258 = vmul.f32 %v2042, %v2197
        %v2259 = vmul.f32 %v2042, %v2201
        %v2260 = vmul.f32 %v2046, %v2197
        %v2261 = vmul.f32 %v2046, %v2201
        %v2262 = vmul.f32 %v2050, %v2197
        %v2263 = vmul.f32 %v2050, %v2201
        %v2264 = vmul.f32 %v2054, %v2197
        %v2265 = vmul.f32 %v2054, %v2201
        %v2266 = vmul.f32 %v2058, %v2197
        %v2267 = vmul.f32 %v2058, %v2201
        %v2268 = vmul.f32 %v2062, %v2197
        %v2269 = vmul.f32 %v2062, %v2201
        %v2270 = vmul.f32 %v2066, %v2197
        %v2271 = vmul.f32 %v2066, %v2201
        %v2272 = vmul.f32 %v2070, %v2197
        %v2273 = vmul.f32 %v2070, %v2201
        %v2274 = vmul.f32 %v2074, %v2197
        %v2275 = vmul.f32 %v2074, %v2201
        %v2276 = vmul.f32 %v2078, %v2197
        %v2277 = vmul.f32 %v2078, %v2201
        %v2278 = vmul.f32 %v2082, %v2197
        %v2279 = vmul.f32 %v2082, %v2201
        %v2280 = vmul.f32 %v2086, %v2197
        %v2281 = vmul.f32 %v2086, %v2201
        %v2282 = vmul.f32 %v2090, %v2197
        %v2283 = vmul.f32 %v2090, %v2201
        %v2284 = vmul.f32 %v2094, %v2197
        %v2285 = vmul.f32 %v2094, %v2201
        %v2286 = vmul.f32 %v2098, %v2197
        %v2287 = vmul.f32 %v2098, %v2201
        %v2288 = vmul.f32 %v2102, %v2197
        %v2289 = vmul.f32 %v2102, %v2201
        %v2290 = vmul.f32 %v2106, %v2197
        %v2291 = vmul.f32 %v2106, %v2201
        %v2292 = vmul.f32 %v2110, %v2197
        %v2293 = vmul.f32 %v2110, %v2201
        %v2294 = vmul.f32 %v2114, %v2197
        %v2295 = vmul.f32 %v2114, %v2201
        %v2296 = vmul.f32 %v2118, %v2197
        %v2297 = vmul.f32 %v2118, %v2201
        %v2298 = vmul.f32 %v2122, %v2197
        %v2299 = vmul.f32 %v2122, %v2201
        %v2300 = vmul.f32 %v2126, %v2197
        %v2301 = vmul.f32 %v2126, %v2201
        %v2302 = vmul.f32 %v2130, %v2197
        %v2303 = vmul.f32 %v2130, %v2201
        %v2304 = vmul.f32 %v2134, %v2197
        %v2305 = vmul.f32 %v2134, %v2201
        %v2306 = vmul.f32 %v2138, %v2197
        %v2307 = vmul.f32 %v2138, %v2201
        %v2308 = vmul.f32 %v2142, %v2197
        %v2309 = vmul.f32 %v2142, %v2201
        %v2310 = vmul.f32 %v2146, %v2197
        %v2311 = vmul.f32 %v2146, %v2201
        %v2312 = vmul.f32 %v2150, %v2197
        %v2313 = vmul.f32 %v2150, %v2201
        %v2314 = vmul.f32 %v2154, %v2197
        %v2315 = vmul.f32 %v2154, %v2201
        %v2316 = vmul.f32 %v2158, %v2197
        %v2317 = vmul.f32 %v2158, %v2201
        %v2318 = vmul.f32 %v2162, %v2197
        %v2319 = vmul.f32 %v2162, %v2201
        %v2320 = vmul.f32 %v2166, %v2197
        %v2321 = vmul.f32 %v2166, %v2201
        %v2322 = vmul.f32 %v2170, %v2197
        %v2323 = vmul.f32 %v2170, %v2201
        %v2324 = vmul.f32 %v2174, %v2197
        %v2325 = vmul.f32 %v2174, %v2201
        %v2326 = vmul.f32 %v2178, %v2197
        %v2327 = vmul.f32 %v2178, %v2201
        %v2328 = vmul.f32 %v2182, %v2197
        %v2329 = vmul.f32 %v2182, %v2201
        %v2330 = vadd.f32 %v1800, %v2202
        %v2331 = vadd.f32 %v1801, %v2203
        %v2332 = vadd.f32 %v1802, %v2204
        %v2333 = vadd.f32 %v1803, %v2205
        %v2334 = vadd.f32 %v1804, %v2206
        %v2335 = vadd.f32 %v1805, %v2207
        %v2336 = vadd.f32 %v1806, %v2208
        %v2337 = vadd.f32 %v1807, %v2209
        %v2338 = vadd.f32 %v1808, %v2210
        %v2339 = vadd.f32 %v1809, %v2211
        %v2340 = vadd.f32 %v1810, %v2212
        %v2341 = vadd.f32 %v1811, %v2213
        %v2342 = vadd.f32 %v1812, %v2214
        %v2343 = vadd.f32 %v1813, %v2215
        %v2344 = vadd.f32 %v1814, %v2216
        %v2345 = vadd.f32 %v1815, %v2217
        %v2346 = vadd.f32 %v1816, %v2218
        %v2347 = vadd.f32 %v1817, %v2219
        %v2348 = vadd.f32 %v1818, %v2220
        %v2349 = vadd.f32 %v1819, %v2221
        %v2350 = vadd.f32 %v1820, %v2222
        %v2351 = vadd.f32 %v1821, %v2223
        %v2352 = vadd.f32 %v1822, %v2224
        %v2353 = vadd.f32 %v1823, %v2225
        %v2354 = vadd.f32 %v1824, %v2226
        %v2355 = vadd.f32 %v1825, %v2227
        %v2356 = vadd.f32 %v1826, %v2228
        %v2357 = vadd.f32 %v1827, %v2229
        %v2358 = vadd.f32 %v1828, %v2230
        %v2359 = vadd.f32 %v1829, %v2231
        %v2360 = vadd.f32 %v1830, %v2232
        %v2361 = vadd.f32 %v1831, %v2233
        %v2362 = vadd.f32 %v1832, %v2234
        %v2363 = vadd.f32 %v1833, %v2235
        %v2364 = vadd.f32 %v1834, %v2236
        %v2365 = vadd.f32 %v1835, %v2237
        %v2366 = vadd.f32 %v1836, %v2238
        %v2367 = vadd.f32 %v1837, %v2239
        %v2368 = vadd.f32 %v1838, %v2240
        %v2369 = vadd.f32 %v1839, %v2241
        %v2370 = vadd.f32 %v1840, %v2242
        %v2371 = vadd.f32 %v1841, %v2243
        %v2372 = vadd.f32 %v1842, %v2244
        %v2373 = vadd.f32 %v1843, %v2245
        %v2374 = vadd.f32 %v1844, %v2246
        %v2375 = vadd.f32 %v1845, %v2247
        %v2376 = vadd.f32 %v1846, %v2248
        %v2377 = vadd.f32 %v1847, %v2249
        %v2378 = vadd.f32 %v1848, %v2250
        %v2379 = vadd.f32 %v1849, %v2251
        %v2380 = vadd.f32 %v1850, %v2252
        %v2381 = vadd.f32 %v1851, %v2253
        %v2382 = vadd.f32 %v1852, %v2254
        %v2383 = vadd.f32 %v1853, %v2255
        %v2384 = vadd.f32 %v1854, %v2256
        %v2385 = vadd.f32 %v1855, %v2257
        %v2386 = vadd.f32 %v1856, %v2258
        %v2387 = vadd.f32 %v1857, %v2259
        %v2388 = vadd.f32 %v1858, %v2260
        %v2389 = vadd.f32 %v1859, %v2261
        %v2390 = vadd.f32 %v1860, %v2262
        %v2391 = vadd.f32 %v1861, %v2263
        %v2392 = vadd.f32 %v1862, %v2264
        %v2393 = vadd.f32 %v1863, %v2265
        %v2394 = vadd.f32 %v1864, %v2266
        %v2395 = vadd.f32 %v1865, %v2267
        %v2396 = vadd.f32 %v1866, %v2268
        %v2397 = vadd.f32 %v1867, %v2269
        %v2398 = vadd.f32 %v1868, %v2270
        %v2399 = vadd.f32 %v1869, %v2271
        %v2400 = vadd.f32 %v1870, %v2272
        %v2401 = vadd.f32 %v1871, %v2273
        %v2402 = vadd.f32 %v1872, %v2274
        %v2403 = vadd.f32 %v1873, %v2275
        %v2404 = vadd.f32 %v1874, %v2276
        %v2405 = vadd.f32 %v1875, %v2277
        %v2406 = vadd.f32 %v1876, %v2278
        %v2407 = vadd.f32 %v1877, %v2279
        %v2408 = vadd.f32 %v1878, %v2280
        %v2409 = vadd.f32 %v1879, %v2281
        %v2410 = vadd.f32 %v1880, %v2282
        %v2411 = vadd.f32 %v1881, %v2283
        %v2412 = vadd.f32 %v1882, %v2284
        %v2413 = vadd.f32 %v1883, %v2285
        %v2414 = vadd.f32 %v1884, %v2286
        %v2415 = vadd.f32 %v1885, %v2287
        %v2416 = vadd.f32 %v1886, %v2288
        %v2417 = vadd.f32 %v1887, %v2289
        %v2418 = vadd.f32 %v1888, %v2290
        %v2419 = vadd.f32 %v1889, %v2291
        %v2420 = vadd.f32 %v1890, %v2292
        %v2421 = vadd.f32 %v1891, %v2293
        %v2422 = vadd.f32 %v1892, %v2294
        %v2423 = vadd.f32 %v1893, %v2295
        %v2424 = vadd.f32 %v1894, %v2296
        %v2425 = vadd.f32 %v1895, %v2297
        %v2426 = vadd.f32 %v1896, %v2298
        %v2427 = vadd.f32 %v1897, %v2299
        %v2428 = vadd.f32 %v1898, %v2300
        %v2429 = vadd.f32 %v1899, %v2301
        %v2430 = vadd.f32 %v1900, %v2302
        %v2431 = vadd.f32 %v1901, %v2303
        %v2432 = vadd.f32 %v1902, %v2304
        %v2433 = vadd.f32 %v1903, %v2305
        %v2434 = vadd.f32 %v1904, %v2306
        %v2435 = vadd.f32 %v1905, %v2307
        %v2436 = vadd.f32 %v1906, %v2308
        %v2437 = vadd.f32 %v1907, %v2309
        %v2438 = vadd.f32 %v1908, %v2310
        %v2439 = vadd.f32 %v1909, %v2311
        %v2440 = vadd.f32 %v1910, %v2312
        %v2441 = vadd.f32 %v1911, %v2313
        %v2442 = vadd.f32 %v1912, %v2314
        %v2443 = vadd.f32 %v1913, %v2315
        %v2444 = vadd.f32 %v1914, %v2316
        %v2445 = vadd.f32 %v1915, %v2317
        %v2446 = vadd.f32 %v1916, %v2318
        %v2447 = vadd.f32 %v1917, %v2319
        %v2448 = vadd.f32 %v1918, %v2320
        %v2449 = vadd.f32 %v1919, %v2321
        %v2450 = vadd.f32 %v1920, %v2322
        %v2451 = vadd.f32 %v1921, %v2323
        %v2452 = vadd.f32 %v1922, %v2324
        %v2453 = vadd.f32 %v1923, %v2325
        %v2454 = vadd.f32 %v1924, %v2326
        %v2455 = vadd.f32 %v1925, %v2327
        %v2456 = vadd.f32 %v1926, %v2328
        %v2457 = vadd.f32 %v1927, %v2329
        %v2458 = vld [vmem:[%s2] sm:$0x3]
        %v2460 = vlaneseq
        %v2461 = vshrl.u32 %v2460, 7
        %v2462 = vsub.s32 0, %v2461
        %v2463 = vrot.slane %v2458, %v2462
        %v2464 = vlaneseq
        %v2465 = vshrl.u32 %v2464, 7
        %v2466 = vsub.s32 1, %v2465
        %v2467 = vrot.slane %v2458, %v2466
        %v2470 = vadd.f32 %v2330, %v2463
        %v2471 = vadd.f32 %v2331, %v2467
        %v2472 = vadd.f32 %v2332, %v2463
        %v2473 = vadd.f32 %v2333, %v2467
        %v2474 = vadd.f32 %v2334, %v2463
        %v2475 = vadd.f32 %v2335, %v2467
        %v2476 = vadd.f32 %v2336, %v2463
        %v2477 = vadd.f32 %v2337, %v2467
        %v2478 = vadd.f32 %v2338, %v2463
        %v2479 = vadd.f32 %v2339, %v2467
        %v2480 = vadd.f32 %v2340, %v2463
        %v2481 = vadd.f32 %v2341, %v2467
        %v2482 = vadd.f32 %v2342, %v2463
        %v2483 = vadd.f32 %v2343, %v2467
        %v2484 = vadd.f32 %v2344, %v2463
        %v2485 = vadd.f32 %v2345, %v2467
        %v2486 = vadd.f32 %v2346, %v2463
        %v2487 = vadd.f32 %v2347, %v2467
        %v2488 = vadd.f32 %v2348, %v2463
        %v2489 = vadd.f32 %v2349, %v2467
        %v2490 = vadd.f32 %v2350, %v2463
        %v2491 = vadd.f32 %v2351, %v2467
        %v2492 = vadd.f32 %v2352, %v2463
        %v2493 = vadd.f32 %v2353, %v2467
        %v2494 = vadd.f32 %v2354, %v2463
        %v2495 = vadd.f32 %v2355, %v2467
        %v2496 = vadd.f32 %v2356, %v2463
        %v2497 = vadd.f32 %v2357, %v2467
        %v2498 = vadd.f32 %v2358, %v2463
        %v2499 = vadd.f32 %v2359, %v2467
        %v2500 = vadd.f32 %v2360, %v2463
        %v2501 = vadd.f32 %v2361, %v2467
        %v2502 = vadd.f32 %v2362, %v2463
        %v2503 = vadd.f32 %v2363, %v2467
        %v2504 = vadd.f32 %v2364, %v2463
        %v2505 = vadd.f32 %v2365, %v2467
        %v2506 = vadd.f32 %v2366, %v2463
        %v2507 = vadd.f32 %v2367, %v2467
        %v2508 = vadd.f32 %v2368, %v2463
        %v2509 = vadd.f32 %v2369, %v2467
        %v2510 = vadd.f32 %v2370, %v2463
        %v2511 = vadd.f32 %v2371, %v2467
        %v2512 = vadd.f32 %v2372, %v2463
        %v2513 = vadd.f32 %v2373, %v2467
        %v2514 = vadd.f32 %v2374, %v2463
        %v2515 = vadd.f32 %v2375, %v2467
        %v2516 = vadd.f32 %v2376, %v2463
        %v2517 = vadd.f32 %v2377, %v2467
        %v2518 = vadd.f32 %v2378, %v2463
        %v2519 = vadd.f32 %v2379, %v2467
        %v2520 = vadd.f32 %v2380, %v2463
        %v2521 = vadd.f32 %v2381, %v2467
        %v2522 = vadd.f32 %v2382, %v2463
        %v2523 = vadd.f32 %v2383, %v2467
        %v2524 = vadd.f32 %v2384, %v2463
        %v2525 = vadd.f32 %v2385, %v2467
        %v2526 = vadd.f32 %v2386, %v2463
        %v2527 = vadd.f32 %v2387, %v2467
        %v2528 = vadd.f32 %v2388, %v2463
        %v2529 = vadd.f32 %v2389, %v2467
        %v2530 = vadd.f32 %v2390, %v2463
        %v2531 = vadd.f32 %v2391, %v2467
        %v2532 = vadd.f32 %v2392, %v2463
        %v2533 = vadd.f32 %v2393, %v2467
        %v2534 = vadd.f32 %v2394, %v2463
        %v2535 = vadd.f32 %v2395, %v2467
        %v2536 = vadd.f32 %v2396, %v2463
        %v2537 = vadd.f32 %v2397, %v2467
        %v2538 = vadd.f32 %v2398, %v2463
        %v2539 = vadd.f32 %v2399, %v2467
        %v2540 = vadd.f32 %v2400, %v2463
        %v2541 = vadd.f32 %v2401, %v2467
        %v2542 = vadd.f32 %v2402, %v2463
        %v2543 = vadd.f32 %v2403, %v2467
        %v2544 = vadd.f32 %v2404, %v2463
        %v2545 = vadd.f32 %v2405, %v2467
        %v2546 = vadd.f32 %v2406, %v2463
        %v2547 = vadd.f32 %v2407, %v2467
        %v2548 = vadd.f32 %v2408, %v2463
        %v2549 = vadd.f32 %v2409, %v2467
        %v2550 = vadd.f32 %v2410, %v2463
        %v2551 = vadd.f32 %v2411, %v2467
        %v2552 = vadd.f32 %v2412, %v2463
        %v2553 = vadd.f32 %v2413, %v2467
        %v2554 = vadd.f32 %v2414, %v2463
        %v2555 = vadd.f32 %v2415, %v2467
        %v2556 = vadd.f32 %v2416, %v2463
        %v2557 = vadd.f32 %v2417, %v2467
        %v2558 = vadd.f32 %v2418, %v2463
        %v2559 = vadd.f32 %v2419, %v2467
        %v2560 = vadd.f32 %v2420, %v2463
        %v2561 = vadd.f32 %v2421, %v2467
        %v2562 = vadd.f32 %v2422, %v2463
        %v2563 = vadd.f32 %v2423, %v2467
        %v2564 = vadd.f32 %v2424, %v2463
        %v2565 = vadd.f32 %v2425, %v2467
        %v2566 = vadd.f32 %v2426, %v2463
        %v2567 = vadd.f32 %v2427, %v2467
        %v2568 = vadd.f32 %v2428, %v2463
        %v2569 = vadd.f32 %v2429, %v2467
        %v2570 = vadd.f32 %v2430, %v2463
        %v2571 = vadd.f32 %v2431, %v2467
        %v2572 = vadd.f32 %v2432, %v2463
        %v2573 = vadd.f32 %v2433, %v2467
        %v2574 = vadd.f32 %v2434, %v2463
        %v2575 = vadd.f32 %v2435, %v2467
        %v2576 = vadd.f32 %v2436, %v2463
        %v2577 = vadd.f32 %v2437, %v2467
        %v2578 = vadd.f32 %v2438, %v2463
        %v2579 = vadd.f32 %v2439, %v2467
        %v2580 = vadd.f32 %v2440, %v2463
        %v2581 = vadd.f32 %v2441, %v2467
        %v2582 = vadd.f32 %v2442, %v2463
        %v2583 = vadd.f32 %v2443, %v2467
        %v2584 = vadd.f32 %v2444, %v2463
        %v2585 = vadd.f32 %v2445, %v2467
        %v2586 = vadd.f32 %v2446, %v2463
        %v2587 = vadd.f32 %v2447, %v2467
        %v2588 = vadd.f32 %v2448, %v2463
        %v2589 = vadd.f32 %v2449, %v2467
        %v2590 = vadd.f32 %v2450, %v2463
        %v2591 = vadd.f32 %v2451, %v2467
        %v2592 = vadd.f32 %v2452, %v2463
        %v2593 = vadd.f32 %v2453, %v2467
        %v2594 = vadd.f32 %v2454, %v2463
        %v2595 = vadd.f32 %v2455, %v2467
        %v2596 = vadd.f32 %v2456, %v2463
        %v2597 = vadd.f32 %v2457, %v2467
        %v2598 = vmul.f32 %v2470, 0.5
        %v2599 = vmul.f32 %v2471, 0.5
        %v2600 = vmul.f32 %v2472, 0.5
        %v2601 = vmul.f32 %v2473, 0.5
        %v2602 = vmul.f32 %v2474, 0.5
        %v2603 = vmul.f32 %v2475, 0.5
        %v2604 = vmul.f32 %v2476, 0.5
        %v2605 = vmul.f32 %v2477, 0.5
        %v2606 = vmul.f32 %v2478, 0.5
        %v2607 = vmul.f32 %v2479, 0.5
        %v2608 = vmul.f32 %v2480, 0.5
        %v2609 = vmul.f32 %v2481, 0.5
        %v2610 = vmul.f32 %v2482, 0.5
        %v2611 = vmul.f32 %v2483, 0.5
        %v2612 = vmul.f32 %v2484, 0.5
        %v2613 = vmul.f32 %v2485, 0.5
        %v2614 = vmul.f32 %v2486, 0.5
        %v2615 = vmul.f32 %v2487, 0.5
        %v2616 = vmul.f32 %v2488, 0.5
        %v2617 = vmul.f32 %v2489, 0.5
        %v2618 = vmul.f32 %v2490, 0.5
        %v2619 = vmul.f32 %v2491, 0.5
        %v2620 = vmul.f32 %v2492, 0.5
        %v2621 = vmul.f32 %v2493, 0.5
        %v2622 = vmul.f32 %v2494, 0.5
        %v2623 = vmul.f32 %v2495, 0.5
        %v2624 = vmul.f32 %v2496, 0.5
        %v2625 = vmul.f32 %v2497, 0.5
        %v2626 = vmul.f32 %v2498, 0.5
        %v2627 = vmul.f32 %v2499, 0.5
        %v2628 = vmul.f32 %v2500, 0.5
        %v2629 = vmul.f32 %v2501, 0.5
        %v2630 = vmul.f32 %v2502, 0.5
        %v2631 = vmul.f32 %v2503, 0.5
        %v2632 = vmul.f32 %v2504, 0.5
        %v2633 = vmul.f32 %v2505, 0.5
        %v2634 = vmul.f32 %v2506, 0.5
        %v2635 = vmul.f32 %v2507, 0.5
        %v2636 = vmul.f32 %v2508, 0.5
        %v2637 = vmul.f32 %v2509, 0.5
        %v2638 = vmul.f32 %v2510, 0.5
        %v2639 = vmul.f32 %v2511, 0.5
        %v2640 = vmul.f32 %v2512, 0.5
        %v2641 = vmul.f32 %v2513, 0.5
        %v2642 = vmul.f32 %v2514, 0.5
        %v2643 = vmul.f32 %v2515, 0.5
        %v2644 = vmul.f32 %v2516, 0.5
        %v2645 = vmul.f32 %v2517, 0.5
        %v2646 = vmul.f32 %v2518, 0.5
        %v2647 = vmul.f32 %v2519, 0.5
        %v2648 = vmul.f32 %v2520, 0.5
        %v2649 = vmul.f32 %v2521, 0.5
        %v2650 = vmul.f32 %v2522, 0.5
        %v2651 = vmul.f32 %v2523, 0.5
        %v2652 = vmul.f32 %v2524, 0.5
        %v2653 = vmul.f32 %v2525, 0.5
        %v2654 = vmul.f32 %v2526, 0.5
        %v2655 = vmul.f32 %v2527, 0.5
        %v2656 = vmul.f32 %v2528, 0.5
        %v2657 = vmul.f32 %v2529, 0.5
        %v2658 = vmul.f32 %v2530, 0.5
        %v2659 = vmul.f32 %v2531, 0.5
        %v2660 = vmul.f32 %v2532, 0.5
        %v2661 = vmul.f32 %v2533, 0.5
        %v2662 = vmul.f32 %v2534, 0.5
        %v2663 = vmul.f32 %v2535, 0.5
        %v2664 = vmul.f32 %v2536, 0.5
        %v2665 = vmul.f32 %v2537, 0.5
        %v2666 = vmul.f32 %v2538, 0.5
        %v2667 = vmul.f32 %v2539, 0.5
        %v2668 = vmul.f32 %v2540, 0.5
        %v2669 = vmul.f32 %v2541, 0.5
        %v2670 = vmul.f32 %v2542, 0.5
        %v2671 = vmul.f32 %v2543, 0.5
        %v2672 = vmul.f32 %v2544, 0.5
        %v2673 = vmul.f32 %v2545, 0.5
        %v2674 = vmul.f32 %v2546, 0.5
        %v2675 = vmul.f32 %v2547, 0.5
        %v2676 = vmul.f32 %v2548, 0.5
        %v2677 = vmul.f32 %v2549, 0.5
        %v2678 = vmul.f32 %v2550, 0.5
        %v2679 = vmul.f32 %v2551, 0.5
        %v2680 = vmul.f32 %v2552, 0.5
        %v2681 = vmul.f32 %v2553, 0.5
        %v2682 = vmul.f32 %v2554, 0.5
        %v2683 = vmul.f32 %v2555, 0.5
        %v2684 = vmul.f32 %v2556, 0.5
        %v2685 = vmul.f32 %v2557, 0.5
        %v2686 = vmul.f32 %v2558, 0.5
        %v2687 = vmul.f32 %v2559, 0.5
        %v2688 = vmul.f32 %v2560, 0.5
        %v2689 = vmul.f32 %v2561, 0.5
        %v2690 = vmul.f32 %v2562, 0.5
        %v2691 = vmul.f32 %v2563, 0.5
        %v2692 = vmul.f32 %v2564, 0.5
        %v2693 = vmul.f32 %v2565, 0.5
        %v2694 = vmul.f32 %v2566, 0.5
        %v2695 = vmul.f32 %v2567, 0.5
        %v2696 = vmul.f32 %v2568, 0.5
        %v2697 = vmul.f32 %v2569, 0.5
        %v2698 = vmul.f32 %v2570, 0.5
        %v2699 = vmul.f32 %v2571, 0.5
        %v2700 = vmul.f32 %v2572, 0.5
        %v2701 = vmul.f32 %v2573, 0.5
        %v2702 = vmul.f32 %v2574, 0.5
        %v2703 = vmul.f32 %v2575, 0.5
        %v2704 = vmul.f32 %v2576, 0.5
        %v2705 = vmul.f32 %v2577, 0.5
        %v2706 = vmul.f32 %v2578, 0.5
        %v2707 = vmul.f32 %v2579, 0.5
        %v2708 = vmul.f32 %v2580, 0.5
        %v2709 = vmul.f32 %v2581, 0.5
        %v2710 = vmul.f32 %v2582, 0.5
        %v2711 = vmul.f32 %v2583, 0.5
        %v2712 = vmul.f32 %v2584, 0.5
        %v2713 = vmul.f32 %v2585, 0.5
        %v2714 = vmul.f32 %v2586, 0.5
        %v2715 = vmul.f32 %v2587, 0.5
        %v2716 = vmul.f32 %v2588, 0.5
        %v2717 = vmul.f32 %v2589, 0.5
        %v2718 = vmul.f32 %v2590, 0.5
        %v2719 = vmul.f32 %v2591, 0.5
        %v2720 = vmul.f32 %v2592, 0.5
        %v2721 = vmul.f32 %v2593, 0.5
        %v2722 = vmul.f32 %v2594, 0.5
        %v2723 = vmul.f32 %v2595, 0.5
        %v2724 = vmul.f32 %v2596, 0.5
        %v2725 = vmul.f32 %v2597, 0.5
        %v2726 = vtanh.pop %v2598
        %v2727 = vtanh.pop %v2599
        %v2728 = vtanh.pop %v2600
        %v2729 = vtanh.pop %v2601
        %v2730 = vtanh.pop %v2602
        %v2731 = vtanh.pop %v2603
        %v2732 = vtanh.pop %v2604
        %v2733 = vtanh.pop %v2605
        %v2734 = vtanh.pop %v2606
        %v2735 = vtanh.pop %v2607
        %v2736 = vtanh.pop %v2608
        %v2737 = vtanh.pop %v2609
        %v2738 = vtanh.pop %v2610
        %v2739 = vtanh.pop %v2611
        %v2740 = vtanh.pop %v2612
        %v2741 = vtanh.pop %v2613
        %v2742 = vtanh.pop %v2614
        %v2743 = vtanh.pop %v2615
        %v2744 = vtanh.pop %v2616
        %v2745 = vtanh.pop %v2617
        %v2746 = vtanh.pop %v2618
        %v2747 = vtanh.pop %v2619
        %v2748 = vtanh.pop %v2620
        %v2749 = vtanh.pop %v2621
        %v2750 = vtanh.pop %v2622
        %v2751 = vtanh.pop %v2623
        %v2752 = vtanh.pop %v2624
        %v2753 = vtanh.pop %v2625
        %v2754 = vtanh.pop %v2626
        %v2755 = vtanh.pop %v2627
        %v2756 = vtanh.pop %v2628
        %v2757 = vtanh.pop %v2629
        %v2758 = vtanh.pop %v2630
        %v2759 = vtanh.pop %v2631
        %v2760 = vtanh.pop %v2632
        %v2761 = vtanh.pop %v2633
        %v2762 = vtanh.pop %v2634
        %v2763 = vtanh.pop %v2635
        %v2764 = vtanh.pop %v2636
        %v2765 = vtanh.pop %v2637
        %v2766 = vtanh.pop %v2638
        %v2767 = vtanh.pop %v2639
        %v2768 = vtanh.pop %v2640
        %v2769 = vtanh.pop %v2641
        %v2770 = vtanh.pop %v2642
        %v2771 = vtanh.pop %v2643
        %v2772 = vtanh.pop %v2644
        %v2773 = vtanh.pop %v2645
        %v2774 = vtanh.pop %v2646
        %v2775 = vtanh.pop %v2647
        %v2776 = vtanh.pop %v2648
        %v2777 = vtanh.pop %v2649
        %v2778 = vtanh.pop %v2650
        %v2779 = vtanh.pop %v2651
        %v2780 = vtanh.pop %v2652
        %v2781 = vtanh.pop %v2653
        %v2782 = vtanh.pop %v2654
        %v2783 = vtanh.pop %v2655
        %v2784 = vtanh.pop %v2656
        %v2785 = vtanh.pop %v2657
        %v2786 = vtanh.pop %v2658
        %v2787 = vtanh.pop %v2659
        %v2788 = vtanh.pop %v2660
        %v2789 = vtanh.pop %v2661
        %v2790 = vtanh.pop %v2662
        %v2791 = vtanh.pop %v2663
        %v2792 = vtanh.pop %v2664
        %v2793 = vtanh.pop %v2665
        %v2794 = vtanh.pop %v2666
        %v2795 = vtanh.pop %v2667
        %v2796 = vtanh.pop %v2668
        %v2797 = vtanh.pop %v2669
        %v2798 = vtanh.pop %v2670
        %v2799 = vtanh.pop %v2671
        %v2800 = vtanh.pop %v2672
        %v2801 = vtanh.pop %v2673
        %v2802 = vtanh.pop %v2674
        %v2803 = vtanh.pop %v2675
        %v2804 = vtanh.pop %v2676
        %v2805 = vtanh.pop %v2677
        %v2806 = vtanh.pop %v2678
        %v2807 = vtanh.pop %v2679
        %v2808 = vtanh.pop %v2680
        %v2809 = vtanh.pop %v2681
        %v2810 = vtanh.pop %v2682
        %v2811 = vtanh.pop %v2683
        %v2812 = vtanh.pop %v2684
        %v2813 = vtanh.pop %v2685
        %v2814 = vtanh.pop %v2686
        %v2815 = vtanh.pop %v2687
        %v2816 = vtanh.pop %v2688
        %v2817 = vtanh.pop %v2689
        %v2818 = vtanh.pop %v2690
        %v2819 = vtanh.pop %v2691
        %v2820 = vtanh.pop %v2692
        %v2821 = vtanh.pop %v2693
        %v2822 = vtanh.pop %v2694
        %v2823 = vtanh.pop %v2695
        %v2824 = vtanh.pop %v2696
        %v2825 = vtanh.pop %v2697
        %v2826 = vtanh.pop %v2698
        %v2827 = vtanh.pop %v2699
        %v2828 = vtanh.pop %v2700
        %v2829 = vtanh.pop %v2701
        %v2830 = vtanh.pop %v2702
        %v2831 = vtanh.pop %v2703
        %v2832 = vtanh.pop %v2704
        %v2833 = vtanh.pop %v2705
        %v2834 = vtanh.pop %v2706
        %v2835 = vtanh.pop %v2707
        %v2836 = vtanh.pop %v2708
        %v2837 = vtanh.pop %v2709
        %v2838 = vtanh.pop %v2710
        %v2839 = vtanh.pop %v2711
        %v2840 = vtanh.pop %v2712
        %v2841 = vtanh.pop %v2713
        %v2842 = vtanh.pop %v2714
        %v2843 = vtanh.pop %v2715
        %v2844 = vtanh.pop %v2716
        %v2845 = vtanh.pop %v2717
        %v2846 = vtanh.pop %v2718
        %v2847 = vtanh.pop %v2719
        %v2848 = vtanh.pop %v2720
        %v2849 = vtanh.pop %v2721
        %v2850 = vtanh.pop %v2722
        %v2851 = vtanh.pop %v2723
        %v2852 = vtanh.pop %v2724
        %v2853 = vtanh.pop %v2725
        %v2854 = vadd.f32 %v2726, 1.0
        %v2855 = vadd.f32 %v2727, 1.0
        %v2856 = vadd.f32 %v2728, 1.0
        %v2857 = vadd.f32 %v2729, 1.0
        %v2858 = vadd.f32 %v2730, 1.0
        %v2859 = vadd.f32 %v2731, 1.0
        %v2860 = vadd.f32 %v2732, 1.0
        %v2861 = vadd.f32 %v2733, 1.0
        %v2862 = vadd.f32 %v2734, 1.0
        %v2863 = vadd.f32 %v2735, 1.0
        %v2864 = vadd.f32 %v2736, 1.0
        %v2865 = vadd.f32 %v2737, 1.0
        %v2866 = vadd.f32 %v2738, 1.0
        %v2867 = vadd.f32 %v2739, 1.0
        %v2868 = vadd.f32 %v2740, 1.0
        %v2869 = vadd.f32 %v2741, 1.0
        %v2870 = vadd.f32 %v2742, 1.0
        %v2871 = vadd.f32 %v2743, 1.0
        %v2872 = vadd.f32 %v2744, 1.0
        %v2873 = vadd.f32 %v2745, 1.0
        %v2874 = vadd.f32 %v2746, 1.0
        %v2875 = vadd.f32 %v2747, 1.0
        %v2876 = vadd.f32 %v2748, 1.0
        %v2877 = vadd.f32 %v2749, 1.0
        %v2878 = vadd.f32 %v2750, 1.0
        %v2879 = vadd.f32 %v2751, 1.0
        %v2880 = vadd.f32 %v2752, 1.0
        %v2881 = vadd.f32 %v2753, 1.0
        %v2882 = vadd.f32 %v2754, 1.0
        %v2883 = vadd.f32 %v2755, 1.0
        %v2884 = vadd.f32 %v2756, 1.0
        %v2885 = vadd.f32 %v2757, 1.0
        %v2886 = vadd.f32 %v2758, 1.0
        %v2887 = vadd.f32 %v2759, 1.0
        %v2888 = vadd.f32 %v2760, 1.0
        %v2889 = vadd.f32 %v2761, 1.0
        %v2890 = vadd.f32 %v2762, 1.0
        %v2891 = vadd.f32 %v2763, 1.0
        %v2892 = vadd.f32 %v2764, 1.0
        %v2893 = vadd.f32 %v2765, 1.0
        %v2894 = vadd.f32 %v2766, 1.0
        %v2895 = vadd.f32 %v2767, 1.0
        %v2896 = vadd.f32 %v2768, 1.0
        %v2897 = vadd.f32 %v2769, 1.0
        %v2898 = vadd.f32 %v2770, 1.0
        %v2899 = vadd.f32 %v2771, 1.0
        %v2900 = vadd.f32 %v2772, 1.0
        %v2901 = vadd.f32 %v2773, 1.0
        %v2902 = vadd.f32 %v2774, 1.0
        %v2903 = vadd.f32 %v2775, 1.0
        %v2904 = vadd.f32 %v2776, 1.0
        %v2905 = vadd.f32 %v2777, 1.0
        %v2906 = vadd.f32 %v2778, 1.0
        %v2907 = vadd.f32 %v2779, 1.0
        %v2908 = vadd.f32 %v2780, 1.0
        %v2909 = vadd.f32 %v2781, 1.0
        %v2910 = vadd.f32 %v2782, 1.0
        %v2911 = vadd.f32 %v2783, 1.0
        %v2912 = vadd.f32 %v2784, 1.0
        %v2913 = vadd.f32 %v2785, 1.0
        %v2914 = vadd.f32 %v2786, 1.0
        %v2915 = vadd.f32 %v2787, 1.0
        %v2916 = vadd.f32 %v2788, 1.0
        %v2917 = vadd.f32 %v2789, 1.0
        %v2918 = vadd.f32 %v2790, 1.0
        %v2919 = vadd.f32 %v2791, 1.0
        %v2920 = vadd.f32 %v2792, 1.0
        %v2921 = vadd.f32 %v2793, 1.0
        %v2922 = vadd.f32 %v2794, 1.0
        %v2923 = vadd.f32 %v2795, 1.0
        %v2924 = vadd.f32 %v2796, 1.0
        %v2925 = vadd.f32 %v2797, 1.0
        %v2926 = vadd.f32 %v2798, 1.0
        %v2927 = vadd.f32 %v2799, 1.0
        %v2928 = vadd.f32 %v2800, 1.0
        %v2929 = vadd.f32 %v2801, 1.0
        %v2930 = vadd.f32 %v2802, 1.0
        %v2931 = vadd.f32 %v2803, 1.0
        %v2932 = vadd.f32 %v2804, 1.0
        %v2933 = vadd.f32 %v2805, 1.0
        %v2934 = vadd.f32 %v2806, 1.0
        %v2935 = vadd.f32 %v2807, 1.0
        %v2936 = vadd.f32 %v2808, 1.0
        %v2937 = vadd.f32 %v2809, 1.0
        %v2938 = vadd.f32 %v2810, 1.0
        %v2939 = vadd.f32 %v2811, 1.0
        %v2940 = vadd.f32 %v2812, 1.0
        %v2941 = vadd.f32 %v2813, 1.0
        %v2942 = vadd.f32 %v2814, 1.0
        %v2943 = vadd.f32 %v2815, 1.0
        %v2944 = vadd.f32 %v2816, 1.0
        %v2945 = vadd.f32 %v2817, 1.0
        %v2946 = vadd.f32 %v2818, 1.0
        %v2947 = vadd.f32 %v2819, 1.0
        %v2948 = vadd.f32 %v2820, 1.0
        %v2949 = vadd.f32 %v2821, 1.0
        %v2950 = vadd.f32 %v2822, 1.0
        %v2951 = vadd.f32 %v2823, 1.0
        %v2952 = vadd.f32 %v2824, 1.0
        %v2953 = vadd.f32 %v2825, 1.0
        %v2954 = vadd.f32 %v2826, 1.0
        %v2955 = vadd.f32 %v2827, 1.0
        %v2956 = vadd.f32 %v2828, 1.0
        %v2957 = vadd.f32 %v2829, 1.0
        %v2958 = vadd.f32 %v2830, 1.0
        %v2959 = vadd.f32 %v2831, 1.0
        %v2960 = vadd.f32 %v2832, 1.0
        %v2961 = vadd.f32 %v2833, 1.0
        %v2962 = vadd.f32 %v2834, 1.0
        %v2963 = vadd.f32 %v2835, 1.0
        %v2964 = vadd.f32 %v2836, 1.0
        %v2965 = vadd.f32 %v2837, 1.0
        %v2966 = vadd.f32 %v2838, 1.0
        %v2967 = vadd.f32 %v2839, 1.0
        %v2968 = vadd.f32 %v2840, 1.0
        %v2969 = vadd.f32 %v2841, 1.0
        %v2970 = vadd.f32 %v2842, 1.0
        %v2971 = vadd.f32 %v2843, 1.0
        %v2972 = vadd.f32 %v2844, 1.0
        %v2973 = vadd.f32 %v2845, 1.0
        %v2974 = vadd.f32 %v2846, 1.0
        %v2975 = vadd.f32 %v2847, 1.0
        %v2976 = vadd.f32 %v2848, 1.0
        %v2977 = vadd.f32 %v2849, 1.0
        %v2978 = vadd.f32 %v2850, 1.0
        %v2979 = vadd.f32 %v2851, 1.0
        %v2980 = vadd.f32 %v2852, 1.0
        %v2981 = vadd.f32 %v2853, 1.0
        %v2982 = vmul.f32 %v2598, %v2854
        %v2983 = vmul.f32 %v2599, %v2855
        %v2984 = vmul.f32 %v2600, %v2856
        %v2985 = vmul.f32 %v2601, %v2857
        %v2986 = vmul.f32 %v2602, %v2858
        %v2987 = vmul.f32 %v2603, %v2859
        %v2988 = vmul.f32 %v2604, %v2860
        %v2989 = vmul.f32 %v2605, %v2861
        %v2990 = vmul.f32 %v2606, %v2862
        %v2991 = vmul.f32 %v2607, %v2863
        %v2992 = vmul.f32 %v2608, %v2864
        %v2993 = vmul.f32 %v2609, %v2865
        %v2994 = vmul.f32 %v2610, %v2866
        %v2995 = vmul.f32 %v2611, %v2867
        %v2996 = vmul.f32 %v2612, %v2868
        %v2997 = vmul.f32 %v2613, %v2869
        %v2998 = vmul.f32 %v2614, %v2870
        %v2999 = vmul.f32 %v2615, %v2871
        %v3000 = vmul.f32 %v2616, %v2872
        %v3001 = vmul.f32 %v2617, %v2873
        %v3002 = vmul.f32 %v2618, %v2874
        %v3003 = vmul.f32 %v2619, %v2875
        %v3004 = vmul.f32 %v2620, %v2876
        %v3005 = vmul.f32 %v2621, %v2877
        %v3006 = vmul.f32 %v2622, %v2878
        %v3007 = vmul.f32 %v2623, %v2879
        %v3008 = vmul.f32 %v2624, %v2880
        %v3009 = vmul.f32 %v2625, %v2881
        %v3010 = vmul.f32 %v2626, %v2882
        %v3011 = vmul.f32 %v2627, %v2883
        %v3012 = vmul.f32 %v2628, %v2884
        %v3013 = vmul.f32 %v2629, %v2885
        %v3014 = vmul.f32 %v2630, %v2886
        %v3015 = vmul.f32 %v2631, %v2887
        %v3016 = vmul.f32 %v2632, %v2888
        %v3017 = vmul.f32 %v2633, %v2889
        %v3018 = vmul.f32 %v2634, %v2890
        %v3019 = vmul.f32 %v2635, %v2891
        %v3020 = vmul.f32 %v2636, %v2892
        %v3021 = vmul.f32 %v2637, %v2893
        %v3022 = vmul.f32 %v2638, %v2894
        %v3023 = vmul.f32 %v2639, %v2895
        %v3024 = vmul.f32 %v2640, %v2896
        %v3025 = vmul.f32 %v2641, %v2897
        %v3026 = vmul.f32 %v2642, %v2898
        %v3027 = vmul.f32 %v2643, %v2899
        %v3028 = vmul.f32 %v2644, %v2900
        %v3029 = vmul.f32 %v2645, %v2901
        %v3030 = vmul.f32 %v2646, %v2902
        %v3031 = vmul.f32 %v2647, %v2903
        %v3032 = vmul.f32 %v2648, %v2904
        %v3033 = vmul.f32 %v2649, %v2905
        %v3034 = vmul.f32 %v2650, %v2906
        %v3035 = vmul.f32 %v2651, %v2907
        %v3036 = vmul.f32 %v2652, %v2908
        %v3037 = vmul.f32 %v2653, %v2909
        %v3038 = vmul.f32 %v2654, %v2910
        %v3039 = vmul.f32 %v2655, %v2911
        %v3040 = vmul.f32 %v2656, %v2912
        %v3041 = vmul.f32 %v2657, %v2913
        %v3042 = vmul.f32 %v2658, %v2914
        %v3043 = vmul.f32 %v2659, %v2915
        %v3044 = vmul.f32 %v2660, %v2916
        %v3045 = vmul.f32 %v2661, %v2917
        %v3046 = vmul.f32 %v2662, %v2918
        %v3047 = vmul.f32 %v2663, %v2919
        %v3048 = vmul.f32 %v2664, %v2920
        %v3049 = vmul.f32 %v2665, %v2921
        %v3050 = vmul.f32 %v2666, %v2922
        %v3051 = vmul.f32 %v2667, %v2923
        %v3052 = vmul.f32 %v2668, %v2924
        %v3053 = vmul.f32 %v2669, %v2925
        %v3054 = vmul.f32 %v2670, %v2926
        %v3055 = vmul.f32 %v2671, %v2927
        %v3056 = vmul.f32 %v2672, %v2928
        %v3057 = vmul.f32 %v2673, %v2929
        %v3058 = vmul.f32 %v2674, %v2930
        %v3059 = vmul.f32 %v2675, %v2931
        %v3060 = vmul.f32 %v2676, %v2932
        %v3061 = vmul.f32 %v2677, %v2933
        %v3062 = vmul.f32 %v2678, %v2934
        %v3063 = vmul.f32 %v2679, %v2935
        %v3064 = vmul.f32 %v2680, %v2936
        %v3065 = vmul.f32 %v2681, %v2937
        %v3066 = vmul.f32 %v2682, %v2938
        %v3067 = vmul.f32 %v2683, %v2939
        %v3068 = vmul.f32 %v2684, %v2940
        %v3069 = vmul.f32 %v2685, %v2941
        %v3070 = vmul.f32 %v2686, %v2942
        %v3071 = vmul.f32 %v2687, %v2943
        %v3072 = vmul.f32 %v2688, %v2944
        %v3073 = vmul.f32 %v2689, %v2945
        %v3074 = vmul.f32 %v2690, %v2946
        %v3075 = vmul.f32 %v2691, %v2947
        %v3076 = vmul.f32 %v2692, %v2948
        %v3077 = vmul.f32 %v2693, %v2949
        %v3078 = vmul.f32 %v2694, %v2950
        %v3079 = vmul.f32 %v2695, %v2951
        %v3080 = vmul.f32 %v2696, %v2952
        %v3081 = vmul.f32 %v2697, %v2953
        %v3082 = vmul.f32 %v2698, %v2954
        %v3083 = vmul.f32 %v2699, %v2955
        %v3084 = vmul.f32 %v2700, %v2956
        %v3085 = vmul.f32 %v2701, %v2957
        %v3086 = vmul.f32 %v2702, %v2958
        %v3087 = vmul.f32 %v2703, %v2959
        %v3088 = vmul.f32 %v2704, %v2960
        %v3089 = vmul.f32 %v2705, %v2961
        %v3090 = vmul.f32 %v2706, %v2962
        %v3091 = vmul.f32 %v2707, %v2963
        %v3092 = vmul.f32 %v2708, %v2964
        %v3093 = vmul.f32 %v2709, %v2965
        %v3094 = vmul.f32 %v2710, %v2966
        %v3095 = vmul.f32 %v2711, %v2967
        %v3096 = vmul.f32 %v2712, %v2968
        %v3097 = vmul.f32 %v2713, %v2969
        %v3098 = vmul.f32 %v2714, %v2970
        %v3099 = vmul.f32 %v2715, %v2971
        %v3100 = vmul.f32 %v2716, %v2972
        %v3101 = vmul.f32 %v2717, %v2973
        %v3102 = vmul.f32 %v2718, %v2974
        %v3103 = vmul.f32 %v2719, %v2975
        %v3104 = vmul.f32 %v2720, %v2976
        %v3105 = vmul.f32 %v2721, %v2977
        %v3106 = vmul.f32 %v2722, %v2978
        %v3107 = vmul.f32 %v2723, %v2979
        %v3108 = vmul.f32 %v2724, %v2980
        %v3109 = vmul.f32 %v2725, %v2981
        %v3110 = vpack.c.bf16 %v2984, %v2982
        %v3111 = vpack.c.bf16 %v2985, %v2983
        %v3112 = vpack.c.bf16 %v2988, %v2986
        %v3113 = vpack.c.bf16 %v2989, %v2987
        %v3114 = vpack.c.bf16 %v2992, %v2990
        %v3115 = vpack.c.bf16 %v2993, %v2991
        %v3116 = vpack.c.bf16 %v2996, %v2994
        %v3117 = vpack.c.bf16 %v2997, %v2995
        %v3118 = vpack.c.bf16 %v3000, %v2998
        %v3119 = vpack.c.bf16 %v3001, %v2999
        %v3120 = vpack.c.bf16 %v3004, %v3002
        %v3121 = vpack.c.bf16 %v3005, %v3003
        %v3122 = vpack.c.bf16 %v3008, %v3006
        %v3123 = vpack.c.bf16 %v3009, %v3007
        %v3124 = vpack.c.bf16 %v3012, %v3010
        %v3125 = vpack.c.bf16 %v3013, %v3011
        %v3126 = vpack.c.bf16 %v3016, %v3014
        %v3127 = vpack.c.bf16 %v3017, %v3015
        %v3128 = vpack.c.bf16 %v3020, %v3018
        %v3129 = vpack.c.bf16 %v3021, %v3019
        %v3130 = vpack.c.bf16 %v3024, %v3022
        %v3131 = vpack.c.bf16 %v3025, %v3023
        %v3132 = vpack.c.bf16 %v3028, %v3026
        %v3133 = vpack.c.bf16 %v3029, %v3027
        %v3134 = vpack.c.bf16 %v3032, %v3030
        %v3135 = vpack.c.bf16 %v3033, %v3031
        %v3136 = vpack.c.bf16 %v3036, %v3034
        %v3137 = vpack.c.bf16 %v3037, %v3035
        %v3138 = vpack.c.bf16 %v3040, %v3038
        %v3139 = vpack.c.bf16 %v3041, %v3039
        %v3140 = vpack.c.bf16 %v3044, %v3042
        %v3141 = vpack.c.bf16 %v3045, %v3043
        %v3142 = vpack.c.bf16 %v3048, %v3046
        %v3143 = vpack.c.bf16 %v3049, %v3047
        %v3144 = vpack.c.bf16 %v3052, %v3050
        %v3145 = vpack.c.bf16 %v3053, %v3051
        %v3146 = vpack.c.bf16 %v3056, %v3054
        %v3147 = vpack.c.bf16 %v3057, %v3055
        %v3148 = vpack.c.bf16 %v3060, %v3058
        %v3149 = vpack.c.bf16 %v3061, %v3059
        %v3150 = vpack.c.bf16 %v3064, %v3062
        %v3151 = vpack.c.bf16 %v3065, %v3063
        %v3152 = vpack.c.bf16 %v3068, %v3066
        %v3153 = vpack.c.bf16 %v3069, %v3067
        %v3154 = vpack.c.bf16 %v3072, %v3070
        %v3155 = vpack.c.bf16 %v3073, %v3071
        %v3156 = vpack.c.bf16 %v3076, %v3074
        %v3157 = vpack.c.bf16 %v3077, %v3075
        %v3158 = vpack.c.bf16 %v3080, %v3078
        %v3159 = vpack.c.bf16 %v3081, %v3079
        %v3160 = vpack.c.bf16 %v3084, %v3082
        %v3161 = vpack.c.bf16 %v3085, %v3083
        %v3162 = vpack.c.bf16 %v3088, %v3086
        %v3163 = vpack.c.bf16 %v3089, %v3087
        %v3164 = vpack.c.bf16 %v3092, %v3090
        %v3165 = vpack.c.bf16 %v3093, %v3091
        %v3166 = vpack.c.bf16 %v3096, %v3094
        %v3167 = vpack.c.bf16 %v3097, %v3095
        %v3168 = vpack.c.bf16 %v3100, %v3098
        %v3169 = vpack.c.bf16 %v3101, %v3099
        %v3170 = vpack.c.bf16 %v3104, %v3102
        %v3171 = vpack.c.bf16 %v3105, %v3103
        %v3172 = vpack.c.bf16 %v3108, %v3106
        %v3173 = vpack.c.bf16 %v3109, %v3107
        %v3174 = vld [vmem:[%s3] sm:$0xff]
        %v3175 = vld [vmem:[%s3 + $0x8] sm:$0xff]
        %v3176 = vld [vmem:[%s3 + $0x10] sm:$0xff]
        %v3177 = vld [vmem:[%s3 + $0x18] sm:$0xff]
        %v3178 = vld [vmem:[%s3 + $0x20] sm:$0xff]
        %v3179 = vld [vmem:[%s3 + $0x28] sm:$0xff]
        %v3180 = vld [vmem:[%s3 + $0x30] sm:$0xff]
        %v3181 = vld [vmem:[%s3 + $0x38] sm:$0xff]
        %v3182 = vld [vmem:[%s3 + $0x40] sm:$0xff]
        %v3183 = vld [vmem:[%s3 + $0x48] sm:$0xff]
        %v3184 = vld [vmem:[%s3 + $0x50] sm:$0xff]
        %v3185 = vld [vmem:[%s3 + $0x58] sm:$0xff]
        %v3186 = vld [vmem:[%s3 + $0x60] sm:$0xff]
        %v3187 = vld [vmem:[%s3 + $0x68] sm:$0xff]
        %v3188 = vld [vmem:[%s3 + $0x70] sm:$0xff]
        %v3189 = vld [vmem:[%s3 + $0x78] sm:$0xff]
        %v3190 = vld [vmem:[%s3 + $0x80] sm:$0xff]
        %v3191 = vld [vmem:[%s3 + $0x88] sm:$0xff]
        %v3192 = vld [vmem:[%s3 + $0x90] sm:$0xff]
        %v3193 = vld [vmem:[%s3 + $0x98] sm:$0xff]
        %v3194 = vld [vmem:[%s3 + $0xa0] sm:$0xff]
        %v3195 = vld [vmem:[%s3 + $0xa8] sm:$0xff]
        %v3196 = vld [vmem:[%s3 + $0xb0] sm:$0xff]
        %v3197 = vld [vmem:[%s3 + $0xb8] sm:$0xff]
        %v3198 = vld [vmem:[%s3 + $0xc0] sm:$0xff]
        %v3199 = vld [vmem:[%s3 + $0xc8] sm:$0xff]
        %v3200 = vld [vmem:[%s3 + $0xd0] sm:$0xff]
        %v3201 = vld [vmem:[%s3 + $0xd8] sm:$0xff]
        %v3202 = vld [vmem:[%s3 + $0xe0] sm:$0xff]
        %v3203 = vld [vmem:[%s3 + $0xe8] sm:$0xff]
        %v3204 = vld [vmem:[%s3 + $0xf0] sm:$0xff]
        %v3205 = vld [vmem:[%s3 + $0xf8] sm:$0xff]
        %v3206 = vld [vmem:[%s4] sm:$0x3]
        %v3208 = vlaneseq
        %v3209 = vshrl.u32 %v3208, 7
        %v3210 = vsub.s32 0, %v3209
        %v3211 = vrot.slane %v3206, %v3210
        %v3212 = vlaneseq
        %v3213 = vshrl.u32 %v3212, 7
        %v3214 = vsub.s32 1, %v3213
        %v3215 = vrot.slane %v3206, %v3214
        %v3250 = vunpack.c.l.b16 %v3174
        %v3251 = vunpack.c.h.b16 %v3174
        %v3252 = vunpack.c.l.b16 %v3175
        %v3253 = vunpack.c.h.b16 %v3175
        %v3254 = vunpack.c.l.b16 %v3176
        %v3255 = vunpack.c.h.b16 %v3176
        %v3256 = vunpack.c.l.b16 %v3177
        %v3257 = vunpack.c.h.b16 %v3177
        %v3258 = vunpack.c.l.b16 %v3178
        %v3259 = vunpack.c.h.b16 %v3178
        %v3260 = vunpack.c.l.b16 %v3179
        %v3261 = vunpack.c.h.b16 %v3179
        %v3262 = vunpack.c.l.b16 %v3180
        %v3263 = vunpack.c.h.b16 %v3180
        %v3264 = vunpack.c.l.b16 %v3181
        %v3265 = vunpack.c.h.b16 %v3181
        %v3266 = vunpack.c.l.b16 %v3182
        %v3267 = vunpack.c.h.b16 %v3182
        %v3268 = vunpack.c.l.b16 %v3183
        %v3269 = vunpack.c.h.b16 %v3183
        %v3270 = vunpack.c.l.b16 %v3184
        %v3271 = vunpack.c.h.b16 %v3184
        %v3272 = vunpack.c.l.b16 %v3185
        %v3273 = vunpack.c.h.b16 %v3185
        %v3274 = vunpack.c.l.b16 %v3186
        %v3275 = vunpack.c.h.b16 %v3186
        %v3276 = vunpack.c.l.b16 %v3187
        %v3277 = vunpack.c.h.b16 %v3187
        %v3278 = vunpack.c.l.b16 %v3188
        %v3279 = vunpack.c.h.b16 %v3188
        %v3280 = vunpack.c.l.b16 %v3189
        %v3281 = vunpack.c.h.b16 %v3189
        %v3282 = vunpack.c.l.b16 %v3190
        %v3283 = vunpack.c.h.b16 %v3190
        %v3284 = vunpack.c.l.b16 %v3191
        %v3285 = vunpack.c.h.b16 %v3191
        %v3286 = vunpack.c.l.b16 %v3192
        %v3287 = vunpack.c.h.b16 %v3192
        %v3288 = vunpack.c.l.b16 %v3193
        %v3289 = vunpack.c.h.b16 %v3193
        %v3290 = vunpack.c.l.b16 %v3194
        %v3291 = vunpack.c.h.b16 %v3194
        %v3292 = vunpack.c.l.b16 %v3195
        %v3293 = vunpack.c.h.b16 %v3195
        %v3294 = vunpack.c.l.b16 %v3196
        %v3295 = vunpack.c.h.b16 %v3196
        %v3296 = vunpack.c.l.b16 %v3197
        %v3297 = vunpack.c.h.b16 %v3197
        %v3298 = vunpack.c.l.b16 %v3198
        %v3299 = vunpack.c.h.b16 %v3198
        %v3300 = vunpack.c.l.b16 %v3199
        %v3301 = vunpack.c.h.b16 %v3199
        %v3302 = vunpack.c.l.b16 %v3200
        %v3303 = vunpack.c.h.b16 %v3200
        %v3304 = vunpack.c.l.b16 %v3201
        %v3305 = vunpack.c.h.b16 %v3201
        %v3306 = vunpack.c.l.b16 %v3202
        %v3307 = vunpack.c.h.b16 %v3202
        %v3308 = vunpack.c.l.b16 %v3203
        %v3309 = vunpack.c.h.b16 %v3203
        %v3310 = vunpack.c.l.b16 %v3204
        %v3311 = vunpack.c.h.b16 %v3204
        %v3312 = vunpack.c.l.b16 %v3205
        %v3313 = vunpack.c.h.b16 %v3205
        %v3314 = vpack.c.b16 %v3252, %v3250
        %v3315 = vpack.c.b16 %v3253, %v3251
        %v3316 = vpack.c.b16 %v3256, %v3254
        %v3317 = vpack.c.b16 %v3257, %v3255
        %v3318 = vpack.c.b16 %v3260, %v3258
        %v3319 = vpack.c.b16 %v3261, %v3259
        %v3320 = vpack.c.b16 %v3264, %v3262
        %v3321 = vpack.c.b16 %v3265, %v3263
        %v3322 = vpack.c.b16 %v3268, %v3266
        %v3323 = vpack.c.b16 %v3269, %v3267
        %v3324 = vpack.c.b16 %v3272, %v3270
        %v3325 = vpack.c.b16 %v3273, %v3271
        %v3326 = vpack.c.b16 %v3276, %v3274
        %v3327 = vpack.c.b16 %v3277, %v3275
        %v3328 = vpack.c.b16 %v3280, %v3278
        %v3329 = vpack.c.b16 %v3281, %v3279
        %v3330 = vpack.c.b16 %v3284, %v3282
        %v3331 = vpack.c.b16 %v3285, %v3283
        %v3332 = vpack.c.b16 %v3288, %v3286
        %v3333 = vpack.c.b16 %v3289, %v3287
        %v3334 = vpack.c.b16 %v3292, %v3290
        %v3335 = vpack.c.b16 %v3293, %v3291
        %v3336 = vpack.c.b16 %v3296, %v3294
        %v3337 = vpack.c.b16 %v3297, %v3295
        %v3338 = vpack.c.b16 %v3300, %v3298
        %v3339 = vpack.c.b16 %v3301, %v3299
        %v3340 = vpack.c.b16 %v3304, %v3302
        %v3341 = vpack.c.b16 %v3305, %v3303
        %v3342 = vpack.c.b16 %v3308, %v3306
        %v3343 = vpack.c.b16 %v3309, %v3307
        %v3344 = vpack.c.b16 %v3312, %v3310
        %v3345 = vpack.c.b16 %v3313, %v3311
        %3378 = vmatprep.subr.bf16.mxu0 %v3315
        %3379 = vmatpush1.bf16.msra.mxu0 %v3314
        %3380 = vmatprep.subr.bf16.mxu0 %v3317
        %3381 = vmatpush1.bf16.msra.mxu0 %v3316
        %3382 = vmatprep.subr.bf16.mxu0 %v3319
        %3383 = vmatpush1.bf16.msra.mxu0 %v3318
        %3384 = vmatprep.subr.bf16.mxu0 %v3321
        %3385 = vmatpush1.bf16.msra.mxu0 %v3320
        %3386 = vmatprep.subr.bf16.mxu0 %v3323
        %3387 = vmatpush1.bf16.msra.mxu0 %v3322
        %3388 = vmatprep.subr.bf16.mxu0 %v3325
        %3389 = vmatpush1.bf16.msra.mxu0 %v3324
        %3390 = vmatprep.subr.bf16.mxu0 %v3327
        %3391 = vmatpush1.bf16.msra.mxu0 %v3326
        %3392 = vmatprep.subr.bf16.mxu0 %v3329
        %3393 = vmatpush1.bf16.msra.mxu0 %v3328
        %3394 = vmatprep.subr.bf16.mxu0 %v3331
        %3395 = vmatpush1.bf16.msra.mxu0 %v3330
        %3396 = vmatprep.subr.bf16.mxu0 %v3333
        %3397 = vmatpush1.bf16.msra.mxu0 %v3332
        %3398 = vmatprep.subr.bf16.mxu0 %v3335
        %3399 = vmatpush1.bf16.msra.mxu0 %v3334
        %3400 = vmatprep.subr.bf16.mxu0 %v3337
        %3401 = vmatpush1.bf16.msra.mxu0 %v3336
        %3402 = vmatprep.subr.bf16.mxu0 %v3339
        %3403 = vmatpush1.bf16.msra.mxu0 %v3338
        %3404 = vmatprep.subr.bf16.mxu0 %v3341
        %3405 = vmatpush1.bf16.msra.mxu0 %v3340
        %3406 = vmatprep.subr.bf16.mxu0 %v3343
        %3407 = vmatpush1.bf16.msra.mxu0 %v3342
        %3408 = vmatprep.subr.bf16.mxu0 %v3345
        %3409 = vmatpush1.bf16.msra.mxu0 %v3344
        %3410 = vmatprep.mubr.bf16.mxu0 %v3111
        %3411 = vmatmul.mubr.bf16.gmra.mrb[0].mxu0 %v3110
        %v3412 = vpop.f32.mrb[0].mxu0
        %v3413 = vadd.f32 %v3211, %v3412
        %v3414 = vpop.f32.mrb[0].mxu0
        %v3415 = vadd.f32 %v3215, %v3414
        %v3416 = vpop.f32.mrb[0].mxu0
        %v3417 = vadd.f32 %v3211, %v3416
        %v3418 = vpop.f32.mrb[0].mxu0
        %v3419 = vadd.f32 %v3215, %v3418
        %3420 = vmatprep.mubr.bf16.mxu0 %v3113
        %3421 = vmatmul.mubr.bf16.gmra.mrb[0].mxu0 %v3112
        %v3422 = vpop.f32.mrb[0].mxu0
        %v3423 = vadd.f32 %v3211, %v3422
        %v3424 = vpop.f32.mrb[0].mxu0
        %v3425 = vadd.f32 %v3215, %v3424
        %v3426 = vpop.f32.mrb[0].mxu0
        %v3427 = vadd.f32 %v3211, %v3426
        %v3428 = vpop.f32.mrb[0].mxu0
        %v3429 = vadd.f32 %v3215, %v3428
        %3430 = vmatprep.mubr.bf16.mxu0 %v3115
        %3431 = vmatmul.mubr.bf16.gmra.mrb[0].mxu0 %v3114
        %v3432 = vpop.f32.mrb[0].mxu0
        %v3433 = vadd.f32 %v3211, %v3432
        %v3434 = vpop.f32.mrb[0].mxu0
        %v3435 = vadd.f32 %v3215, %v3434
        %v3436 = vpop.f32.mrb[0].mxu0
        %v3437 = vadd.f32 %v3211, %v3436
        %v3438 = vpop.f32.mrb[0].mxu0
        %v3439 = vadd.f32 %v3215, %v3438
        %3440 = vmatprep.mubr.bf16.mxu0 %v3117
        %3441 = vmatmul.mubr.bf16.gmra.mrb[0].mxu0 %v3116
        %v3442 = vpop.f32.mrb[0].mxu0
        %v3443 = vadd.f32 %v3211, %v3442
        %v3444 = vpop.f32.mrb[0].mxu0
        %v3445 = vadd.f32 %v3215, %v3444
        %v3446 = vpop.f32.mrb[0].mxu0
        %v3447 = vadd.f32 %v3211, %v3446
        %v3448 = vpop.f32.mrb[0].mxu0
        %v3449 = vadd.f32 %v3215, %v3448
        %3450 = vmatprep.mubr.bf16.mxu0 %v3119
        %3451 = vmatmul.mubr.bf16.gmra.mrb[0].mxu0 %v3118
        %v3452 = vpop.f32.mrb[0].mxu0
        %v3453 = vadd.f32 %v3211, %v3452
        %v3454 = vpop.f32.mrb[0].mxu0
        %v3455 = vadd.f32 %v3215, %v3454
        %v3456 = vpop.f32.mrb[0].mxu0
        %v3457 = vadd.f32 %v3211, %v3456
        %v3458 = vpop.f32.mrb[0].mxu0
        %v3459 = vadd.f32 %v3215, %v3458
        %3460 = vmatprep.mubr.bf16.mxu0 %v3121
        %3461 = vmatmul.mubr.bf16.gmra.mrb[0].mxu0 %v3120
        %v3462 = vpop.f32.mrb[0].mxu0
        %v3463 = vadd.f32 %v3211, %v3462
        %v3464 = vpop.f32.mrb[0].mxu0
        %v3465 = vadd.f32 %v3215, %v3464
        %v3466 = vpop.f32.mrb[0].mxu0
        %v3467 = vadd.f32 %v3211, %v3466
        %v3468 = vpop.f32.mrb[0].mxu0
        %v3469 = vadd.f32 %v3215, %v3468
        %3470 = vmatprep.mubr.bf16.mxu0 %v3123
        %3471 = vmatmul.mubr.bf16.gmra.mrb[0].mxu0 %v3122
        %v3472 = vpop.f32.mrb[0].mxu0
        %v3473 = vadd.f32 %v3211, %v3472
        %v3474 = vpop.f32.mrb[0].mxu0
        %v3475 = vadd.f32 %v3215, %v3474
        %v3476 = vpop.f32.mrb[0].mxu0
        %v3477 = vadd.f32 %v3211, %v3476
        %v3478 = vpop.f32.mrb[0].mxu0
        %v3479 = vadd.f32 %v3215, %v3478
        %3480 = vmatprep.mubr.bf16.mxu0 %v3125
        %3481 = vmatmul.mubr.bf16.gmra.mrb[0].mxu0 %v3124
        %v3482 = vpop.f32.mrb[0].mxu0
        %v3483 = vadd.f32 %v3211, %v3482
        %v3484 = vpop.f32.mrb[0].mxu0
        %v3485 = vadd.f32 %v3215, %v3484
        %v3486 = vpop.f32.mrb[0].mxu0
        %v3487 = vadd.f32 %v3211, %v3486
        %v3488 = vpop.f32.mrb[0].mxu0
        %v3489 = vadd.f32 %v3215, %v3488
        %3490 = vmatprep.mubr.bf16.mxu0 %v3127
        %3491 = vmatmul.mubr.bf16.gmra.mrb[0].mxu0 %v3126
        %v3492 = vpop.f32.mrb[0].mxu0
        %v3493 = vadd.f32 %v3211, %v3492
        %v3494 = vpop.f32.mrb[0].mxu0
        %v3495 = vadd.f32 %v3215, %v3494
        %v3496 = vpop.f32.mrb[0].mxu0
        %v3497 = vadd.f32 %v3211, %v3496
        %v3498 = vpop.f32.mrb[0].mxu0
        %v3499 = vadd.f32 %v3215, %v3498
        %3500 = vmatprep.mubr.bf16.mxu0 %v3129
        %3501 = vmatmul.mubr.bf16.gmra.mrb[0].mxu0 %v3128
        %v3502 = vpop.f32.mrb[0].mxu0
        %v3503 = vadd.f32 %v3211, %v3502
        %v3504 = vpop.f32.mrb[0].mxu0
        %v3505 = vadd.f32 %v3215, %v3504
        %v3506 = vpop.f32.mrb[0].mxu0
        %v3507 = vadd.f32 %v3211, %v3506
        %v3508 = vpop.f32.mrb[0].mxu0
        %v3509 = vadd.f32 %v3215, %v3508
        %3510 = vmatprep.mubr.bf16.mxu0 %v3131
        %3511 = vmatmul.mubr.bf16.gmra.mrb[0].mxu0 %v3130
        %v3512 = vpop.f32.mrb[0].mxu0
        %v3513 = vadd.f32 %v3211, %v3512
        %v3514 = vpop.f32.mrb[0].mxu0
        %v3515 = vadd.f32 %v3215, %v3514
        %v3516 = vpop.f32.mrb[0].mxu0
        %v3517 = vadd.f32 %v3211, %v3516
        %v3518 = vpop.f32.mrb[0].mxu0
        %v3519 = vadd.f32 %v3215, %v3518
        %3520 = vmatprep.mubr.bf16.mxu0 %v3133
        %3521 = vmatmul.mubr.bf16.gmra.mrb[0].mxu0 %v3132
        %v3522 = vpop.f32.mrb[0].mxu0
        %v3523 = vadd.f32 %v3211, %v3522
        %v3524 = vpop.f32.mrb[0].mxu0
        %v3525 = vadd.f32 %v3215, %v3524
        %v3526 = vpop.f32.mrb[0].mxu0
        %v3527 = vadd.f32 %v3211, %v3526
        %v3528 = vpop.f32.mrb[0].mxu0
        %v3529 = vadd.f32 %v3215, %v3528
        %3530 = vmatprep.mubr.bf16.mxu0 %v3135
        %3531 = vmatmul.mubr.bf16.gmra.mrb[0].mxu0 %v3134
        %v3532 = vpop.f32.mrb[0].mxu0
        %v3533 = vadd.f32 %v3211, %v3532
        %v3534 = vpop.f32.mrb[0].mxu0
        %v3535 = vadd.f32 %v3215, %v3534
        %v3536 = vpop.f32.mrb[0].mxu0
        %v3537 = vadd.f32 %v3211, %v3536
        %v3538 = vpop.f32.mrb[0].mxu0
        %v3539 = vadd.f32 %v3215, %v3538
        %3540 = vmatprep.mubr.bf16.mxu0 %v3137
        %3541 = vmatmul.mubr.bf16.gmra.mrb[0].mxu0 %v3136
        %v3542 = vpop.f32.mrb[0].mxu0
        %v3543 = vadd.f32 %v3211, %v3542
        %v3544 = vpop.f32.mrb[0].mxu0
        %v3545 = vadd.f32 %v3215, %v3544
        %v3546 = vpop.f32.mrb[0].mxu0
        %v3547 = vadd.f32 %v3211, %v3546
        %v3548 = vpop.f32.mrb[0].mxu0
        %v3549 = vadd.f32 %v3215, %v3548
        %3550 = vmatprep.mubr.bf16.mxu0 %v3139
        %3551 = vmatmul.mubr.bf16.gmra.mrb[0].mxu0 %v3138
        %v3552 = vpop.f32.mrb[0].mxu0
        %v3553 = vadd.f32 %v3211, %v3552
        %v3554 = vpop.f32.mrb[0].mxu0
        %v3555 = vadd.f32 %v3215, %v3554
        %v3556 = vpop.f32.mrb[0].mxu0
        %v3557 = vadd.f32 %v3211, %v3556
        %v3558 = vpop.f32.mrb[0].mxu0
        %v3559 = vadd.f32 %v3215, %v3558
        %3560 = vmatprep.mubr.bf16.mxu0 %v3141
        %3561 = vmatmul.mubr.bf16.gmra.mrb[0].mxu0 %v3140
        %v3562 = vpop.f32.mrb[0].mxu0
        %v3563 = vadd.f32 %v3211, %v3562
        %v3564 = vpop.f32.mrb[0].mxu0
        %v3565 = vadd.f32 %v3215, %v3564
        %v3566 = vpop.f32.mrb[0].mxu0
        %v3567 = vadd.f32 %v3211, %v3566
        %v3568 = vpop.f32.mrb[0].mxu0
        %v3569 = vadd.f32 %v3215, %v3568
        %3570 = vmatprep.mubr.bf16.mxu0 %v3143
        %3571 = vmatmul.mubr.bf16.gmra.mrb[0].mxu0 %v3142
        %v3572 = vpop.f32.mrb[0].mxu0
        %v3573 = vadd.f32 %v3211, %v3572
        %v3574 = vpop.f32.mrb[0].mxu0
        %v3575 = vadd.f32 %v3215, %v3574
        %v3576 = vpop.f32.mrb[0].mxu0
        %v3577 = vadd.f32 %v3211, %v3576
        %v3578 = vpop.f32.mrb[0].mxu0
        %v3579 = vadd.f32 %v3215, %v3578
        %3580 = vmatprep.mubr.bf16.mxu0 %v3145
        %3581 = vmatmul.mubr.bf16.gmra.mrb[0].mxu0 %v3144
        %v3582 = vpop.f32.mrb[0].mxu0
        %v3583 = vadd.f32 %v3211, %v3582
        %v3584 = vpop.f32.mrb[0].mxu0
        %v3585 = vadd.f32 %v3215, %v3584
        %v3586 = vpop.f32.mrb[0].mxu0
        %v3587 = vadd.f32 %v3211, %v3586
        %v3588 = vpop.f32.mrb[0].mxu0
        %v3589 = vadd.f32 %v3215, %v3588
        %3590 = vmatprep.mubr.bf16.mxu0 %v3147
        %3591 = vmatmul.mubr.bf16.gmra.mrb[0].mxu0 %v3146
        %v3592 = vpop.f32.mrb[0].mxu0
        %v3593 = vadd.f32 %v3211, %v3592
        %v3594 = vpop.f32.mrb[0].mxu0
        %v3595 = vadd.f32 %v3215, %v3594
        %v3596 = vpop.f32.mrb[0].mxu0
        %v3597 = vadd.f32 %v3211, %v3596
        %v3598 = vpop.f32.mrb[0].mxu0
        %v3599 = vadd.f32 %v3215, %v3598
        %3600 = vmatprep.mubr.bf16.mxu0 %v3149
        %3601 = vmatmul.mubr.bf16.gmra.mrb[0].mxu0 %v3148
        %v3602 = vpop.f32.mrb[0].mxu0
        %v3603 = vadd.f32 %v3211, %v3602
        %v3604 = vpop.f32.mrb[0].mxu0
        %v3605 = vadd.f32 %v3215, %v3604
        %v3606 = vpop.f32.mrb[0].mxu0
        %v3607 = vadd.f32 %v3211, %v3606
        %v3608 = vpop.f32.mrb[0].mxu0
        %v3609 = vadd.f32 %v3215, %v3608
        %3610 = vmatprep.mubr.bf16.mxu0 %v3151
        %3611 = vmatmul.mubr.bf16.gmra.mrb[0].mxu0 %v3150
        %v3612 = vpop.f32.mrb[0].mxu0
        %v3613 = vadd.f32 %v3211, %v3612
        %v3614 = vpop.f32.mrb[0].mxu0
        %v3615 = vadd.f32 %v3215, %v3614
        %v3616 = vpop.f32.mrb[0].mxu0
        %v3617 = vadd.f32 %v3211, %v3616
        %v3618 = vpop.f32.mrb[0].mxu0
        %v3619 = vadd.f32 %v3215, %v3618
        %3620 = vmatprep.mubr.bf16.mxu0 %v3153
        %3621 = vmatmul.mubr.bf16.gmra.mrb[0].mxu0 %v3152
        %v3622 = vpop.f32.mrb[0].mxu0
        %v3623 = vadd.f32 %v3211, %v3622
        %v3624 = vpop.f32.mrb[0].mxu0
        %v3625 = vadd.f32 %v3215, %v3624
        %v3626 = vpop.f32.mrb[0].mxu0
        %v3627 = vadd.f32 %v3211, %v3626
        %v3628 = vpop.f32.mrb[0].mxu0
        %v3629 = vadd.f32 %v3215, %v3628
        %3630 = vmatprep.mubr.bf16.mxu0 %v3155
        %3631 = vmatmul.mubr.bf16.gmra.mrb[0].mxu0 %v3154
        %v3632 = vpop.f32.mrb[0].mxu0
        %v3633 = vadd.f32 %v3211, %v3632
        %v3634 = vpop.f32.mrb[0].mxu0
        %v3635 = vadd.f32 %v3215, %v3634
        %v3636 = vpop.f32.mrb[0].mxu0
        %v3637 = vadd.f32 %v3211, %v3636
        %v3638 = vpop.f32.mrb[0].mxu0
        %v3639 = vadd.f32 %v3215, %v3638
        %3640 = vmatprep.mubr.bf16.mxu0 %v3157
        %3641 = vmatmul.mubr.bf16.gmra.mrb[0].mxu0 %v3156
        %v3642 = vpop.f32.mrb[0].mxu0
        %v3643 = vadd.f32 %v3211, %v3642
        %v3644 = vpop.f32.mrb[0].mxu0
        %v3645 = vadd.f32 %v3215, %v3644
        %v3646 = vpop.f32.mrb[0].mxu0
        %v3647 = vadd.f32 %v3211, %v3646
        %v3648 = vpop.f32.mrb[0].mxu0
        %v3649 = vadd.f32 %v3215, %v3648
        %3650 = vmatprep.mubr.bf16.mxu0 %v3159
        %3651 = vmatmul.mubr.bf16.gmra.mrb[0].mxu0 %v3158
        %v3652 = vpop.f32.mrb[0].mxu0
        %v3653 = vadd.f32 %v3211, %v3652
        %v3654 = vpop.f32.mrb[0].mxu0
        %v3655 = vadd.f32 %v3215, %v3654
        %v3656 = vpop.f32.mrb[0].mxu0
        %v3657 = vadd.f32 %v3211, %v3656
        %v3658 = vpop.f32.mrb[0].mxu0
        %v3659 = vadd.f32 %v3215, %v3658
        %3660 = vmatprep.mubr.bf16.mxu0 %v3161
        %3661 = vmatmul.mubr.bf16.gmra.mrb[0].mxu0 %v3160
        %v3662 = vpop.f32.mrb[0].mxu0
        %v3663 = vadd.f32 %v3211, %v3662
        %v3664 = vpop.f32.mrb[0].mxu0
        %v3665 = vadd.f32 %v3215, %v3664
        %v3666 = vpop.f32.mrb[0].mxu0
        %v3667 = vadd.f32 %v3211, %v3666
        %v3668 = vpop.f32.mrb[0].mxu0
        %v3669 = vadd.f32 %v3215, %v3668
        %3670 = vmatprep.mubr.bf16.mxu0 %v3163
        %3671 = vmatmul.mubr.bf16.gmra.mrb[0].mxu0 %v3162
        %v3672 = vpop.f32.mrb[0].mxu0
        %v3673 = vadd.f32 %v3211, %v3672
        %v3674 = vpop.f32.mrb[0].mxu0
        %v3675 = vadd.f32 %v3215, %v3674
        %v3676 = vpop.f32.mrb[0].mxu0
        %v3677 = vadd.f32 %v3211, %v3676
        %v3678 = vpop.f32.mrb[0].mxu0
        %v3679 = vadd.f32 %v3215, %v3678
        %3680 = vmatprep.mubr.bf16.mxu0 %v3165
        %3681 = vmatmul.mubr.bf16.gmra.mrb[0].mxu0 %v3164
        %v3682 = vpop.f32.mrb[0].mxu0
        %v3683 = vadd.f32 %v3211, %v3682
        %v3684 = vpop.f32.mrb[0].mxu0
        %v3685 = vadd.f32 %v3215, %v3684
        %v3686 = vpop.f32.mrb[0].mxu0
        %v3687 = vadd.f32 %v3211, %v3686
        %v3688 = vpop.f32.mrb[0].mxu0
        %v3689 = vadd.f32 %v3215, %v3688
        %3690 = vmatprep.mubr.bf16.mxu0 %v3167
        %3691 = vmatmul.mubr.bf16.gmra.mrb[0].mxu0 %v3166
        %v3692 = vpop.f32.mrb[0].mxu0
        %v3693 = vadd.f32 %v3211, %v3692
        %v3694 = vpop.f32.mrb[0].mxu0
        %v3695 = vadd.f32 %v3215, %v3694
        %v3696 = vpop.f32.mrb[0].mxu0
        %v3697 = vadd.f32 %v3211, %v3696
        %v3698 = vpop.f32.mrb[0].mxu0
        %v3699 = vadd.f32 %v3215, %v3698
        %3700 = vmatprep.mubr.bf16.mxu0 %v3169
        %3701 = vmatmul.mubr.bf16.gmra.mrb[0].mxu0 %v3168
        %v3702 = vpop.f32.mrb[0].mxu0
        %v3703 = vadd.f32 %v3211, %v3702
        %v3704 = vpop.f32.mrb[0].mxu0
        %v3705 = vadd.f32 %v3215, %v3704
        %v3706 = vpop.f32.mrb[0].mxu0
        %v3707 = vadd.f32 %v3211, %v3706
        %v3708 = vpop.f32.mrb[0].mxu0
        %v3709 = vadd.f32 %v3215, %v3708
        %3710 = vmatprep.mubr.bf16.mxu0 %v3171
        %3711 = vmatmul.mubr.bf16.gmra.mrb[0].mxu0 %v3170
        %v3712 = vpop.f32.mrb[0].mxu0
        %v3713 = vadd.f32 %v3211, %v3712
        %v3714 = vpop.f32.mrb[0].mxu0
        %v3715 = vadd.f32 %v3215, %v3714
        %v3716 = vpop.f32.mrb[0].mxu0
        %v3717 = vadd.f32 %v3211, %v3716
        %v3718 = vpop.f32.mrb[0].mxu0
        %v3719 = vadd.f32 %v3215, %v3718
        %3720 = vmatprep.mubr.bf16.mxu0 %v3173
        %3721 = vmatmul.mubr.bf16.gmra.mrb[0].mxu0 %v3172
        %v3722 = vpop.f32.mrb[0].mxu0
        %v3723 = vadd.f32 %v3211, %v3722
        %v3724 = vpop.f32.mrb[0].mxu0
        %v3725 = vadd.f32 %v3215, %v3724
        %v3726 = vpop.f32.mrb[0].mxu0
        %v3727 = vadd.f32 %v3211, %v3726
        %v3728 = vpop.f32.mrb[0].mxu0
        %v3729 = vadd.f32 %v3215, %v3728
        %3730 = vdwg.mxu0
        %v3731 = vmul.f32 %v3413, 0.5
        %v3732 = vmul.f32 %v3415, 0.5
        %v3733 = vmul.f32 %v3417, 0.5
        %v3734 = vmul.f32 %v3419, 0.5
        %v3735 = vmul.f32 %v3423, 0.5
        %v3736 = vmul.f32 %v3425, 0.5
        %v3737 = vmul.f32 %v3427, 0.5
        %v3738 = vmul.f32 %v3429, 0.5
        %v3739 = vmul.f32 %v3433, 0.5
        %v3740 = vmul.f32 %v3435, 0.5
        %v3741 = vmul.f32 %v3437, 0.5
        %v3742 = vmul.f32 %v3439, 0.5
        %v3743 = vmul.f32 %v3443, 0.5
        %v3744 = vmul.f32 %v3445, 0.5
        %v3745 = vmul.f32 %v3447, 0.5
        %v3746 = vmul.f32 %v3449, 0.5
        %v3747 = vmul.f32 %v3453, 0.5
        %v3748 = vmul.f32 %v3455, 0.5
        %v3749 = vmul.f32 %v3457, 0.5
        %v3750 = vmul.f32 %v3459, 0.5
        %v3751 = vmul.f32 %v3463, 0.5
        %v3752 = vmul.f32 %v3465, 0.5
        %v3753 = vmul.f32 %v3467, 0.5
        %v3754 = vmul.f32 %v3469, 0.5
        %v3755 = vmul.f32 %v3473, 0.5
        %v3756 = vmul.f32 %v3475, 0.5
        %v3757 = vmul.f32 %v3477, 0.5
        %v3758 = vmul.f32 %v3479, 0.5
        %v3759 = vmul.f32 %v3483, 0.5
        %v3760 = vmul.f32 %v3485, 0.5
        %v3761 = vmul.f32 %v3487, 0.5
        %v3762 = vmul.f32 %v3489, 0.5
        %v3763 = vmul.f32 %v3493, 0.5
        %v3764 = vmul.f32 %v3495, 0.5
        %v3765 = vmul.f32 %v3497, 0.5
        %v3766 = vmul.f32 %v3499, 0.5
        %v3767 = vmul.f32 %v3503, 0.5
        %v3768 = vmul.f32 %v3505, 0.5
        %v3769 = vmul.f32 %v3507, 0.5
        %v3770 = vmul.f32 %v3509, 0.5
        %v3771 = vmul.f32 %v3513, 0.5
        %v3772 = vmul.f32 %v3515, 0.5
        %v3773 = vmul.f32 %v3517, 0.5
        %v3774 = vmul.f32 %v3519, 0.5
        %v3775 = vmul.f32 %v3523, 0.5
        %v3776 = vmul.f32 %v3525, 0.5
        %v3777 = vmul.f32 %v3527, 0.5
        %v3778 = vmul.f32 %v3529, 0.5
        %v3779 = vmul.f32 %v3533, 0.5
        %v3780 = vmul.f32 %v3535, 0.5
        %v3781 = vmul.f32 %v3537, 0.5
        %v3782 = vmul.f32 %v3539, 0.5
        %v3783 = vmul.f32 %v3543, 0.5
        %v3784 = vmul.f32 %v3545, 0.5
        %v3785 = vmul.f32 %v3547, 0.5
        %v3786 = vmul.f32 %v3549, 0.5
        %v3787 = vmul.f32 %v3553, 0.5
        %v3788 = vmul.f32 %v3555, 0.5
        %v3789 = vmul.f32 %v3557, 0.5
        %v3790 = vmul.f32 %v3559, 0.5
        %v3791 = vmul.f32 %v3563, 0.5
        %v3792 = vmul.f32 %v3565, 0.5
        %v3793 = vmul.f32 %v3567, 0.5
        %v3794 = vmul.f32 %v3569, 0.5
        %v3795 = vmul.f32 %v3573, 0.5
        %v3796 = vmul.f32 %v3575, 0.5
        %v3797 = vmul.f32 %v3577, 0.5
        %v3798 = vmul.f32 %v3579, 0.5
        %v3799 = vmul.f32 %v3583, 0.5
        %v3800 = vmul.f32 %v3585, 0.5
        %v3801 = vmul.f32 %v3587, 0.5
        %v3802 = vmul.f32 %v3589, 0.5
        %v3803 = vmul.f32 %v3593, 0.5
        %v3804 = vmul.f32 %v3595, 0.5
        %v3805 = vmul.f32 %v3597, 0.5
        %v3806 = vmul.f32 %v3599, 0.5
        %v3807 = vmul.f32 %v3603, 0.5
        %v3808 = vmul.f32 %v3605, 0.5
        %v3809 = vmul.f32 %v3607, 0.5
        %v3810 = vmul.f32 %v3609, 0.5
        %v3811 = vmul.f32 %v3613, 0.5
        %v3812 = vmul.f32 %v3615, 0.5
        %v3813 = vmul.f32 %v3617, 0.5
        %v3814 = vmul.f32 %v3619, 0.5
        %v3815 = vmul.f32 %v3623, 0.5
        %v3816 = vmul.f32 %v3625, 0.5
        %v3817 = vmul.f32 %v3627, 0.5
        %v3818 = vmul.f32 %v3629, 0.5
        %v3819 = vmul.f32 %v3633, 0.5
        %v3820 = vmul.f32 %v3635, 0.5
        %v3821 = vmul.f32 %v3637, 0.5
        %v3822 = vmul.f32 %v3639, 0.5
        %v3823 = vmul.f32 %v3643, 0.5
        %v3824 = vmul.f32 %v3645, 0.5
        %v3825 = vmul.f32 %v3647, 0.5
        %v3826 = vmul.f32 %v3649, 0.5
        %v3827 = vmul.f32 %v3653, 0.5
        %v3828 = vmul.f32 %v3655, 0.5
        %v3829 = vmul.f32 %v3657, 0.5
        %v3830 = vmul.f32 %v3659, 0.5
        %v3831 = vmul.f32 %v3663, 0.5
        %v3832 = vmul.f32 %v3665, 0.5
        %v3833 = vmul.f32 %v3667, 0.5
        %v3834 = vmul.f32 %v3669, 0.5
        %v3835 = vmul.f32 %v3673, 0.5
        %v3836 = vmul.f32 %v3675, 0.5
        %v3837 = vmul.f32 %v3677, 0.5
        %v3838 = vmul.f32 %v3679, 0.5
        %v3839 = vmul.f32 %v3683, 0.5
        %v3840 = vmul.f32 %v3685, 0.5
        %v3841 = vmul.f32 %v3687, 0.5
        %v3842 = vmul.f32 %v3689, 0.5
        %v3843 = vmul.f32 %v3693, 0.5
        %v3844 = vmul.f32 %v3695, 0.5
        %v3845 = vmul.f32 %v3697, 0.5
        %v3846 = vmul.f32 %v3699, 0.5
        %v3847 = vmul.f32 %v3703, 0.5
        %v3848 = vmul.f32 %v3705, 0.5
        %v3849 = vmul.f32 %v3707, 0.5
        %v3850 = vmul.f32 %v3709, 0.5
        %v3851 = vmul.f32 %v3713, 0.5
        %v3852 = vmul.f32 %v3715, 0.5
        %v3853 = vmul.f32 %v3717, 0.5
        %v3854 = vmul.f32 %v3719, 0.5
        %v3855 = vmul.f32 %v3723, 0.5
        %v3856 = vmul.f32 %v3725, 0.5
        %v3857 = vmul.f32 %v3727, 0.5
        %v3858 = vmul.f32 %v3729, 0.5
        %v3859 = vtanh.pop %v3731
        %v3860 = vtanh.pop %v3732
        %v3861 = vtanh.pop %v3733
        %v3862 = vtanh.pop %v3734
        %v3863 = vtanh.pop %v3735
        %v3864 = vtanh.pop %v3736
        %v3865 = vtanh.pop %v3737
        %v3866 = vtanh.pop %v3738
        %v3867 = vtanh.pop %v3739
        %v3868 = vtanh.pop %v3740
        %v3869 = vtanh.pop %v3741
        %v3870 = vtanh.pop %v3742
        %v3871 = vtanh.pop %v3743
        %v3872 = vtanh.pop %v3744
        %v3873 = vtanh.pop %v3745
        %v3874 = vtanh.pop %v3746
        %v3875 = vtanh.pop %v3747
        %v3876 = vtanh.pop %v3748
        %v3877 = vtanh.pop %v3749
        %v3878 = vtanh.pop %v3750
        %v3879 = vtanh.pop %v3751
        %v3880 = vtanh.pop %v3752
        %v3881 = vtanh.pop %v3753
        %v3882 = vtanh.pop %v3754
        %v3883 = vtanh.pop %v3755
        %v3884 = vtanh.pop %v3756
        %v3885 = vtanh.pop %v3757
        %v3886 = vtanh.pop %v3758
        %v3887 = vtanh.pop %v3759
        %v3888 = vtanh.pop %v3760
        %v3889 = vtanh.pop %v3761
        %v3890 = vtanh.pop %v3762
        %v3891 = vtanh.pop %v3763
        %v3892 = vtanh.pop %v3764
        %v3893 = vtanh.pop %v3765
        %v3894 = vtanh.pop %v3766
        %v3895 = vtanh.pop %v3767
        %v3896 = vtanh.pop %v3768
        %v3897 = vtanh.pop %v3769
        %v3898 = vtanh.pop %v3770
        %v3899 = vtanh.pop %v3771
        %v3900 = vtanh.pop %v3772
        %v3901 = vtanh.pop %v3773
        %v3902 = vtanh.pop %v3774
        %v3903 = vtanh.pop %v3775
        %v3904 = vtanh.pop %v3776
        %v3905 = vtanh.pop %v3777
        %v3906 = vtanh.pop %v3778
        %v3907 = vtanh.pop %v3779
        %v3908 = vtanh.pop %v3780
        %v3909 = vtanh.pop %v3781
        %v3910 = vtanh.pop %v3782
        %v3911 = vtanh.pop %v3783
        %v3912 = vtanh.pop %v3784
        %v3913 = vtanh.pop %v3785
        %v3914 = vtanh.pop %v3786
        %v3915 = vtanh.pop %v3787
        %v3916 = vtanh.pop %v3788
        %v3917 = vtanh.pop %v3789
        %v3918 = vtanh.pop %v3790
        %v3919 = vtanh.pop %v3791
        %v3920 = vtanh.pop %v3792
        %v3921 = vtanh.pop %v3793
        %v3922 = vtanh.pop %v3794
        %v3923 = vtanh.pop %v3795
        %v3924 = vtanh.pop %v3796
        %v3925 = vtanh.pop %v3797
        %v3926 = vtanh.pop %v3798
        %v3927 = vtanh.pop %v3799
        %v3928 = vtanh.pop %v3800
        %v3929 = vtanh.pop %v3801
        %v3930 = vtanh.pop %v3802
        %v3931 = vtanh.pop %v3803
        %v3932 = vtanh.pop %v3804
        %v3933 = vtanh.pop %v3805
        %v3934 = vtanh.pop %v3806
        %v3935 = vtanh.pop %v3807
        %v3936 = vtanh.pop %v3808
        %v3937 = vtanh.pop %v3809
        %v3938 = vtanh.pop %v3810
        %v3939 = vtanh.pop %v3811
        %v3940 = vtanh.pop %v3812
        %v3941 = vtanh.pop %v3813
        %v3942 = vtanh.pop %v3814
        %v3943 = vtanh.pop %v3815
        %v3944 = vtanh.pop %v3816
        %v3945 = vtanh.pop %v3817
        %v3946 = vtanh.pop %v3818
        %v3947 = vtanh.pop %v3819
        %v3948 = vtanh.pop %v3820
        %v3949 = vtanh.pop %v3821
        %v3950 = vtanh.pop %v3822
        %v3951 = vtanh.pop %v3823
        %v3952 = vtanh.pop %v3824
        %v3953 = vtanh.pop %v3825
        %v3954 = vtanh.pop %v3826
        %v3955 = vtanh.pop %v3827
        %v3956 = vtanh.pop %v3828
        %v3957 = vtanh.pop %v3829
        %v3958 = vtanh.pop %v3830
        %v3959 = vtanh.pop %v3831
        %v3960 = vtanh.pop %v3832
        %v3961 = vtanh.pop %v3833
        %v3962 = vtanh.pop %v3834
        %v3963 = vtanh.pop %v3835
        %v3964 = vtanh.pop %v3836
        %v3965 = vtanh.pop %v3837
        %v3966 = vtanh.pop %v3838
        %v3967 = vtanh.pop %v3839
        %v3968 = vtanh.pop %v3840
        %v3969 = vtanh.pop %v3841
        %v3970 = vtanh.pop %v3842
        %v3971 = vtanh.pop %v3843
        %v3972 = vtanh.pop %v3844
        %v3973 = vtanh.pop %v3845
        %v3974 = vtanh.pop %v3846
        %v3975 = vtanh.pop %v3847
        %v3976 = vtanh.pop %v3848
        %v3977 = vtanh.pop %v3849
        %v3978 = vtanh.pop %v3850
        %v3979 = vtanh.pop %v3851
        %v3980 = vtanh.pop %v3852
        %v3981 = vtanh.pop %v3853
        %v3982 = vtanh.pop %v3854
        %v3983 = vtanh.pop %v3855
        %v3984 = vtanh.pop %v3856
        %v3985 = vtanh.pop %v3857
        %v3986 = vtanh.pop %v3858
        %v3987 = vadd.f32 %v3859, 1.0
        %v3988 = vadd.f32 %v3860, 1.0
        %v3989 = vadd.f32 %v3861, 1.0
        %v3990 = vadd.f32 %v3862, 1.0
        %v3991 = vadd.f32 %v3863, 1.0
        %v3992 = vadd.f32 %v3864, 1.0
        %v3993 = vadd.f32 %v3865, 1.0
        %v3994 = vadd.f32 %v3866, 1.0
        %v3995 = vadd.f32 %v3867, 1.0
        %v3996 = vadd.f32 %v3868, 1.0
        %v3997 = vadd.f32 %v3869, 1.0
        %v3998 = vadd.f32 %v3870, 1.0
        %v3999 = vadd.f32 %v3871, 1.0
        %v4000 = vadd.f32 %v3872, 1.0
        %v4001 = vadd.f32 %v3873, 1.0
        %v4002 = vadd.f32 %v3874, 1.0
        %v4003 = vadd.f32 %v3875, 1.0
        %v4004 = vadd.f32 %v3876, 1.0
        %v4005 = vadd.f32 %v3877, 1.0
        %v4006 = vadd.f32 %v3878, 1.0
        %v4007 = vadd.f32 %v3879, 1.0
        %v4008 = vadd.f32 %v3880, 1.0
        %v4009 = vadd.f32 %v3881, 1.0
        %v4010 = vadd.f32 %v3882, 1.0
        %v4011 = vadd.f32 %v3883, 1.0
        %v4012 = vadd.f32 %v3884, 1.0
        %v4013 = vadd.f32 %v3885, 1.0
        %v4014 = vadd.f32 %v3886, 1.0
        %v4015 = vadd.f32 %v3887, 1.0
        %v4016 = vadd.f32 %v3888, 1.0
        %v4017 = vadd.f32 %v3889, 1.0
        %v4018 = vadd.f32 %v3890, 1.0
        %v4019 = vadd.f32 %v3891, 1.0
        %v4020 = vadd.f32 %v3892, 1.0
        %v4021 = vadd.f32 %v3893, 1.0
        %v4022 = vadd.f32 %v3894, 1.0
        %v4023 = vadd.f32 %v3895, 1.0
        %v4024 = vadd.f32 %v3896, 1.0
        %v4025 = vadd.f32 %v3897, 1.0
        %v4026 = vadd.f32 %v3898, 1.0
        %v4027 = vadd.f32 %v3899, 1.0
        %v4028 = vadd.f32 %v3900, 1.0
        %v4029 = vadd.f32 %v3901, 1.0
        %v4030 = vadd.f32 %v3902, 1.0
        %v4031 = vadd.f32 %v3903, 1.0
        %v4032 = vadd.f32 %v3904, 1.0
        %v4033 = vadd.f32 %v3905, 1.0
        %v4034 = vadd.f32 %v3906, 1.0
        %v4035 = vadd.f32 %v3907, 1.0
        %v4036 = vadd.f32 %v3908, 1.0
        %v4037 = vadd.f32 %v3909, 1.0
        %v4038 = vadd.f32 %v3910, 1.0
        %v4039 = vadd.f32 %v3911, 1.0
        %v4040 = vadd.f32 %v3912, 1.0
        %v4041 = vadd.f32 %v3913, 1.0
        %v4042 = vadd.f32 %v3914, 1.0
        %v4043 = vadd.f32 %v3915, 1.0
        %v4044 = vadd.f32 %v3916, 1.0
        %v4045 = vadd.f32 %v3917, 1.0
        %v4046 = vadd.f32 %v3918, 1.0
        %v4047 = vadd.f32 %v3919, 1.0
        %v4048 = vadd.f32 %v3920, 1.0
        %v4049 = vadd.f32 %v3921, 1.0
        %v4050 = vadd.f32 %v3922, 1.0
        %v4051 = vadd.f32 %v3923, 1.0
        %v4052 = vadd.f32 %v3924, 1.0
        %v4053 = vadd.f32 %v3925, 1.0
        %v4054 = vadd.f32 %v3926, 1.0
        %v4055 = vadd.f32 %v3927, 1.0
        %v4056 = vadd.f32 %v3928, 1.0
        %v4057 = vadd.f32 %v3929, 1.0
        %v4058 = vadd.f32 %v3930, 1.0
        %v4059 = vadd.f32 %v3931, 1.0
        %v4060 = vadd.f32 %v3932, 1.0
        %v4061 = vadd.f32 %v3933, 1.0
        %v4062 = vadd.f32 %v3934, 1.0
        %v4063 = vadd.f32 %v3935, 1.0
        %v4064 = vadd.f32 %v3936, 1.0
        %v4065 = vadd.f32 %v3937, 1.0
        %v4066 = vadd.f32 %v3938, 1.0
        %v4067 = vadd.f32 %v3939, 1.0
        %v4068 = vadd.f32 %v3940, 1.0
        %v4069 = vadd.f32 %v3941, 1.0
        %v4070 = vadd.f32 %v3942, 1.0
        %v4071 = vadd.f32 %v3943, 1.0
        %v4072 = vadd.f32 %v3944, 1.0
        %v4073 = vadd.f32 %v3945, 1.0
        %v4074 = vadd.f32 %v3946, 1.0
        %v4075 = vadd.f32 %v3947, 1.0
        %v4076 = vadd.f32 %v3948, 1.0
        %v4077 = vadd.f32 %v3949, 1.0
        %v4078 = vadd.f32 %v3950, 1.0
        %v4079 = vadd.f32 %v3951, 1.0
        %v4080 = vadd.f32 %v3952, 1.0
        %v4081 = vadd.f32 %v3953, 1.0
        %v4082 = vadd.f32 %v3954, 1.0
        %v4083 = vadd.f32 %v3955, 1.0
        %v4084 = vadd.f32 %v3956, 1.0
        %v4085 = vadd.f32 %v3957, 1.0
        %v4086 = vadd.f32 %v3958, 1.0
        %v4087 = vadd.f32 %v3959, 1.0
        %v4088 = vadd.f32 %v3960, 1.0
        %v4089 = vadd.f32 %v3961, 1.0
        %v4090 = vadd.f32 %v3962, 1.0
        %v4091 = vadd.f32 %v3963, 1.0
        %v4092 = vadd.f32 %v3964, 1.0
        %v4093 = vadd.f32 %v3965, 1.0
        %v4094 = vadd.f32 %v3966, 1.0
        %v4095 = vadd.f32 %v3967, 1.0
        %v4096 = vadd.f32 %v3968, 1.0
        %v4097 = vadd.f32 %v3969, 1.0
        %v4098 = vadd.f32 %v3970, 1.0
        %v4099 = vadd.f32 %v3971, 1.0
        %v4100 = vadd.f32 %v3972, 1.0
        %v4101 = vadd.f32 %v3973, 1.0
        %v4102 = vadd.f32 %v3974, 1.0
        %v4103 = vadd.f32 %v3975, 1.0
        %v4104 = vadd.f32 %v3976, 1.0
        %v4105 = vadd.f32 %v3977, 1.0
        %v4106 = vadd.f32 %v3978, 1.0
        %v4107 = vadd.f32 %v3979, 1.0
        %v4108 = vadd.f32 %v3980, 1.0
        %v4109 = vadd.f32 %v3981, 1.0
        %v4110 = vadd.f32 %v3982, 1.0
        %v4111 = vadd.f32 %v3983, 1.0
        %v4112 = vadd.f32 %v3984, 1.0
        %v4113 = vadd.f32 %v3985, 1.0
        %v4114 = vadd.f32 %v3986, 1.0
        %v4115 = vmul.f32 %v3731, %v3987
        %v4116 = vmul.f32 %v3732, %v3988
        %v4117 = vmul.f32 %v3733, %v3989
        %v4118 = vmul.f32 %v3734, %v3990
        %v4119 = vmul.f32 %v3735, %v3991
        %v4120 = vmul.f32 %v3736, %v3992
        %v4121 = vmul.f32 %v3737, %v3993
        %v4122 = vmul.f32 %v3738, %v3994
        %v4123 = vmul.f32 %v3739, %v3995
        %v4124 = vmul.f32 %v3740, %v3996
        %v4125 = vmul.f32 %v3741, %v3997
        %v4126 = vmul.f32 %v3742, %v3998
        %v4127 = vmul.f32 %v3743, %v3999
        %v4128 = vmul.f32 %v3744, %v4000
        %v4129 = vmul.f32 %v3745, %v4001
        %v4130 = vmul.f32 %v3746, %v4002
        %v4131 = vmul.f32 %v3747, %v4003
        %v4132 = vmul.f32 %v3748, %v4004
        %v4133 = vmul.f32 %v3749, %v4005
        %v4134 = vmul.f32 %v3750, %v4006
        %v4135 = vmul.f32 %v3751, %v4007
        %v4136 = vmul.f32 %v3752, %v4008
        %v4137 = vmul.f32 %v3753, %v4009
        %v4138 = vmul.f32 %v3754, %v4010
        %v4139 = vmul.f32 %v3755, %v4011
        %v4140 = vmul.f32 %v3756, %v4012
        %v4141 = vmul.f32 %v3757, %v4013
        %v4142 = vmul.f32 %v3758, %v4014
        %v4143 = vmul.f32 %v3759, %v4015
        %v4144 = vmul.f32 %v3760, %v4016
        %v4145 = vmul.f32 %v3761, %v4017
        %v4146 = vmul.f32 %v3762, %v4018
        %v4147 = vmul.f32 %v3763, %v4019
        %v4148 = vmul.f32 %v3764, %v4020
        %v4149 = vmul.f32 %v3765, %v4021
        %v4150 = vmul.f32 %v3766, %v4022
        %v4151 = vmul.f32 %v3767, %v4023
        %v4152 = vmul.f32 %v3768, %v4024
        %v4153 = vmul.f32 %v3769, %v4025
        %v4154 = vmul.f32 %v3770, %v4026
        %v4155 = vmul.f32 %v3771, %v4027
        %v4156 = vmul.f32 %v3772, %v4028
        %v4157 = vmul.f32 %v3773, %v4029
        %v4158 = vmul.f32 %v3774, %v4030
        %v4159 = vmul.f32 %v3775, %v4031
        %v4160 = vmul.f32 %v3776, %v4032
        %v4161 = vmul.f32 %v3777, %v4033
        %v4162 = vmul.f32 %v3778, %v4034
        %v4163 = vmul.f32 %v3779, %v4035
        %v4164 = vmul.f32 %v3780, %v4036
        %v4165 = vmul.f32 %v3781, %v4037
        %v4166 = vmul.f32 %v3782, %v4038
        %v4167 = vmul.f32 %v3783, %v4039
        %v4168 = vmul.f32 %v3784, %v4040
        %v4169 = vmul.f32 %v3785, %v4041
        %v4170 = vmul.f32 %v3786, %v4042
        %v4171 = vmul.f32 %v3787, %v4043
        %v4172 = vmul.f32 %v3788, %v4044
        %v4173 = vmul.f32 %v3789, %v4045
        %v4174 = vmul.f32 %v3790, %v4046
        %v4175 = vmul.f32 %v3791, %v4047
        %v4176 = vmul.f32 %v3792, %v4048
        %v4177 = vmul.f32 %v3793, %v4049
        %v4178 = vmul.f32 %v3794, %v4050
        %v4179 = vmul.f32 %v3795, %v4051
        %v4180 = vmul.f32 %v3796, %v4052
        %v4181 = vmul.f32 %v3797, %v4053
        %v4182 = vmul.f32 %v3798, %v4054
        %v4183 = vmul.f32 %v3799, %v4055
        %v4184 = vmul.f32 %v3800, %v4056
        %v4185 = vmul.f32 %v3801, %v4057
        %v4186 = vmul.f32 %v3802, %v4058
        %v4187 = vmul.f32 %v3803, %v4059
        %v4188 = vmul.f32 %v3804, %v4060
        %v4189 = vmul.f32 %v3805, %v4061
        %v4190 = vmul.f32 %v3806, %v4062
        %v4191 = vmul.f32 %v3807, %v4063
        %v4192 = vmul.f32 %v3808, %v4064
        %v4193 = vmul.f32 %v3809, %v4065
        %v4194 = vmul.f32 %v3810, %v4066
        %v4195 = vmul.f32 %v3811, %v4067
        %v4196 = vmul.f32 %v3812, %v4068
        %v4197 = vmul.f32 %v3813, %v4069
        %v4198 = vmul.f32 %v3814, %v4070
        %v4199 = vmul.f32 %v3815, %v4071
        %v4200 = vmul.f32 %v3816, %v4072
        %v4201 = vmul.f32 %v3817, %v4073
        %v4202 = vmul.f32 %v3818, %v4074
        %v4203 = vmul.f32 %v3819, %v4075
        %v4204 = vmul.f32 %v3820, %v4076
        %v4205 = vmul.f32 %v3821, %v4077
        %v4206 = vmul.f32 %v3822, %v4078
        %v4207 = vmul.f32 %v3823, %v4079
        %v4208 = vmul.f32 %v3824, %v4080
        %v4209 = vmul.f32 %v3825, %v4081
        %v4210 = vmul.f32 %v3826, %v4082
        %v4211 = vmul.f32 %v3827, %v4083
        %v4212 = vmul.f32 %v3828, %v4084
        %v4213 = vmul.f32 %v3829, %v4085
        %v4214 = vmul.f32 %v3830, %v4086
        %v4215 = vmul.f32 %v3831, %v4087
        %v4216 = vmul.f32 %v3832, %v4088
        %v4217 = vmul.f32 %v3833, %v4089
        %v4218 = vmul.f32 %v3834, %v4090
        %v4219 = vmul.f32 %v3835, %v4091
        %v4220 = vmul.f32 %v3836, %v4092
        %v4221 = vmul.f32 %v3837, %v4093
        %v4222 = vmul.f32 %v3838, %v4094
        %v4223 = vmul.f32 %v3839, %v4095
        %v4224 = vmul.f32 %v3840, %v4096
        %v4225 = vmul.f32 %v3841, %v4097
        %v4226 = vmul.f32 %v3842, %v4098
        %v4227 = vmul.f32 %v3843, %v4099
        %v4228 = vmul.f32 %v3844, %v4100
        %v4229 = vmul.f32 %v3845, %v4101
        %v4230 = vmul.f32 %v3846, %v4102
        %v4231 = vmul.f32 %v3847, %v4103
        %v4232 = vmul.f32 %v3848, %v4104
        %v4233 = vmul.f32 %v3849, %v4105
        %v4234 = vmul.f32 %v3850, %v4106
        %v4235 = vmul.f32 %v3851, %v4107
        %v4236 = vmul.f32 %v3852, %v4108
        %v4237 = vmul.f32 %v3853, %v4109
        %v4238 = vmul.f32 %v3854, %v4110
        %v4239 = vmul.f32 %v3855, %v4111
        %v4240 = vmul.f32 %v3856, %v4112
        %v4241 = vmul.f32 %v3857, %v4113
        %v4242 = vmul.f32 %v3858, %v4114
        %v4243 = vpack.c.bf16 %v4117, %v4115
        %v4244 = vpack.c.bf16 %v4118, %v4116
        %v4245 = vpack.c.bf16 %v4121, %v4119
        %v4246 = vpack.c.bf16 %v4122, %v4120
        %v4247 = vpack.c.bf16 %v4125, %v4123
        %v4248 = vpack.c.bf16 %v4126, %v4124
        %v4249 = vpack.c.bf16 %v4129, %v4127
        %v4250 = vpack.c.bf16 %v4130, %v4128
        %v4251 = vpack.c.bf16 %v4133, %v4131
        %v4252 = vpack.c.bf16 %v4134, %v4132
        %v4253 = vpack.c.bf16 %v4137, %v4135
        %v4254 = vpack.c.bf16 %v4138, %v4136
        %v4255 = vpack.c.bf16 %v4141, %v4139
        %v4256 = vpack.c.bf16 %v4142, %v4140
        %v4257 = vpack.c.bf16 %v4145, %v4143
        %v4258 = vpack.c.bf16 %v4146, %v4144
        %v4259 = vpack.c.bf16 %v4149, %v4147
        %v4260 = vpack.c.bf16 %v4150, %v4148
        %v4261 = vpack.c.bf16 %v4153, %v4151
        %v4262 = vpack.c.bf16 %v4154, %v4152
        %v4263 = vpack.c.bf16 %v4157, %v4155
        %v4264 = vpack.c.bf16 %v4158, %v4156
        %v4265 = vpack.c.bf16 %v4161, %v4159
        %v4266 = vpack.c.bf16 %v4162, %v4160
        %v4267 = vpack.c.bf16 %v4165, %v4163
        %v4268 = vpack.c.bf16 %v4166, %v4164
        %v4269 = vpack.c.bf16 %v4169, %v4167
        %v4270 = vpack.c.bf16 %v4170, %v4168
        %v4271 = vpack.c.bf16 %v4173, %v4171
        %v4272 = vpack.c.bf16 %v4174, %v4172
        %v4273 = vpack.c.bf16 %v4177, %v4175
        %v4274 = vpack.c.bf16 %v4178, %v4176
        %v4275 = vpack.c.bf16 %v4181, %v4179
        %v4276 = vpack.c.bf16 %v4182, %v4180
        %v4277 = vpack.c.bf16 %v4185, %v4183
        %v4278 = vpack.c.bf16 %v4186, %v4184
        %v4279 = vpack.c.bf16 %v4189, %v4187
        %v4280 = vpack.c.bf16 %v4190, %v4188
        %v4281 = vpack.c.bf16 %v4193, %v4191
        %v4282 = vpack.c.bf16 %v4194, %v4192
        %v4283 = vpack.c.bf16 %v4197, %v4195
        %v4284 = vpack.c.bf16 %v4198, %v4196
        %v4285 = vpack.c.bf16 %v4201, %v4199
        %v4286 = vpack.c.bf16 %v4202, %v4200
        %v4287 = vpack.c.bf16 %v4205, %v4203
        %v4288 = vpack.c.bf16 %v4206, %v4204
        %v4289 = vpack.c.bf16 %v4209, %v4207
        %v4290 = vpack.c.bf16 %v4210, %v4208
        %v4291 = vpack.c.bf16 %v4213, %v4211
        %v4292 = vpack.c.bf16 %v4214, %v4212
        %v4293 = vpack.c.bf16 %v4217, %v4215
        %v4294 = vpack.c.bf16 %v4218, %v4216
        %v4295 = vpack.c.bf16 %v4221, %v4219
        %v4296 = vpack.c.bf16 %v4222, %v4220
        %v4297 = vpack.c.bf16 %v4225, %v4223
        %v4298 = vpack.c.bf16 %v4226, %v4224
        %v4299 = vpack.c.bf16 %v4229, %v4227
        %v4300 = vpack.c.bf16 %v4230, %v4228
        %v4301 = vpack.c.bf16 %v4233, %v4231
        %v4302 = vpack.c.bf16 %v4234, %v4232
        %v4303 = vpack.c.bf16 %v4237, %v4235
        %v4304 = vpack.c.bf16 %v4238, %v4236
        %v4305 = vpack.c.bf16 %v4241, %v4239
        %v4306 = vpack.c.bf16 %v4242, %v4240
        %v4307 = vld [vmem:[%s5] sm:$0xff]
        %v4308 = vld [vmem:[%s5 + $0x8] sm:$0xff]
        %v4309 = vld [vmem:[%s5 + $0x10] sm:$0xff]
        %v4310 = vld [vmem:[%s5 + $0x18] sm:$0xff]
        %v4311 = vld [vmem:[%s5 + $0x20] sm:$0xff]
        %v4312 = vld [vmem:[%s5 + $0x28] sm:$0xff]
        %v4313 = vld [vmem:[%s5 + $0x30] sm:$0xff]
        %v4314 = vld [vmem:[%s5 + $0x38] sm:$0xff]
        %v4315 = vld [vmem:[%s5 + $0x40] sm:$0xff]
        %v4316 = vld [vmem:[%s5 + $0x48] sm:$0xff]
        %v4317 = vld [vmem:[%s5 + $0x50] sm:$0xff]
        %v4318 = vld [vmem:[%s5 + $0x58] sm:$0xff]
        %v4319 = vld [vmem:[%s5 + $0x60] sm:$0xff]
        %v4320 = vld [vmem:[%s5 + $0x68] sm:$0xff]
        %v4321 = vld [vmem:[%s5 + $0x70] sm:$0xff]
        %v4322 = vld [vmem:[%s5 + $0x78] sm:$0xff]
        %v4323 = vld [vmem:[%s5 + $0x80] sm:$0xff]
        %v4324 = vld [vmem:[%s5 + $0x88] sm:$0xff]
        %v4325 = vld [vmem:[%s5 + $0x90] sm:$0xff]
        %v4326 = vld [vmem:[%s5 + $0x98] sm:$0xff]
        %v4327 = vld [vmem:[%s5 + $0xa0] sm:$0xff]
        %v4328 = vld [vmem:[%s5 + $0xa8] sm:$0xff]
        %v4329 = vld [vmem:[%s5 + $0xb0] sm:$0xff]
        %v4330 = vld [vmem:[%s5 + $0xb8] sm:$0xff]
        %v4331 = vld [vmem:[%s5 + $0xc0] sm:$0xff]
        %v4332 = vld [vmem:[%s5 + $0xc8] sm:$0xff]
        %v4333 = vld [vmem:[%s5 + $0xd0] sm:$0xff]
        %v4334 = vld [vmem:[%s5 + $0xd8] sm:$0xff]
        %v4335 = vld [vmem:[%s5 + $0xe0] sm:$0xff]
        %v4336 = vld [vmem:[%s5 + $0xe8] sm:$0xff]
        %v4337 = vld [vmem:[%s5 + $0xf0] sm:$0xff]
        %v4338 = vld [vmem:[%s5 + $0xf8] sm:$0xff]
        %v4339 = vld [vmem:[%s6] sm:$0x3]
        %v4341 = vlaneseq
        %v4342 = vshrl.u32 %v4341, 7
        %v4343 = vsub.s32 0, %v4342
        %v4344 = vrot.slane %v4339, %v4343
        %v4345 = vlaneseq
        %v4346 = vshrl.u32 %v4345, 7
        %v4347 = vsub.s32 1, %v4346
        %v4348 = vrot.slane %v4339, %v4347
        %v4383 = vunpack.c.l.b16 %v4307
        %v4384 = vunpack.c.h.b16 %v4307
        %v4385 = vunpack.c.l.b16 %v4308
        %v4386 = vunpack.c.h.b16 %v4308
        %v4387 = vunpack.c.l.b16 %v4309
        %v4388 = vunpack.c.h.b16 %v4309
        %v4389 = vunpack.c.l.b16 %v4310
        %v4390 = vunpack.c.h.b16 %v4310
        %v4391 = vunpack.c.l.b16 %v4311
        %v4392 = vunpack.c.h.b16 %v4311
        %v4393 = vunpack.c.l.b16 %v4312
        %v4394 = vunpack.c.h.b16 %v4312
        %v4395 = vunpack.c.l.b16 %v4313
        %v4396 = vunpack.c.h.b16 %v4313
        %v4397 = vunpack.c.l.b16 %v4314
        %v4398 = vunpack.c.h.b16 %v4314
        %v4399 = vunpack.c.l.b16 %v4315
        %v4400 = vunpack.c.h.b16 %v4315
        %v4401 = vunpack.c.l.b16 %v4316
        %v4402 = vunpack.c.h.b16 %v4316
        %v4403 = vunpack.c.l.b16 %v4317
        %v4404 = vunpack.c.h.b16 %v4317
        %v4405 = vunpack.c.l.b16 %v4318
        %v4406 = vunpack.c.h.b16 %v4318
        %v4407 = vunpack.c.l.b16 %v4319
        %v4408 = vunpack.c.h.b16 %v4319
        %v4409 = vunpack.c.l.b16 %v4320
        %v4410 = vunpack.c.h.b16 %v4320
        %v4411 = vunpack.c.l.b16 %v4321
        %v4412 = vunpack.c.h.b16 %v4321
        %v4413 = vunpack.c.l.b16 %v4322
        %v4414 = vunpack.c.h.b16 %v4322
        %v4415 = vunpack.c.l.b16 %v4323
        %v4416 = vunpack.c.h.b16 %v4323
        %v4417 = vunpack.c.l.b16 %v4324
        %v4418 = vunpack.c.h.b16 %v4324
        %v4419 = vunpack.c.l.b16 %v4325
        %v4420 = vunpack.c.h.b16 %v4325
        %v4421 = vunpack.c.l.b16 %v4326
        %v4422 = vunpack.c.h.b16 %v4326
        %v4423 = vunpack.c.l.b16 %v4327
        %v4424 = vunpack.c.h.b16 %v4327
        %v4425 = vunpack.c.l.b16 %v4328
        %v4426 = vunpack.c.h.b16 %v4328
        %v4427 = vunpack.c.l.b16 %v4329
        %v4428 = vunpack.c.h.b16 %v4329
        %v4429 = vunpack.c.l.b16 %v4330
        %v4430 = vunpack.c.h.b16 %v4330
        %v4431 = vunpack.c.l.b16 %v4331
        %v4432 = vunpack.c.h.b16 %v4331
        %v4433 = vunpack.c.l.b16 %v4332
        %v4434 = vunpack.c.h.b16 %v4332
        %v4435 = vunpack.c.l.b16 %v4333
        %v4436 = vunpack.c.h.b16 %v4333
        %v4437 = vunpack.c.l.b16 %v4334
        %v4438 = vunpack.c.h.b16 %v4334
        %v4439 = vunpack.c.l.b16 %v4335
        %v4440 = vunpack.c.h.b16 %v4335
        %v4441 = vunpack.c.l.b16 %v4336
        %v4442 = vunpack.c.h.b16 %v4336
        %v4443 = vunpack.c.l.b16 %v4337
        %v4444 = vunpack.c.h.b16 %v4337
        %v4445 = vunpack.c.l.b16 %v4338
        %v4446 = vunpack.c.h.b16 %v4338
        %v4447 = vpack.c.b16 %v4385, %v4383
        %v4448 = vpack.c.b16 %v4386, %v4384
        %v4449 = vpack.c.b16 %v4389, %v4387
        %v4450 = vpack.c.b16 %v4390, %v4388
        %v4451 = vpack.c.b16 %v4393, %v4391
        %v4452 = vpack.c.b16 %v4394, %v4392
        %v4453 = vpack.c.b16 %v4397, %v4395
        %v4454 = vpack.c.b16 %v4398, %v4396
        %v4455 = vpack.c.b16 %v4401, %v4399
        %v4456 = vpack.c.b16 %v4402, %v4400
        %v4457 = vpack.c.b16 %v4405, %v4403
        %v4458 = vpack.c.b16 %v4406, %v4404
        %v4459 = vpack.c.b16 %v4409, %v4407
        %v4460 = vpack.c.b16 %v4410, %v4408
        %v4461 = vpack.c.b16 %v4413, %v4411
        %v4462 = vpack.c.b16 %v4414, %v4412
        %v4463 = vpack.c.b16 %v4417, %v4415
        %v4464 = vpack.c.b16 %v4418, %v4416
        %v4465 = vpack.c.b16 %v4421, %v4419
        %v4466 = vpack.c.b16 %v4422, %v4420
        %v4467 = vpack.c.b16 %v4425, %v4423
        %v4468 = vpack.c.b16 %v4426, %v4424
        %v4469 = vpack.c.b16 %v4429, %v4427
        %v4470 = vpack.c.b16 %v4430, %v4428
        %v4471 = vpack.c.b16 %v4433, %v4431
        %v4472 = vpack.c.b16 %v4434, %v4432
        %v4473 = vpack.c.b16 %v4437, %v4435
        %v4474 = vpack.c.b16 %v4438, %v4436
        %v4475 = vpack.c.b16 %v4441, %v4439
        %v4476 = vpack.c.b16 %v4442, %v4440
        %v4477 = vpack.c.b16 %v4445, %v4443
        %v4478 = vpack.c.b16 %v4446, %v4444
        %4511 = vmatprep.subr.bf16.mxu0 %v4448
        %4512 = vmatpush1.bf16.msra.mxu0 %v4447
        %4513 = vmatprep.subr.bf16.mxu0 %v4450
        %4514 = vmatpush1.bf16.msra.mxu0 %v4449
        %4515 = vmatprep.subr.bf16.mxu0 %v4452
        %4516 = vmatpush1.bf16.msra.mxu0 %v4451
        %4517 = vmatprep.subr.bf16.mxu0 %v4454
        %4518 = vmatpush1.bf16.msra.mxu0 %v4453
        %4519 = vmatprep.subr.bf16.mxu0 %v4456
        %4520 = vmatpush1.bf16.msra.mxu0 %v4455
        %4521 = vmatprep.subr.bf16.mxu0 %v4458
        %4522 = vmatpush1.bf16.msra.mxu0 %v4457
        %4523 = vmatprep.subr.bf16.mxu0 %v4460
        %4524 = vmatpush1.bf16.msra.mxu0 %v4459
        %4525 = vmatprep.subr.bf16.mxu0 %v4462
        %4526 = vmatpush1.bf16.msra.mxu0 %v4461
        %4527 = vmatprep.subr.bf16.mxu0 %v4464
        %4528 = vmatpush1.bf16.msra.mxu0 %v4463
        %4529 = vmatprep.subr.bf16.mxu0 %v4466
        %4530 = vmatpush1.bf16.msra.mxu0 %v4465
        %4531 = vmatprep.subr.bf16.mxu0 %v4468
        %4532 = vmatpush1.bf16.msra.mxu0 %v4467
        %4533 = vmatprep.subr.bf16.mxu0 %v4470
        %4534 = vmatpush1.bf16.msra.mxu0 %v4469
        %4535 = vmatprep.subr.bf16.mxu0 %v4472
        %4536 = vmatpush1.bf16.msra.mxu0 %v4471
        %4537 = vmatprep.subr.bf16.mxu0 %v4474
        %4538 = vmatpush1.bf16.msra.mxu0 %v4473
        %4539 = vmatprep.subr.bf16.mxu0 %v4476
        %4540 = vmatpush1.bf16.msra.mxu0 %v4475
        %4541 = vmatprep.subr.bf16.mxu0 %v4478
        %4542 = vmatpush1.bf16.msra.mxu0 %v4477
        %4543 = vmatprep.mubr.bf16.mxu0 %v4244
        %4544 = vmatmul.mubr.bf16.gmra.mrb[0].mxu0 %v4243
        %v4545 = vpop.f32.mrb[0].mxu0
        %v4546 = vadd.f32 %v4344, %v4545
        %v4547 = vpop.f32.mrb[0].mxu0
        %v4548 = vadd.f32 %v4348, %v4547
        %v4549 = vpop.f32.mrb[0].mxu0
        %v4550 = vadd.f32 %v4344, %v4549
        %v4551 = vpop.f32.mrb[0].mxu0
        %v4552 = vadd.f32 %v4348, %v4551
        %4553 = vmatprep.mubr.bf16.mxu0 %v4246
        %4554 = vmatmul.mubr.bf16.gmra.mrb[0].mxu0 %v4245
        %v4555 = vpop.f32.mrb[0].mxu0
        %v4556 = vadd.f32 %v4344, %v4555
        %v4557 = vpop.f32.mrb[0].mxu0
        %v4558 = vadd.f32 %v4348, %v4557
        %v4559 = vpop.f32.mrb[0].mxu0
        %v4560 = vadd.f32 %v4344, %v4559
        %v4561 = vpop.f32.mrb[0].mxu0
        %v4562 = vadd.f32 %v4348, %v4561
        %4563 = vmatprep.mubr.bf16.mxu0 %v4248
        %4564 = vmatmul.mubr.bf16.gmra.mrb[0].mxu0 %v4247
        %v4565 = vpop.f32.mrb[0].mxu0
        %v4566 = vadd.f32 %v4344, %v4565
        %v4567 = vpop.f32.mrb[0].mxu0
        %v4568 = vadd.f32 %v4348, %v4567
        %v4569 = vpop.f32.mrb[0].mxu0
        %v4570 = vadd.f32 %v4344, %v4569
        %v4571 = vpop.f32.mrb[0].mxu0
        %v4572 = vadd.f32 %v4348, %v4571
        %4573 = vmatprep.mubr.bf16.mxu0 %v4250
        %4574 = vmatmul.mubr.bf16.gmra.mrb[0].mxu0 %v4249
        %v4575 = vpop.f32.mrb[0].mxu0
        %v4576 = vadd.f32 %v4344, %v4575
        %v4577 = vpop.f32.mrb[0].mxu0
        %v4578 = vadd.f32 %v4348, %v4577
        %v4579 = vpop.f32.mrb[0].mxu0
        %v4580 = vadd.f32 %v4344, %v4579
        %v4581 = vpop.f32.mrb[0].mxu0
        %v4582 = vadd.f32 %v4348, %v4581
        %4583 = vmatprep.mubr.bf16.mxu0 %v4252
        %4584 = vmatmul.mubr.bf16.gmra.mrb[0].mxu0 %v4251
        %v4585 = vpop.f32.mrb[0].mxu0
        %v4586 = vadd.f32 %v4344, %v4585
        %v4587 = vpop.f32.mrb[0].mxu0
        %v4588 = vadd.f32 %v4348, %v4587
        %v4589 = vpop.f32.mrb[0].mxu0
        %v4590 = vadd.f32 %v4344, %v4589
        %v4591 = vpop.f32.mrb[0].mxu0
        %v4592 = vadd.f32 %v4348, %v4591
        %4593 = vmatprep.mubr.bf16.mxu0 %v4254
        %4594 = vmatmul.mubr.bf16.gmra.mrb[0].mxu0 %v4253
        %v4595 = vpop.f32.mrb[0].mxu0
        %v4596 = vadd.f32 %v4344, %v4595
        %v4597 = vpop.f32.mrb[0].mxu0
        %v4598 = vadd.f32 %v4348, %v4597
        %v4599 = vpop.f32.mrb[0].mxu0
        %v4600 = vadd.f32 %v4344, %v4599
        %v4601 = vpop.f32.mrb[0].mxu0
        %v4602 = vadd.f32 %v4348, %v4601
        %4603 = vmatprep.mubr.bf16.mxu0 %v4256
        %4604 = vmatmul.mubr.bf16.gmra.mrb[0].mxu0 %v4255
        %v4605 = vpop.f32.mrb[0].mxu0
        %v4606 = vadd.f32 %v4344, %v4605
        %v4607 = vpop.f32.mrb[0].mxu0
        %v4608 = vadd.f32 %v4348, %v4607
        %v4609 = vpop.f32.mrb[0].mxu0
        %v4610 = vadd.f32 %v4344, %v4609
        %v4611 = vpop.f32.mrb[0].mxu0
        %v4612 = vadd.f32 %v4348, %v4611
        %4613 = vmatprep.mubr.bf16.mxu0 %v4258
        %4614 = vmatmul.mubr.bf16.gmra.mrb[0].mxu0 %v4257
        %v4615 = vpop.f32.mrb[0].mxu0
        %v4616 = vadd.f32 %v4344, %v4615
        %v4617 = vpop.f32.mrb[0].mxu0
        %v4618 = vadd.f32 %v4348, %v4617
        %v4619 = vpop.f32.mrb[0].mxu0
        %v4620 = vadd.f32 %v4344, %v4619
        %v4621 = vpop.f32.mrb[0].mxu0
        %v4622 = vadd.f32 %v4348, %v4621
        %4623 = vmatprep.mubr.bf16.mxu0 %v4260
        %4624 = vmatmul.mubr.bf16.gmra.mrb[0].mxu0 %v4259
        %v4625 = vpop.f32.mrb[0].mxu0
        %v4626 = vadd.f32 %v4344, %v4625
        %v4627 = vpop.f32.mrb[0].mxu0
        %v4628 = vadd.f32 %v4348, %v4627
        %v4629 = vpop.f32.mrb[0].mxu0
        %v4630 = vadd.f32 %v4344, %v4629
        %v4631 = vpop.f32.mrb[0].mxu0
        %v4632 = vadd.f32 %v4348, %v4631
        %4633 = vmatprep.mubr.bf16.mxu0 %v4262
        %4634 = vmatmul.mubr.bf16.gmra.mrb[0].mxu0 %v4261
        %v4635 = vpop.f32.mrb[0].mxu0
        %v4636 = vadd.f32 %v4344, %v4635
        %v4637 = vpop.f32.mrb[0].mxu0
        %v4638 = vadd.f32 %v4348, %v4637
        %v4639 = vpop.f32.mrb[0].mxu0
        %v4640 = vadd.f32 %v4344, %v4639
        %v4641 = vpop.f32.mrb[0].mxu0
        %v4642 = vadd.f32 %v4348, %v4641
        %4643 = vmatprep.mubr.bf16.mxu0 %v4264
        %4644 = vmatmul.mubr.bf16.gmra.mrb[0].mxu0 %v4263
        %v4645 = vpop.f32.mrb[0].mxu0
        %v4646 = vadd.f32 %v4344, %v4645
        %v4647 = vpop.f32.mrb[0].mxu0
        %v4648 = vadd.f32 %v4348, %v4647
        %v4649 = vpop.f32.mrb[0].mxu0
        %v4650 = vadd.f32 %v4344, %v4649
        %v4651 = vpop.f32.mrb[0].mxu0
        %v4652 = vadd.f32 %v4348, %v4651
        %4653 = vmatprep.mubr.bf16.mxu0 %v4266
        %4654 = vmatmul.mubr.bf16.gmra.mrb[0].mxu0 %v4265
        %v4655 = vpop.f32.mrb[0].mxu0
        %v4656 = vadd.f32 %v4344, %v4655
        %v4657 = vpop.f32.mrb[0].mxu0
        %v4658 = vadd.f32 %v4348, %v4657
        %v4659 = vpop.f32.mrb[0].mxu0
        %v4660 = vadd.f32 %v4344, %v4659
        %v4661 = vpop.f32.mrb[0].mxu0
        %v4662 = vadd.f32 %v4348, %v4661
        %4663 = vmatprep.mubr.bf16.mxu0 %v4268
        %4664 = vmatmul.mubr.bf16.gmra.mrb[0].mxu0 %v4267
        %v4665 = vpop.f32.mrb[0].mxu0
        %v4666 = vadd.f32 %v4344, %v4665
        %v4667 = vpop.f32.mrb[0].mxu0
        %v4668 = vadd.f32 %v4348, %v4667
        %v4669 = vpop.f32.mrb[0].mxu0
        %v4670 = vadd.f32 %v4344, %v4669
        %v4671 = vpop.f32.mrb[0].mxu0
        %v4672 = vadd.f32 %v4348, %v4671
        %4673 = vmatprep.mubr.bf16.mxu0 %v4270
        %4674 = vmatmul.mubr.bf16.gmra.mrb[0].mxu0 %v4269
        %v4675 = vpop.f32.mrb[0].mxu0
        %v4676 = vadd.f32 %v4344, %v4675
        %v4677 = vpop.f32.mrb[0].mxu0
        %v4678 = vadd.f32 %v4348, %v4677
        %v4679 = vpop.f32.mrb[0].mxu0
        %v4680 = vadd.f32 %v4344, %v4679
        %v4681 = vpop.f32.mrb[0].mxu0
        %v4682 = vadd.f32 %v4348, %v4681
        %4683 = vmatprep.mubr.bf16.mxu0 %v4272
        %4684 = vmatmul.mubr.bf16.gmra.mrb[0].mxu0 %v4271
        %v4685 = vpop.f32.mrb[0].mxu0
        %v4686 = vadd.f32 %v4344, %v4685
        %v4687 = vpop.f32.mrb[0].mxu0
        %v4688 = vadd.f32 %v4348, %v4687
        %v4689 = vpop.f32.mrb[0].mxu0
        %v4690 = vadd.f32 %v4344, %v4689
        %v4691 = vpop.f32.mrb[0].mxu0
        %v4692 = vadd.f32 %v4348, %v4691
        %4693 = vmatprep.mubr.bf16.mxu0 %v4274
        %4694 = vmatmul.mubr.bf16.gmra.mrb[0].mxu0 %v4273
        %v4695 = vpop.f32.mrb[0].mxu0
        %v4696 = vadd.f32 %v4344, %v4695
        %v4697 = vpop.f32.mrb[0].mxu0
        %v4698 = vadd.f32 %v4348, %v4697
        %v4699 = vpop.f32.mrb[0].mxu0
        %v4700 = vadd.f32 %v4344, %v4699
        %v4701 = vpop.f32.mrb[0].mxu0
        %v4702 = vadd.f32 %v4348, %v4701
        %4703 = vmatprep.mubr.bf16.mxu0 %v4276
        %4704 = vmatmul.mubr.bf16.gmra.mrb[0].mxu0 %v4275
        %v4705 = vpop.f32.mrb[0].mxu0
        %v4706 = vadd.f32 %v4344, %v4705
        %v4707 = vpop.f32.mrb[0].mxu0
        %v4708 = vadd.f32 %v4348, %v4707
        %v4709 = vpop.f32.mrb[0].mxu0
        %v4710 = vadd.f32 %v4344, %v4709
        %v4711 = vpop.f32.mrb[0].mxu0
        %v4712 = vadd.f32 %v4348, %v4711
        %4713 = vmatprep.mubr.bf16.mxu0 %v4278
        %4714 = vmatmul.mubr.bf16.gmra.mrb[0].mxu0 %v4277
        %v4715 = vpop.f32.mrb[0].mxu0
        %v4716 = vadd.f32 %v4344, %v4715
        %v4717 = vpop.f32.mrb[0].mxu0
        %v4718 = vadd.f32 %v4348, %v4717
        %v4719 = vpop.f32.mrb[0].mxu0
        %v4720 = vadd.f32 %v4344, %v4719
        %v4721 = vpop.f32.mrb[0].mxu0
        %v4722 = vadd.f32 %v4348, %v4721
        %4723 = vmatprep.mubr.bf16.mxu0 %v4280
        %4724 = vmatmul.mubr.bf16.gmra.mrb[0].mxu0 %v4279
        %v4725 = vpop.f32.mrb[0].mxu0
        %v4726 = vadd.f32 %v4344, %v4725
        %v4727 = vpop.f32.mrb[0].mxu0
        %v4728 = vadd.f32 %v4348, %v4727
        %v4729 = vpop.f32.mrb[0].mxu0
        %v4730 = vadd.f32 %v4344, %v4729
        %v4731 = vpop.f32.mrb[0].mxu0
        %v4732 = vadd.f32 %v4348, %v4731
        %4733 = vmatprep.mubr.bf16.mxu0 %v4282
        %4734 = vmatmul.mubr.bf16.gmra.mrb[0].mxu0 %v4281
        %v4735 = vpop.f32.mrb[0].mxu0
        %v4736 = vadd.f32 %v4344, %v4735
        %v4737 = vpop.f32.mrb[0].mxu0
        %v4738 = vadd.f32 %v4348, %v4737
        %v4739 = vpop.f32.mrb[0].mxu0
        %v4740 = vadd.f32 %v4344, %v4739
        %v4741 = vpop.f32.mrb[0].mxu0
        %v4742 = vadd.f32 %v4348, %v4741
        %4743 = vmatprep.mubr.bf16.mxu0 %v4284
        %4744 = vmatmul.mubr.bf16.gmra.mrb[0].mxu0 %v4283
        %v4745 = vpop.f32.mrb[0].mxu0
        %v4746 = vadd.f32 %v4344, %v4745
        %v4747 = vpop.f32.mrb[0].mxu0
        %v4748 = vadd.f32 %v4348, %v4747
        %v4749 = vpop.f32.mrb[0].mxu0
        %v4750 = vadd.f32 %v4344, %v4749
        %v4751 = vpop.f32.mrb[0].mxu0
        %v4752 = vadd.f32 %v4348, %v4751
        %4753 = vmatprep.mubr.bf16.mxu0 %v4286
        %4754 = vmatmul.mubr.bf16.gmra.mrb[0].mxu0 %v4285
        %v4755 = vpop.f32.mrb[0].mxu0
        %v4756 = vadd.f32 %v4344, %v4755
        %v4757 = vpop.f32.mrb[0].mxu0
        %v4758 = vadd.f32 %v4348, %v4757
        %v4759 = vpop.f32.mrb[0].mxu0
        %v4760 = vadd.f32 %v4344, %v4759
        %v4761 = vpop.f32.mrb[0].mxu0
        %v4762 = vadd.f32 %v4348, %v4761
        %4763 = vmatprep.mubr.bf16.mxu0 %v4288
        %4764 = vmatmul.mubr.bf16.gmra.mrb[0].mxu0 %v4287
        %v4765 = vpop.f32.mrb[0].mxu0
        %v4766 = vadd.f32 %v4344, %v4765
        %v4767 = vpop.f32.mrb[0].mxu0
        %v4768 = vadd.f32 %v4348, %v4767
        %v4769 = vpop.f32.mrb[0].mxu0
        %v4770 = vadd.f32 %v4344, %v4769
        %v4771 = vpop.f32.mrb[0].mxu0
        %v4772 = vadd.f32 %v4348, %v4771
        %4773 = vmatprep.mubr.bf16.mxu0 %v4290
        %4774 = vmatmul.mubr.bf16.gmra.mrb[0].mxu0 %v4289
        %v4775 = vpop.f32.mrb[0].mxu0
        %v4776 = vadd.f32 %v4344, %v4775
        %v4777 = vpop.f32.mrb[0].mxu0
        %v4778 = vadd.f32 %v4348, %v4777
        %v4779 = vpop.f32.mrb[0].mxu0
        %v4780 = vadd.f32 %v4344, %v4779
        %v4781 = vpop.f32.mrb[0].mxu0
        %v4782 = vadd.f32 %v4348, %v4781
        %4783 = vmatprep.mubr.bf16.mxu0 %v4292
        %4784 = vmatmul.mubr.bf16.gmra.mrb[0].mxu0 %v4291
        %v4785 = vpop.f32.mrb[0].mxu0
        %v4786 = vadd.f32 %v4344, %v4785
        %v4787 = vpop.f32.mrb[0].mxu0
        %v4788 = vadd.f32 %v4348, %v4787
        %v4789 = vpop.f32.mrb[0].mxu0
        %v4790 = vadd.f32 %v4344, %v4789
        %v4791 = vpop.f32.mrb[0].mxu0
        %v4792 = vadd.f32 %v4348, %v4791
        %4793 = vmatprep.mubr.bf16.mxu0 %v4294
        %4794 = vmatmul.mubr.bf16.gmra.mrb[0].mxu0 %v4293
        %v4795 = vpop.f32.mrb[0].mxu0
        %v4796 = vadd.f32 %v4344, %v4795
        %v4797 = vpop.f32.mrb[0].mxu0
        %v4798 = vadd.f32 %v4348, %v4797
        %v4799 = vpop.f32.mrb[0].mxu0
        %v4800 = vadd.f32 %v4344, %v4799
        %v4801 = vpop.f32.mrb[0].mxu0
        %v4802 = vadd.f32 %v4348, %v4801
        %4803 = vmatprep.mubr.bf16.mxu0 %v4296
        %4804 = vmatmul.mubr.bf16.gmra.mrb[0].mxu0 %v4295
        %v4805 = vpop.f32.mrb[0].mxu0
        %v4806 = vadd.f32 %v4344, %v4805
        %v4807 = vpop.f32.mrb[0].mxu0
        %v4808 = vadd.f32 %v4348, %v4807
        %v4809 = vpop.f32.mrb[0].mxu0
        %v4810 = vadd.f32 %v4344, %v4809
        %v4811 = vpop.f32.mrb[0].mxu0
        %v4812 = vadd.f32 %v4348, %v4811
        %4813 = vmatprep.mubr.bf16.mxu0 %v4298
        %4814 = vmatmul.mubr.bf16.gmra.mrb[0].mxu0 %v4297
        %v4815 = vpop.f32.mrb[0].mxu0
        %v4816 = vadd.f32 %v4344, %v4815
        %v4817 = vpop.f32.mrb[0].mxu0
        %v4818 = vadd.f32 %v4348, %v4817
        %v4819 = vpop.f32.mrb[0].mxu0
        %v4820 = vadd.f32 %v4344, %v4819
        %v4821 = vpop.f32.mrb[0].mxu0
        %v4822 = vadd.f32 %v4348, %v4821
        %4823 = vmatprep.mubr.bf16.mxu0 %v4300
        %4824 = vmatmul.mubr.bf16.gmra.mrb[0].mxu0 %v4299
        %v4825 = vpop.f32.mrb[0].mxu0
        %v4826 = vadd.f32 %v4344, %v4825
        %v4827 = vpop.f32.mrb[0].mxu0
        %v4828 = vadd.f32 %v4348, %v4827
        %v4829 = vpop.f32.mrb[0].mxu0
        %v4830 = vadd.f32 %v4344, %v4829
        %v4831 = vpop.f32.mrb[0].mxu0
        %v4832 = vadd.f32 %v4348, %v4831
        %4833 = vmatprep.mubr.bf16.mxu0 %v4302
        %4834 = vmatmul.mubr.bf16.gmra.mrb[0].mxu0 %v4301
        %v4835 = vpop.f32.mrb[0].mxu0
        %v4836 = vadd.f32 %v4344, %v4835
        %v4837 = vpop.f32.mrb[0].mxu0
        %v4838 = vadd.f32 %v4348, %v4837
        %v4839 = vpop.f32.mrb[0].mxu0
        %v4840 = vadd.f32 %v4344, %v4839
        %v4841 = vpop.f32.mrb[0].mxu0
        %v4842 = vadd.f32 %v4348, %v4841
        %4843 = vmatprep.mubr.bf16.mxu0 %v4304
        %4844 = vmatmul.mubr.bf16.gmra.mrb[0].mxu0 %v4303
        %v4845 = vpop.f32.mrb[0].mxu0
        %v4846 = vadd.f32 %v4344, %v4845
        %v4847 = vpop.f32.mrb[0].mxu0
        %v4848 = vadd.f32 %v4348, %v4847
        %v4849 = vpop.f32.mrb[0].mxu0
        %v4850 = vadd.f32 %v4344, %v4849
        %v4851 = vpop.f32.mrb[0].mxu0
        %v4852 = vadd.f32 %v4348, %v4851
        %4853 = vmatprep.mubr.bf16.mxu0 %v4306
        %4854 = vmatmul.mubr.bf16.gmra.mrb[0].mxu0 %v4305
        %v4855 = vpop.f32.mrb[0].mxu0
        %v4856 = vadd.f32 %v4344, %v4855
        %v4857 = vpop.f32.mrb[0].mxu0
        %v4858 = vadd.f32 %v4348, %v4857
        %v4859 = vpop.f32.mrb[0].mxu0
        %v4860 = vadd.f32 %v4344, %v4859
        %v4861 = vpop.f32.mrb[0].mxu0
        %v4862 = vadd.f32 %v4348, %v4861
        %4863 = vdwg.mxu0
        %v4864 = vmul.f32 %v4546, 0.5
        %v4865 = vmul.f32 %v4548, 0.5
        %v4866 = vmul.f32 %v4550, 0.5
        %v4867 = vmul.f32 %v4552, 0.5
        %v4868 = vmul.f32 %v4556, 0.5
        %v4869 = vmul.f32 %v4558, 0.5
        %v4870 = vmul.f32 %v4560, 0.5
        %v4871 = vmul.f32 %v4562, 0.5
        %v4872 = vmul.f32 %v4566, 0.5
        %v4873 = vmul.f32 %v4568, 0.5
        %v4874 = vmul.f32 %v4570, 0.5
        %v4875 = vmul.f32 %v4572, 0.5
        %v4876 = vmul.f32 %v4576, 0.5
        %v4877 = vmul.f32 %v4578, 0.5
        %v4878 = vmul.f32 %v4580, 0.5
        %v4879 = vmul.f32 %v4582, 0.5
        %v4880 = vmul.f32 %v4586, 0.5
        %v4881 = vmul.f32 %v4588, 0.5
        %v4882 = vmul.f32 %v4590, 0.5
        %v4883 = vmul.f32 %v4592, 0.5
        %v4884 = vmul.f32 %v4596, 0.5
        %v4885 = vmul.f32 %v4598, 0.5
        %v4886 = vmul.f32 %v4600, 0.5
        %v4887 = vmul.f32 %v4602, 0.5
        %v4888 = vmul.f32 %v4606, 0.5
        %v4889 = vmul.f32 %v4608, 0.5
        %v4890 = vmul.f32 %v4610, 0.5
        %v4891 = vmul.f32 %v4612, 0.5
        %v4892 = vmul.f32 %v4616, 0.5
        %v4893 = vmul.f32 %v4618, 0.5
        %v4894 = vmul.f32 %v4620, 0.5
        %v4895 = vmul.f32 %v4622, 0.5
        %v4896 = vmul.f32 %v4626, 0.5
        %v4897 = vmul.f32 %v4628, 0.5
        %v4898 = vmul.f32 %v4630, 0.5
        %v4899 = vmul.f32 %v4632, 0.5
        %v4900 = vmul.f32 %v4636, 0.5
        %v4901 = vmul.f32 %v4638, 0.5
        %v4902 = vmul.f32 %v4640, 0.5
        %v4903 = vmul.f32 %v4642, 0.5
        %v4904 = vmul.f32 %v4646, 0.5
        %v4905 = vmul.f32 %v4648, 0.5
        %v4906 = vmul.f32 %v4650, 0.5
        %v4907 = vmul.f32 %v4652, 0.5
        %v4908 = vmul.f32 %v4656, 0.5
        %v4909 = vmul.f32 %v4658, 0.5
        %v4910 = vmul.f32 %v4660, 0.5
        %v4911 = vmul.f32 %v4662, 0.5
        %v4912 = vmul.f32 %v4666, 0.5
        %v4913 = vmul.f32 %v4668, 0.5
        %v4914 = vmul.f32 %v4670, 0.5
        %v4915 = vmul.f32 %v4672, 0.5
        %v4916 = vmul.f32 %v4676, 0.5
        %v4917 = vmul.f32 %v4678, 0.5
        %v4918 = vmul.f32 %v4680, 0.5
        %v4919 = vmul.f32 %v4682, 0.5
        %v4920 = vmul.f32 %v4686, 0.5
        %v4921 = vmul.f32 %v4688, 0.5
        %v4922 = vmul.f32 %v4690, 0.5
        %v4923 = vmul.f32 %v4692, 0.5
        %v4924 = vmul.f32 %v4696, 0.5
        %v4925 = vmul.f32 %v4698, 0.5
        %v4926 = vmul.f32 %v4700, 0.5
        %v4927 = vmul.f32 %v4702, 0.5
        %v4928 = vmul.f32 %v4706, 0.5
        %v4929 = vmul.f32 %v4708, 0.5
        %v4930 = vmul.f32 %v4710, 0.5
        %v4931 = vmul.f32 %v4712, 0.5
        %v4932 = vmul.f32 %v4716, 0.5
        %v4933 = vmul.f32 %v4718, 0.5
        %v4934 = vmul.f32 %v4720, 0.5
        %v4935 = vmul.f32 %v4722, 0.5
        %v4936 = vmul.f32 %v4726, 0.5
        %v4937 = vmul.f32 %v4728, 0.5
        %v4938 = vmul.f32 %v4730, 0.5
        %v4939 = vmul.f32 %v4732, 0.5
        %v4940 = vmul.f32 %v4736, 0.5
        %v4941 = vmul.f32 %v4738, 0.5
        %v4942 = vmul.f32 %v4740, 0.5
        %v4943 = vmul.f32 %v4742, 0.5
        %v4944 = vmul.f32 %v4746, 0.5
        %v4945 = vmul.f32 %v4748, 0.5
        %v4946 = vmul.f32 %v4750, 0.5
        %v4947 = vmul.f32 %v4752, 0.5
        %v4948 = vmul.f32 %v4756, 0.5
        %v4949 = vmul.f32 %v4758, 0.5
        %v4950 = vmul.f32 %v4760, 0.5
        %v4951 = vmul.f32 %v4762, 0.5
        %v4952 = vmul.f32 %v4766, 0.5
        %v4953 = vmul.f32 %v4768, 0.5
        %v4954 = vmul.f32 %v4770, 0.5
        %v4955 = vmul.f32 %v4772, 0.5
        %v4956 = vmul.f32 %v4776, 0.5
        %v4957 = vmul.f32 %v4778, 0.5
        %v4958 = vmul.f32 %v4780, 0.5
        %v4959 = vmul.f32 %v4782, 0.5
        %v4960 = vmul.f32 %v4786, 0.5
        %v4961 = vmul.f32 %v4788, 0.5
        %v4962 = vmul.f32 %v4790, 0.5
        %v4963 = vmul.f32 %v4792, 0.5
        %v4964 = vmul.f32 %v4796, 0.5
        %v4965 = vmul.f32 %v4798, 0.5
        %v4966 = vmul.f32 %v4800, 0.5
        %v4967 = vmul.f32 %v4802, 0.5
        %v4968 = vmul.f32 %v4806, 0.5
        %v4969 = vmul.f32 %v4808, 0.5
        %v4970 = vmul.f32 %v4810, 0.5
        %v4971 = vmul.f32 %v4812, 0.5
        %v4972 = vmul.f32 %v4816, 0.5
        %v4973 = vmul.f32 %v4818, 0.5
        %v4974 = vmul.f32 %v4820, 0.5
        %v4975 = vmul.f32 %v4822, 0.5
        %v4976 = vmul.f32 %v4826, 0.5
        %v4977 = vmul.f32 %v4828, 0.5
        %v4978 = vmul.f32 %v4830, 0.5
        %v4979 = vmul.f32 %v4832, 0.5
        %v4980 = vmul.f32 %v4836, 0.5
        %v4981 = vmul.f32 %v4838, 0.5
        %v4982 = vmul.f32 %v4840, 0.5
        %v4983 = vmul.f32 %v4842, 0.5
        %v4984 = vmul.f32 %v4846, 0.5
        %v4985 = vmul.f32 %v4848, 0.5
        %v4986 = vmul.f32 %v4850, 0.5
        %v4987 = vmul.f32 %v4852, 0.5
        %v4988 = vmul.f32 %v4856, 0.5
        %v4989 = vmul.f32 %v4858, 0.5
        %v4990 = vmul.f32 %v4860, 0.5
        %v4991 = vmul.f32 %v4862, 0.5
        %v4992 = vtanh.pop %v4864
        %v4993 = vtanh.pop %v4865
        %v4994 = vtanh.pop %v4866
        %v4995 = vtanh.pop %v4867
        %v4996 = vtanh.pop %v4868
        %v4997 = vtanh.pop %v4869
        %v4998 = vtanh.pop %v4870
        %v4999 = vtanh.pop %v4871
        %v5000 = vtanh.pop %v4872
        %v5001 = vtanh.pop %v4873
        %v5002 = vtanh.pop %v4874
        %v5003 = vtanh.pop %v4875
        %v5004 = vtanh.pop %v4876
        %v5005 = vtanh.pop %v4877
        %v5006 = vtanh.pop %v4878
        %v5007 = vtanh.pop %v4879
        %v5008 = vtanh.pop %v4880
        %v5009 = vtanh.pop %v4881
        %v5010 = vtanh.pop %v4882
        %v5011 = vtanh.pop %v4883
        %v5012 = vtanh.pop %v4884
        %v5013 = vtanh.pop %v4885
        %v5014 = vtanh.pop %v4886
        %v5015 = vtanh.pop %v4887
        %v5016 = vtanh.pop %v4888
        %v5017 = vtanh.pop %v4889
        %v5018 = vtanh.pop %v4890
        %v5019 = vtanh.pop %v4891
        %v5020 = vtanh.pop %v4892
        %v5021 = vtanh.pop %v4893
        %v5022 = vtanh.pop %v4894
        %v5023 = vtanh.pop %v4895
        %v5024 = vtanh.pop %v4896
        %v5025 = vtanh.pop %v4897
        %v5026 = vtanh.pop %v4898
        %v5027 = vtanh.pop %v4899
        %v5028 = vtanh.pop %v4900
        %v5029 = vtanh.pop %v4901
        %v5030 = vtanh.pop %v4902
        %v5031 = vtanh.pop %v4903
        %v5032 = vtanh.pop %v4904
        %v5033 = vtanh.pop %v4905
        %v5034 = vtanh.pop %v4906
        %v5035 = vtanh.pop %v4907
        %v5036 = vtanh.pop %v4908
        %v5037 = vtanh.pop %v4909
        %v5038 = vtanh.pop %v4910
        %v5039 = vtanh.pop %v4911
        %v5040 = vtanh.pop %v4912
        %v5041 = vtanh.pop %v4913
        %v5042 = vtanh.pop %v4914
        %v5043 = vtanh.pop %v4915
        %v5044 = vtanh.pop %v4916
        %v5045 = vtanh.pop %v4917
        %v5046 = vtanh.pop %v4918
        %v5047 = vtanh.pop %v4919
        %v5048 = vtanh.pop %v4920
        %v5049 = vtanh.pop %v4921
        %v5050 = vtanh.pop %v4922
        %v5051 = vtanh.pop %v4923
        %v5052 = vtanh.pop %v4924
        %v5053 = vtanh.pop %v4925
        %v5054 = vtanh.pop %v4926
        %v5055 = vtanh.pop %v4927
        %v5056 = vtanh.pop %v4928
        %v5057 = vtanh.pop %v4929
        %v5058 = vtanh.pop %v4930
        %v5059 = vtanh.pop %v4931
        %v5060 = vtanh.pop %v4932
        %v5061 = vtanh.pop %v4933
        %v5062 = vtanh.pop %v4934
        %v5063 = vtanh.pop %v4935
        %v5064 = vtanh.pop %v4936
        %v5065 = vtanh.pop %v4937
        %v5066 = vtanh.pop %v4938
        %v5067 = vtanh.pop %v4939
        %v5068 = vtanh.pop %v4940
        %v5069 = vtanh.pop %v4941
        %v5070 = vtanh.pop %v4942
        %v5071 = vtanh.pop %v4943
        %v5072 = vtanh.pop %v4944
        %v5073 = vtanh.pop %v4945
        %v5074 = vtanh.pop %v4946
        %v5075 = vtanh.pop %v4947
        %v5076 = vtanh.pop %v4948
        %v5077 = vtanh.pop %v4949
        %v5078 = vtanh.pop %v4950
        %v5079 = vtanh.pop %v4951
        %v5080 = vtanh.pop %v4952
        %v5081 = vtanh.pop %v4953
        %v5082 = vtanh.pop %v4954
        %v5083 = vtanh.pop %v4955
        %v5084 = vtanh.pop %v4956
        %v5085 = vtanh.pop %v4957
        %v5086 = vtanh.pop %v4958
        %v5087 = vtanh.pop %v4959
        %v5088 = vtanh.pop %v4960
        %v5089 = vtanh.pop %v4961
        %v5090 = vtanh.pop %v4962
        %v5091 = vtanh.pop %v4963
        %v5092 = vtanh.pop %v4964
        %v5093 = vtanh.pop %v4965
        %v5094 = vtanh.pop %v4966
        %v5095 = vtanh.pop %v4967
        %v5096 = vtanh.pop %v4968
        %v5097 = vtanh.pop %v4969
        %v5098 = vtanh.pop %v4970
        %v5099 = vtanh.pop %v4971
        %v5100 = vtanh.pop %v4972
        %v5101 = vtanh.pop %v4973
        %v5102 = vtanh.pop %v4974
        %v5103 = vtanh.pop %v4975
        %v5104 = vtanh.pop %v4976
        %v5105 = vtanh.pop %v4977
        %v5106 = vtanh.pop %v4978
        %v5107 = vtanh.pop %v4979
        %v5108 = vtanh.pop %v4980
        %v5109 = vtanh.pop %v4981
        %v5110 = vtanh.pop %v4982
        %v5111 = vtanh.pop %v4983
        %v5112 = vtanh.pop %v4984
        %v5113 = vtanh.pop %v4985
        %v5114 = vtanh.pop %v4986
        %v5115 = vtanh.pop %v4987
        %v5116 = vtanh.pop %v4988
        %v5117 = vtanh.pop %v4989
        %v5118 = vtanh.pop %v4990
        %v5119 = vtanh.pop %v4991
        %v5120 = vadd.f32 %v4992, 1.0
        %v5121 = vadd.f32 %v4993, 1.0
        %v5122 = vadd.f32 %v4994, 1.0
        %v5123 = vadd.f32 %v4995, 1.0
        %v5124 = vadd.f32 %v4996, 1.0
        %v5125 = vadd.f32 %v4997, 1.0
        %v5126 = vadd.f32 %v4998, 1.0
        %v5127 = vadd.f32 %v4999, 1.0
        %v5128 = vadd.f32 %v5000, 1.0
        %v5129 = vadd.f32 %v5001, 1.0
        %v5130 = vadd.f32 %v5002, 1.0
        %v5131 = vadd.f32 %v5003, 1.0
        %v5132 = vadd.f32 %v5004, 1.0
        %v5133 = vadd.f32 %v5005, 1.0
        %v5134 = vadd.f32 %v5006, 1.0
        %v5135 = vadd.f32 %v5007, 1.0
        %v5136 = vadd.f32 %v5008, 1.0
        %v5137 = vadd.f32 %v5009, 1.0
        %v5138 = vadd.f32 %v5010, 1.0
        %v5139 = vadd.f32 %v5011, 1.0
        %v5140 = vadd.f32 %v5012, 1.0
        %v5141 = vadd.f32 %v5013, 1.0
        %v5142 = vadd.f32 %v5014, 1.0
        %v5143 = vadd.f32 %v5015, 1.0
        %v5144 = vadd.f32 %v5016, 1.0
        %v5145 = vadd.f32 %v5017, 1.0
        %v5146 = vadd.f32 %v5018, 1.0
        %v5147 = vadd.f32 %v5019, 1.0
        %v5148 = vadd.f32 %v5020, 1.0
        %v5149 = vadd.f32 %v5021, 1.0
        %v5150 = vadd.f32 %v5022, 1.0
        %v5151 = vadd.f32 %v5023, 1.0
        %v5152 = vadd.f32 %v5024, 1.0
        %v5153 = vadd.f32 %v5025, 1.0
        %v5154 = vadd.f32 %v5026, 1.0
        %v5155 = vadd.f32 %v5027, 1.0
        %v5156 = vadd.f32 %v5028, 1.0
        %v5157 = vadd.f32 %v5029, 1.0
        %v5158 = vadd.f32 %v5030, 1.0
        %v5159 = vadd.f32 %v5031, 1.0
        %v5160 = vadd.f32 %v5032, 1.0
        %v5161 = vadd.f32 %v5033, 1.0
        %v5162 = vadd.f32 %v5034, 1.0
        %v5163 = vadd.f32 %v5035, 1.0
        %v5164 = vadd.f32 %v5036, 1.0
        %v5165 = vadd.f32 %v5037, 1.0
        %v5166 = vadd.f32 %v5038, 1.0
        %v5167 = vadd.f32 %v5039, 1.0
        %v5168 = vadd.f32 %v5040, 1.0
        %v5169 = vadd.f32 %v5041, 1.0
        %v5170 = vadd.f32 %v5042, 1.0
        %v5171 = vadd.f32 %v5043, 1.0
        %v5172 = vadd.f32 %v5044, 1.0
        %v5173 = vadd.f32 %v5045, 1.0
        %v5174 = vadd.f32 %v5046, 1.0
        %v5175 = vadd.f32 %v5047, 1.0
        %v5176 = vadd.f32 %v5048, 1.0
        %v5177 = vadd.f32 %v5049, 1.0
        %v5178 = vadd.f32 %v5050, 1.0
        %v5179 = vadd.f32 %v5051, 1.0
        %v5180 = vadd.f32 %v5052, 1.0
        %v5181 = vadd.f32 %v5053, 1.0
        %v5182 = vadd.f32 %v5054, 1.0
        %v5183 = vadd.f32 %v5055, 1.0
        %v5184 = vadd.f32 %v5056, 1.0
        %v5185 = vadd.f32 %v5057, 1.0
        %v5186 = vadd.f32 %v5058, 1.0
        %v5187 = vadd.f32 %v5059, 1.0
        %v5188 = vadd.f32 %v5060, 1.0
        %v5189 = vadd.f32 %v5061, 1.0
        %v5190 = vadd.f32 %v5062, 1.0
        %v5191 = vadd.f32 %v5063, 1.0
        %v5192 = vadd.f32 %v5064, 1.0
        %v5193 = vadd.f32 %v5065, 1.0
        %v5194 = vadd.f32 %v5066, 1.0
        %v5195 = vadd.f32 %v5067, 1.0
        %v5196 = vadd.f32 %v5068, 1.0
        %v5197 = vadd.f32 %v5069, 1.0
        %v5198 = vadd.f32 %v5070, 1.0
        %v5199 = vadd.f32 %v5071, 1.0
        %v5200 = vadd.f32 %v5072, 1.0
        %v5201 = vadd.f32 %v5073, 1.0
        %v5202 = vadd.f32 %v5074, 1.0
        %v5203 = vadd.f32 %v5075, 1.0
        %v5204 = vadd.f32 %v5076, 1.0
        %v5205 = vadd.f32 %v5077, 1.0
        %v5206 = vadd.f32 %v5078, 1.0
        %v5207 = vadd.f32 %v5079, 1.0
        %v5208 = vadd.f32 %v5080, 1.0
        %v5209 = vadd.f32 %v5081, 1.0
        %v5210 = vadd.f32 %v5082, 1.0
        %v5211 = vadd.f32 %v5083, 1.0
        %v5212 = vadd.f32 %v5084, 1.0
        %v5213 = vadd.f32 %v5085, 1.0
        %v5214 = vadd.f32 %v5086, 1.0
        %v5215 = vadd.f32 %v5087, 1.0
        %v5216 = vadd.f32 %v5088, 1.0
        %v5217 = vadd.f32 %v5089, 1.0
        %v5218 = vadd.f32 %v5090, 1.0
        %v5219 = vadd.f32 %v5091, 1.0
        %v5220 = vadd.f32 %v5092, 1.0
        %v5221 = vadd.f32 %v5093, 1.0
        %v5222 = vadd.f32 %v5094, 1.0
        %v5223 = vadd.f32 %v5095, 1.0
        %v5224 = vadd.f32 %v5096, 1.0
        %v5225 = vadd.f32 %v5097, 1.0
        %v5226 = vadd.f32 %v5098, 1.0
        %v5227 = vadd.f32 %v5099, 1.0
        %v5228 = vadd.f32 %v5100, 1.0
        %v5229 = vadd.f32 %v5101, 1.0
        %v5230 = vadd.f32 %v5102, 1.0
        %v5231 = vadd.f32 %v5103, 1.0
        %v5232 = vadd.f32 %v5104, 1.0
        %v5233 = vadd.f32 %v5105, 1.0
        %v5234 = vadd.f32 %v5106, 1.0
        %v5235 = vadd.f32 %v5107, 1.0
        %v5236 = vadd.f32 %v5108, 1.0
        %v5237 = vadd.f32 %v5109, 1.0
        %v5238 = vadd.f32 %v5110, 1.0
        %v5239 = vadd.f32 %v5111, 1.0
        %v5240 = vadd.f32 %v5112, 1.0
        %v5241 = vadd.f32 %v5113, 1.0
        %v5242 = vadd.f32 %v5114, 1.0
        %v5243 = vadd.f32 %v5115, 1.0
        %v5244 = vadd.f32 %v5116, 1.0
        %v5245 = vadd.f32 %v5117, 1.0
        %v5246 = vadd.f32 %v5118, 1.0
        %v5247 = vadd.f32 %v5119, 1.0
        %v5248 = vmul.f32 %v4864, %v5120
        %v5249 = vmul.f32 %v4865, %v5121
        %v5250 = vmul.f32 %v4866, %v5122
        %v5251 = vmul.f32 %v4867, %v5123
        %v5252 = vmul.f32 %v4868, %v5124
        %v5253 = vmul.f32 %v4869, %v5125
        %v5254 = vmul.f32 %v4870, %v5126
        %v5255 = vmul.f32 %v4871, %v5127
        %v5256 = vmul.f32 %v4872, %v5128
        %v5257 = vmul.f32 %v4873, %v5129
        %v5258 = vmul.f32 %v4874, %v5130
        %v5259 = vmul.f32 %v4875, %v5131
        %v5260 = vmul.f32 %v4876, %v5132
        %v5261 = vmul.f32 %v4877, %v5133
        %v5262 = vmul.f32 %v4878, %v5134
        %v5263 = vmul.f32 %v4879, %v5135
        %v5264 = vmul.f32 %v4880, %v5136
        %v5265 = vmul.f32 %v4881, %v5137
        %v5266 = vmul.f32 %v4882, %v5138
        %v5267 = vmul.f32 %v4883, %v5139
        %v5268 = vmul.f32 %v4884, %v5140
        %v5269 = vmul.f32 %v4885, %v5141
        %v5270 = vmul.f32 %v4886, %v5142
        %v5271 = vmul.f32 %v4887, %v5143
        %v5272 = vmul.f32 %v4888, %v5144
        %v5273 = vmul.f32 %v4889, %v5145
        %v5274 = vmul.f32 %v4890, %v5146
        %v5275 = vmul.f32 %v4891, %v5147
        %v5276 = vmul.f32 %v4892, %v5148
        %v5277 = vmul.f32 %v4893, %v5149
        %v5278 = vmul.f32 %v4894, %v5150
        %v5279 = vmul.f32 %v4895, %v5151
        %v5280 = vmul.f32 %v4896, %v5152
        %v5281 = vmul.f32 %v4897, %v5153
        %v5282 = vmul.f32 %v4898, %v5154
        %v5283 = vmul.f32 %v4899, %v5155
        %v5284 = vmul.f32 %v4900, %v5156
        %v5285 = vmul.f32 %v4901, %v5157
        %v5286 = vmul.f32 %v4902, %v5158
        %v5287 = vmul.f32 %v4903, %v5159
        %v5288 = vmul.f32 %v4904, %v5160
        %v5289 = vmul.f32 %v4905, %v5161
        %v5290 = vmul.f32 %v4906, %v5162
        %v5291 = vmul.f32 %v4907, %v5163
        %v5292 = vmul.f32 %v4908, %v5164
        %v5293 = vmul.f32 %v4909, %v5165
        %v5294 = vmul.f32 %v4910, %v5166
        %v5295 = vmul.f32 %v4911, %v5167
        %v5296 = vmul.f32 %v4912, %v5168
        %v5297 = vmul.f32 %v4913, %v5169
        %v5298 = vmul.f32 %v4914, %v5170
        %v5299 = vmul.f32 %v4915, %v5171
        %v5300 = vmul.f32 %v4916, %v5172
        %v5301 = vmul.f32 %v4917, %v5173
        %v5302 = vmul.f32 %v4918, %v5174
        %v5303 = vmul.f32 %v4919, %v5175
        %v5304 = vmul.f32 %v4920, %v5176
        %v5305 = vmul.f32 %v4921, %v5177
        %v5306 = vmul.f32 %v4922, %v5178
        %v5307 = vmul.f32 %v4923, %v5179
        %v5308 = vmul.f32 %v4924, %v5180
        %v5309 = vmul.f32 %v4925, %v5181
        %v5310 = vmul.f32 %v4926, %v5182
        %v5311 = vmul.f32 %v4927, %v5183
        %v5312 = vmul.f32 %v4928, %v5184
        %v5313 = vmul.f32 %v4929, %v5185
        %v5314 = vmul.f32 %v4930, %v5186
        %v5315 = vmul.f32 %v4931, %v5187
        %v5316 = vmul.f32 %v4932, %v5188
        %v5317 = vmul.f32 %v4933, %v5189
        %v5318 = vmul.f32 %v4934, %v5190
        %v5319 = vmul.f32 %v4935, %v5191
        %v5320 = vmul.f32 %v4936, %v5192
        %v5321 = vmul.f32 %v4937, %v5193
        %v5322 = vmul.f32 %v4938, %v5194
        %v5323 = vmul.f32 %v4939, %v5195
        %v5324 = vmul.f32 %v4940, %v5196
        %v5325 = vmul.f32 %v4941, %v5197
        %v5326 = vmul.f32 %v4942, %v5198
        %v5327 = vmul.f32 %v4943, %v5199
        %v5328 = vmul.f32 %v4944, %v5200
        %v5329 = vmul.f32 %v4945, %v5201
        %v5330 = vmul.f32 %v4946, %v5202
        %v5331 = vmul.f32 %v4947, %v5203
        %v5332 = vmul.f32 %v4948, %v5204
        %v5333 = vmul.f32 %v4949, %v5205
        %v5334 = vmul.f32 %v4950, %v5206
        %v5335 = vmul.f32 %v4951, %v5207
        %v5336 = vmul.f32 %v4952, %v5208
        %v5337 = vmul.f32 %v4953, %v5209
        %v5338 = vmul.f32 %v4954, %v5210
        %v5339 = vmul.f32 %v4955, %v5211
        %v5340 = vmul.f32 %v4956, %v5212
        %v5341 = vmul.f32 %v4957, %v5213
        %v5342 = vmul.f32 %v4958, %v5214
        %v5343 = vmul.f32 %v4959, %v5215
        %v5344 = vmul.f32 %v4960, %v5216
        %v5345 = vmul.f32 %v4961, %v5217
        %v5346 = vmul.f32 %v4962, %v5218
        %v5347 = vmul.f32 %v4963, %v5219
        %v5348 = vmul.f32 %v4964, %v5220
        %v5349 = vmul.f32 %v4965, %v5221
        %v5350 = vmul.f32 %v4966, %v5222
        %v5351 = vmul.f32 %v4967, %v5223
        %v5352 = vmul.f32 %v4968, %v5224
        %v5353 = vmul.f32 %v4969, %v5225
        %v5354 = vmul.f32 %v4970, %v5226
        %v5355 = vmul.f32 %v4971, %v5227
        %v5356 = vmul.f32 %v4972, %v5228
        %v5357 = vmul.f32 %v4973, %v5229
        %v5358 = vmul.f32 %v4974, %v5230
        %v5359 = vmul.f32 %v4975, %v5231
        %v5360 = vmul.f32 %v4976, %v5232
        %v5361 = vmul.f32 %v4977, %v5233
        %v5362 = vmul.f32 %v4978, %v5234
        %v5363 = vmul.f32 %v4979, %v5235
        %v5364 = vmul.f32 %v4980, %v5236
        %v5365 = vmul.f32 %v4981, %v5237
        %v5366 = vmul.f32 %v4982, %v5238
        %v5367 = vmul.f32 %v4983, %v5239
        %v5368 = vmul.f32 %v4984, %v5240
        %v5369 = vmul.f32 %v4985, %v5241
        %v5370 = vmul.f32 %v4986, %v5242
        %v5371 = vmul.f32 %v4987, %v5243
        %v5372 = vmul.f32 %v4988, %v5244
        %v5373 = vmul.f32 %v4989, %v5245
        %v5374 = vmul.f32 %v4990, %v5246
        %v5375 = vmul.f32 %v4991, %v5247
        %v5376 = vld [vmem:[%s7] sm:$0x3]
        %v5377 = vpack.c.bf16 %v5250, %v5248
        %v5378 = vpack.c.bf16 %v5251, %v5249
        %v5379 = vpack.c.bf16 %v5254, %v5252
        %v5380 = vpack.c.bf16 %v5255, %v5253
        %v5381 = vpack.c.bf16 %v5258, %v5256
        %v5382 = vpack.c.bf16 %v5259, %v5257
        %v5383 = vpack.c.bf16 %v5262, %v5260
        %v5384 = vpack.c.bf16 %v5263, %v5261
        %v5385 = vpack.c.bf16 %v5266, %v5264
        %v5386 = vpack.c.bf16 %v5267, %v5265
        %v5387 = vpack.c.bf16 %v5270, %v5268
        %v5388 = vpack.c.bf16 %v5271, %v5269
        %v5389 = vpack.c.bf16 %v5274, %v5272
        %v5390 = vpack.c.bf16 %v5275, %v5273
        %v5391 = vpack.c.bf16 %v5278, %v5276
        %v5392 = vpack.c.bf16 %v5279, %v5277
        %v5393 = vpack.c.bf16 %v5282, %v5280
        %v5394 = vpack.c.bf16 %v5283, %v5281
        %v5395 = vpack.c.bf16 %v5286, %v5284
        %v5396 = vpack.c.bf16 %v5287, %v5285
        %v5397 = vpack.c.bf16 %v5290, %v5288
        %v5398 = vpack.c.bf16 %v5291, %v5289
        %v5399 = vpack.c.bf16 %v5294, %v5292
        %v5400 = vpack.c.bf16 %v5295, %v5293
        %v5401 = vpack.c.bf16 %v5298, %v5296
        %v5402 = vpack.c.bf16 %v5299, %v5297
        %v5403 = vpack.c.bf16 %v5302, %v5300
        %v5404 = vpack.c.bf16 %v5303, %v5301
        %v5405 = vpack.c.bf16 %v5306, %v5304
        %v5406 = vpack.c.bf16 %v5307, %v5305
        %v5407 = vpack.c.bf16 %v5310, %v5308
        %v5408 = vpack.c.bf16 %v5311, %v5309
        %v5409 = vpack.c.bf16 %v5314, %v5312
        %v5410 = vpack.c.bf16 %v5315, %v5313
        %v5411 = vpack.c.bf16 %v5318, %v5316
        %v5412 = vpack.c.bf16 %v5319, %v5317
        %v5413 = vpack.c.bf16 %v5322, %v5320
        %v5414 = vpack.c.bf16 %v5323, %v5321
        %v5415 = vpack.c.bf16 %v5326, %v5324
        %v5416 = vpack.c.bf16 %v5327, %v5325
        %v5417 = vpack.c.bf16 %v5330, %v5328
        %v5418 = vpack.c.bf16 %v5331, %v5329
        %v5419 = vpack.c.bf16 %v5334, %v5332
        %v5420 = vpack.c.bf16 %v5335, %v5333
        %v5421 = vpack.c.bf16 %v5338, %v5336
        %v5422 = vpack.c.bf16 %v5339, %v5337
        %v5423 = vpack.c.bf16 %v5342, %v5340
        %v5424 = vpack.c.bf16 %v5343, %v5341
        %v5425 = vpack.c.bf16 %v5346, %v5344
        %v5426 = vpack.c.bf16 %v5347, %v5345
        %v5427 = vpack.c.bf16 %v5350, %v5348
        %v5428 = vpack.c.bf16 %v5351, %v5349
        %v5429 = vpack.c.bf16 %v5354, %v5352
        %v5430 = vpack.c.bf16 %v5355, %v5353
        %v5431 = vpack.c.bf16 %v5358, %v5356
        %v5432 = vpack.c.bf16 %v5359, %v5357
        %v5433 = vpack.c.bf16 %v5362, %v5360
        %v5434 = vpack.c.bf16 %v5363, %v5361
        %v5435 = vpack.c.bf16 %v5366, %v5364
        %v5436 = vpack.c.bf16 %v5367, %v5365
        %v5437 = vpack.c.bf16 %v5370, %v5368
        %v5438 = vpack.c.bf16 %v5371, %v5369
        %v5439 = vpack.c.bf16 %v5374, %v5372
        %v5440 = vpack.c.bf16 %v5375, %v5373
        %v5441 = vld [vmem:[#allocation2] sm:$0x1]
        %5443 = vset.pattern.permute.xlu0 0
        %5444 = vperm.xlu0 %5443, %v5441
        %v5445 = vpop.permute.xlu0 %5444
        %v5447 = vlaneseq
        %v5448 = vshrl.u32 %v5447, 7
        %v5449 = vsub.s32 0, %v5448
        %v5450 = vrot.slane %v5445, %v5449
        %v5453 = vunpack.c.l.s4 1966171168
        %v5454 = vunpack.c.0.s8 %v5453
        %v5455 = vlaneseq
        %v5456 = vshrl.u32 %v5455, 7
        %v5457 = vsub.s32 %v5454, %v5456
        %v5458 = vrot.slane %v5376, %v5457
        %v5459 = vcombine.high %v5458, %v5458
        %v5461 = vunpack.c.l.s4 1966171168
        %v5462 = vunpack.c.0.s8 %v5461
        %v5463 = vlaneseq
        %v5464 = vshrl.u32 %v5463, 7
        %v5465 = vsub.s32 %v5462, %v5464
        %v5466 = vrot.slane %v5458, %v5465
        %v5468 = vunpack.c.l.s4 1966171168
        %v5469 = vunpack.c.0.s8 %v5468
        %v5470 = vlaneseq
        %v5471 = vshrl.u32 %v5470, 7
        %v5472 = vsub.s32 %v5469, %v5471
        %v5473 = vrot.slane %v5459, %v5472
        %5476 = vmatprep.subr.bf16.mxu0 %v5378
        %5477 = vmatpush1.bf16.xpose.msra.mxu0 %v5377
        %5478 = vmatprep.subr.bf16.mxu0 %v5380
        %5479 = vmatpush1.bf16.xpose.msra.mxu0 %v5379
        %5480 = vmatprep.subr.bf16.mxu0 %v5382
        %5481 = vmatpush1.bf16.xpose.msra.mxu0 %v5381
        %5482 = vmatprep.subr.bf16.mxu0 %v5384
        %5483 = vmatpush1.bf16.xpose.msra.mxu0 %v5383
        %5484 = vmatprep.subr.bf16.mxu0 %v5386
        %5485 = vmatpush1.bf16.xpose.msra.mxu0 %v5385
        %5486 = vmatprep.subr.bf16.mxu0 %v5388
        %5487 = vmatpush1.bf16.xpose.msra.mxu0 %v5387
        %5488 = vmatprep.subr.bf16.mxu0 %v5390
        %5489 = vmatpush1.bf16.xpose.msra.mxu0 %v5389
        %5490 = vmatprep.subr.bf16.mxu0 %v5392
        %5491 = vmatpush1.bf16.xpose.msra.mxu0 %v5391
        %5492 = vmatprep.subr.bf16.mxu0 %v5394
        %5493 = vmatpush1.bf16.xpose.msra.mxu0 %v5393
        %5494 = vmatprep.subr.bf16.mxu0 %v5396
        %5495 = vmatpush1.bf16.xpose.msra.mxu0 %v5395
        %5496 = vmatprep.subr.bf16.mxu0 %v5398
        %5497 = vmatpush1.bf16.xpose.msra.mxu0 %v5397
        %5498 = vmatprep.subr.bf16.mxu0 %v5400
        %5499 = vmatpush1.bf16.xpose.msra.mxu0 %v5399
        %5500 = vmatprep.subr.bf16.mxu0 %v5402
        %5501 = vmatpush1.bf16.xpose.msra.mxu0 %v5401
        %5502 = vmatprep.subr.bf16.mxu0 %v5404
        %5503 = vmatpush1.bf16.xpose.msra.mxu0 %v5403
        %5504 = vmatprep.subr.bf16.mxu0 %v5406
        %5505 = vmatpush1.bf16.xpose.msra.mxu0 %v5405
        %5506 = vmatprep.subr.bf16.mxu0 %v5408
        %5507 = vmatpush1.bf16.xpose.msra.mxu0 %v5407
        %5508 = vmatprep.mubr.bf16.mxu0 %v5473
        %5509 = vmatmul.mubr.bf16.gmra.mrb[0].mxu0 %v5466
        %v5510 = vpop.f32.mrb[0].mxu0
        %v5511 = vadd.f32 %v5450, %v5510
        %v5512 = vpop.f32.mrb[0].mxu0
        %v5513 = vadd.f32 %v5450, %v5512
        %v5514 = vpop.f32.mrb[0].mxu0
        %v5515 = vpop.f32.mrb[0].mxu0
        %5516 = vdwg.mxu0
        %5517 = vmatprep.subr.bf16.mxu0 %v5410
        %5518 = vmatpush1.bf16.xpose.msra.mxu0 %v5409
        %5519 = vmatprep.subr.bf16.mxu0 %v5412
        %5520 = vmatpush1.bf16.xpose.msra.mxu0 %v5411
        %5521 = vmatprep.subr.bf16.mxu0 %v5414
        %5522 = vmatpush1.bf16.xpose.msra.mxu0 %v5413
        %5523 = vmatprep.subr.bf16.mxu0 %v5416
        %5524 = vmatpush1.bf16.xpose.msra.mxu0 %v5415
        %5525 = vmatprep.subr.bf16.mxu0 %v5418
        %5526 = vmatpush1.bf16.xpose.msra.mxu0 %v5417
        %5527 = vmatprep.subr.bf16.mxu0 %v5420
        %5528 = vmatpush1.bf16.xpose.msra.mxu0 %v5419
        %5529 = vmatprep.subr.bf16.mxu0 %v5422
        %5530 = vmatpush1.bf16.xpose.msra.mxu0 %v5421
        %5531 = vmatprep.subr.bf16.mxu0 %v5424
        %5532 = vmatpush1.bf16.xpose.msra.mxu0 %v5423
        %5533 = vmatprep.subr.bf16.mxu0 %v5426
        %5534 = vmatpush1.bf16.xpose.msra.mxu0 %v5425
        %5535 = vmatprep.subr.bf16.mxu0 %v5428
        %5536 = vmatpush1.bf16.xpose.msra.mxu0 %v5427
        %5537 = vmatprep.subr.bf16.mxu0 %v5430
        %5538 = vmatpush1.bf16.xpose.msra.mxu0 %v5429
        %5539 = vmatprep.subr.bf16.mxu0 %v5432
        %5540 = vmatpush1.bf16.xpose.msra.mxu0 %v5431
        %5541 = vmatprep.subr.bf16.mxu0 %v5434
        %5542 = vmatpush1.bf16.xpose.msra.mxu0 %v5433
        %5543 = vmatprep.subr.bf16.mxu0 %v5436
        %5544 = vmatpush1.bf16.xpose.msra.mxu0 %v5435
        %5545 = vmatprep.subr.bf16.mxu0 %v5438
        %5546 = vmatpush1.bf16.xpose.msra.mxu0 %v5437
        %5547 = vmatprep.subr.bf16.mxu0 %v5440
        %5548 = vmatpush1.bf16.xpose.msra.mxu0 %v5439
        %5549 = vmatprep.mubr.bf16.mxu0 %v5473
        %5550 = vmatmul.mubr.bf16.gmra.mrb[0].mxu0 %v5466
        %v5551 = vpop.f32.mrb[0].mxu0
        %v5552 = vadd.f32 %v5450, %v5551
        %v5553 = vpop.f32.mrb[0].mxu0
        %v5554 = vadd.f32 %v5450, %v5553
        %v5555 = vpop.f32.mrb[0].mxu0
        %v5556 = vpop.f32.mrb[0].mxu0
        %5557 = vdwg.mxu0
        %v5562 = vcombine.low %v5511, %v5513
        %v5563 = vcombine.low %v5552, %v5554
        %v5565 = vunpack.c.l.s4 1966171168
        %v5566 = vunpack.c.0.s8 %v5565
        %v5567 = vlaneseq
        %v5568 = vshrl.u32 %v5567, 7
        %v5569 = vsub.s32 %v5566, %v5568
        %v5570 = vrot.slane %v5562, %v5569
        %v5572 = vunpack.c.l.s4 1966171168
        %v5573 = vunpack.c.0.s8 %v5572
        %v5574 = vlaneseq
        %v5575 = vshrl.u32 %v5574, 7
        %v5576 = vsub.s32 %v5573, %v5575
        %v5577 = vrot.slane %v5563, %v5576
        %v5578 = vcombine.low %v5570, %v5577
        %v5580 = vunpack.c.l.s4 1966171168
        %v5581 = vunpack.c.0.s8 %v5580
        %v5582 = vlaneseq
        %v5583 = vshrl.u32 %v5582, 7
        %v5584 = vsub.s32 %v5581, %v5583
        %v5585 = vrot.slane %v5578, %v5584
        %v5587 = vlaneseq
        %vm5588 = vcmp.ge.s32.totalorder %v5587, 0
        %vm5589 = vcmp.lt.s32.totalorder %v5587, 512
        %vm5590 = vmand %vm5588, %vm5589
        %5591 = vst.msk [vmem:[%s328] sm:$0xf] %vm5590, %v5585
        %s5592 = sand.u32 %s227, 1
        %s5593 = scalar_lea.sflag [#allocation4], %s5592
        %s5594 = sand.u32 %s227, 1
        %s5595 = smul.addr %s5594, 4
        %s5596 = scalar_lea.vmem [#allocation3], %s5595
        // Predicated region
        $region57: #{tpu_custom_call.1} parent=55 // pred_check
          %p5597 = pneg %p237
        $region58: #{tpu_custom_call.1} parent=55 // pred_check_branch
          %5599 = sbr.rel (%p5597) target = $region60
        $region59: #{tpu_custom_call.1} parent=55 // pred_region
          %s5600 = smul.u32 4, %s25
          %s5602 = ssub.s32 64, 64
          %5603 = vsyncadd %s5593, %s5602
          %s5604 = smul.addr %s5600, 16
          %s5605 = scalar_lea.hbm %s9, %s5604
          %s5607 = sshll.u32 %s5596, 4
          %s5608 = int_to_ptr.vmem [resolvable:$true] %s5607
          %5610 = dma.vmem_to_hbm [thread:$0]  %s5608, 64, %s5605, %s5593
        $region60: #{tpu_custom_call.1} parent=55 // pred_fallthru
          _
      $region56: #{tpu_custom_call.1} parent=5 // pred_fallthru
        _
      %p5611 = scmp.le.s32.totalorder 2, %s20
      // Predicated region
      $region61: #{tpu_custom_call.1} parent=5 // pred_check
        %p5612 = pneg %p5611
      $region62: #{tpu_custom_call.1} parent=5 // pred_check_branch
        %5614 = sbr.rel (%p5612) target = $region64
      $region63: #{tpu_custom_call.1} parent=5 // pred_region
        %s5615 = ssub.s32 %s20, 2
        // Predicated region
        $region65: #{tpu_custom_call.1} parent=63 // pred_check
          %p5616 = pneg %p243
        $region66: #{tpu_custom_call.1} parent=63 // pred_check_branch
          %5618 = sbr.rel (%p5616) target = $region68
        $region67: #{tpu_custom_call.1} parent=63 // pred_region
          %s5619 = sand.u32 %s228, 1
          %s5620 = scalar_lea.sflag [#allocation4], %s5619
          %s5621 = sand.u32 %s228, 1
          %s5622 = smul.addr %s5621, 4
          %s5623 = scalar_lea.vmem [#allocation3], %s5622
          %5624 = dma.done %s5620, 64
        $region68: #{tpu_custom_call.1} parent=63 // pred_fallthru
          _
      $region64: #{tpu_custom_call.1} parent=5 // pred_fallthru
        _
    $region6: #{tpu_custom_call.1} parent=1 // loop_footer
      %s24 = sadd.s32 1, %s20
    $region7: #{tpu_custom_call.1} parent=1 // loop_footer_branch
      %19 = sbr.rel target = $region3
    $region8: #{tpu_custom_call.1} parent=1 // loop_exit
      _
    %5625 = vsyncpa [#allocation4], 1
    %s5626 = scalar_lea.sflag [#allocation4], 1
    %5627 = vsyncpa %s5626, 1

</llo_original>
